<compile_context>
chip_gen: v7x
topology: tpu7x:2x2x1
jax: 0.10.0
libtpu: 0.0.40
codegen_flags: <defaults>
</compile_context>

<pallas_src>
import functools

import jax
import jax.numpy as jnp
from jax.experimental import pallas as pl
from jax.experimental.pallas import tpu as pltpu


# ----------------------------------------------------------------------------
# Kernel (one batch element per grid step)
# ----------------------------------------------------------------------------
def vin_kernel(x_ref, mr_ref, mq_ref, mv_ref, wfc_ref, sx_ref, sy_ref,
               logits_ref, probs_ref, *, num_vi, dom, n_q):
    """Refs:
      x_ref   : (D, C*D + 1)   channel-major input slab, last column == 1.0 (bias carrier)
      mr_ref  : (3, C*D + 1, D) banded matrices of the folded hidden+reward conv
      mq_ref  : (3, D, Q*D)     banded matrices of w_q (channel-major output lanes)
      mv_ref  : (3, D, Q*D)     banded matrices of w_v
      wfc_ref : (Q, 8)          fc weight (pre-transposed)
      sx_ref, sy_ref : (B,) int32 in SMEM
      logits_ref, probs_ref : (1, 8)
    """
    f32 = jnp.float32
    D = dom
    Q = n_q
    b = pl.program_id(0)

    # Constant row-shift matrices; their zero rows encode the vertical zero padding of
    # the 3x3 "same" convs.  Built once, hoisted above the VI loop.
    ri = jax.lax.broadcasted_iota(jnp.int32, (D, D), 0)
    ci = jax.lax.broadcasted_iota(jnp.int32, (D, D), 1)
    shift_dn = (ci == ri - 1).astype(f32)   # (shift_dn @ a)[i] = a[i-1], 0 at i == 0
    shift_up = (ci == ri + 1).astype(f32)   # (shift_up @ a)[i] = a[i+1], 0 at i == D-1

    def conv_rows(a, m_ref):
        # 3x3 "same" conv as sum_dy RowShift_dy @ a @ M_dy -- all MXU work.
        s0 = jnp.dot(shift_dn, a, preferred_element_type=f32)
        s2 = jnp.dot(shift_up, a, preferred_element_type=f32)
        return (jnp.dot(s0, m_ref[0], preferred_element_type=f32)
                + jnp.dot(a, m_ref[1], preferred_element_type=f32)
                + jnp.dot(s2, m_ref[2], preferred_element_type=f32))

    def group_max(q):
        # channel-major (D, Q*D) -> (D, D): max over the Q channel blocks.
        v = q[:, 0:D]
        for a in range(1, Q):
            v = jnp.maximum(v, q[:, a * D:(a + 1) * D])
        return v

    x_aug = x_ref[...]                               # (D, C*D + 1)

    # Folded hidden (3x3, +bias) and reward (1x1) convs -> reward, (D, D).
    reward = conv_rows(x_aug, mr_ref)

    # conv(reward, w_q) is constant across value-iteration steps -> hoisted.
    q_r = conv_rows(reward, mq_ref)                  # (D, Q*D)
    v = group_max(q_r)

    # Value iteration (Python-unrolled; num_vi is small and static).
    # TODO(synk): switch to lax.fori_loop with v in a VMEM scratch if num_vi >> 16.
    for _ in range(num_vi - 1):
        v = group_max(q_r + conv_rows(v, mv_ref))
    q = q_r + conv_rows(v, mv_ref)                   # final q_value, (D, Q*D)

    # ---- gather q[:, state_x, state_y] with SMEM scalars + exact one-hot matmuls ----
    sx = sx_ref[b]
    sy = sy_ref[b]
    row_sel = (jax.lax.broadcasted_iota(jnp.int32, (1, D), 1) == sx).astype(f32)  # (1, D)
    q_row = jnp.dot(row_sel, q, preferred_element_type=f32)                       # (1, Q*D)
    kk = jax.lax.broadcasted_iota(jnp.int32, (Q * D, Q), 0)
    aa = jax.lax.broadcasted_iota(jnp.int32, (Q * D, Q), 1)
    col_sel = (kk == aa * D + sy).astype(f32)                                     # (Q*D, Q)
    q_xy = jnp.dot(q_row, col_sel, preferred_element_type=f32)                    # (1, Q)

    # ---- fc (no bias) + softmax(dim=1) ----
    logits = jnp.dot(q_xy, wfc_ref[...], preferred_element_type=f32)              # (1, 8)
    m = jnp.max(logits, axis=1, keepdims=True)
    e = jnp.exp(logits - m)
    probs = e / jnp.sum(e, axis=1, keepdims=True)

    logits_ref[...] = logits
    probs_ref[...] = probs


# ----------------------------------------------------------------------------
# Wrapper-side weight preparation (plain XLA, outside the kernel)
# ----------------------------------------------------------------------------
def _banded_out(w_taps, D):
    """w_taps: (3, 3, n_out) -> (3, D, n_out*D) with M[dy, k, a*D + j] = w[dy, k-j+1, a]."""
    k = jnp.arange(D)[:, None]
    j = jnp.arange(D)[None, :]
    dx = k - j + 1
    valid = (dx >= 0) & (dx < 3)
    band = w_taps[:, jnp.clip(dx, 0, 2), :]                      # (3, D, D, n_out)
    band = jnp.where(valid[None, :, :, None], band, 0.0)
    return jnp.transpose(band, (0, 1, 3, 2)).reshape(3, D, -1)


def _banded_in(w_taps, D):
    """w_taps: (3, 3, C) -> (3, C*D, D) with M[dy, c*D + k, j] = w[dy, k-j+1, c]."""
    C = w_taps.shape[-1]
    k = jnp.arange(D)[:, None]
    j = jnp.arange(D)[None, :]
    dx = k - j + 1
    valid = (dx >= 0) & (dx < 3)
    band = w_taps[:, jnp.clip(dx, 0, 2), :]                      # (3, D, D, C)
    band = jnp.where(valid[None, :, :, None], band, 0.0)
    return jnp.transpose(band, (0, 3, 1, 2)).reshape(3, C * D, D)


def vin_forward(input_view_nchw, state_x, state_y, num_vi, params):
    """Pallas VIN forward. input_view_nchw: (B, C_in, D, D) float32."""
    B, C, D, _ = input_view_nchw.shape
    Q = params['w_q'].shape[0]
    hp = jax.lax.Precision.HIGHEST

    # --- algebraically fold hidden (3x3, bias) + reward (1x1) convs into one conv ---
    wr_vec = params['w_reward'].reshape(-1)                                         # (H,)
    w_fold = jnp.einsum('hcyx,h->yxc', params['w_hidden'], wr_vec, precision=hp)    # (3,3,C)
    b_fold = jnp.dot(params['b_hidden'], wr_vec, precision=hp)                      # scalar

    mr = _banded_in(w_fold, D)                                                      # (3, C*D, D)
    bias_rows = jnp.zeros((3, 1, D), jnp.float32).at[1, 0, :].set(b_fold)
    mr = jnp.concatenate([mr, bias_rows], axis=1)                                   # (3, C*D+1, D)

    mq = _banded_out(jnp.transpose(params['w_q'][:, 0], (1, 2, 0)), D)              # (3, D, Q*D)
    mv = _banded_out(jnp.transpose(params['w_v'][:, 0], (1, 2, 0)), D)              # (3, D, Q*D)
    wfc = params['w_fc'].T                                                          # (Q, 8)

    # channel-major input slab [b, i, c*D + j] plus a constant-ones bias column
    x_cm = jnp.transpose(input_view_nchw, (0, 2, 1, 3)).reshape(B, D, C * D)
    x_aug = jnp.concatenate([x_cm, jnp.ones((B, D, 1), x_cm.dtype)], axis=2)        # (B, D, C*D+1)

    sx = state_x.astype(jnp.int32)
    sy = state_y.astype(jnp.int32)

    kernel = functools.partial(vin_kernel, num_vi=int(num_vi), dom=D, n_q=Q)
    smem = pl.BlockSpec(memory_space=pltpu.MemorySpace.SMEM)

    out_shape = (jax.ShapeDtypeStruct((B, 1, 8), jnp.float32),
                 jax.ShapeDtypeStruct((B, 1, 8), jnp.float32))
    logits3, probs3 = pl.pallas_call(
        kernel,
        out_shape=out_shape,
        grid=(B,),
        in_specs=[
            pl.BlockSpec((None, D, C * D + 1), lambda b: (b, 0, 0)),   # per-batch input
            pl.BlockSpec((3, C * D + 1, D), lambda b: (0, 0, 0)),      # folded reward conv
            pl.BlockSpec((3, D, Q * D), lambda b: (0, 0, 0)),          # w_q banded
            pl.BlockSpec((3, D, Q * D), lambda b: (0, 0, 0)),          # w_v banded
            pl.BlockSpec((Q, 8), lambda b: (0, 0)),                    # fc weight
            smem,                                                      # state_x
            smem,                                                      # state_y
        ],
        out_specs=(pl.BlockSpec((None, 1, 8), lambda b: (b, 0, 0)),
                   pl.BlockSpec((None, 1, 8), lambda b: (b, 0, 0))),
        compiler_params=pltpu.CompilerParams(
            dimension_semantics=("parallel",)),    # megacore batch split on v7x
    )(x_aug, mr, mq, mv, wfc, sx, sy)
    return logits3.reshape(B, 8), probs3.reshape(B, 8)


# ----------------------------------------------------------------------------
# Pure-JAX NCHW reference (matches the PyTorch module exactly)
# ----------------------------------------------------------------------------
def vin_reference(x_nchw, state_x, state_y, num_vi, p):
    hp = jax.lax.Precision.HIGHEST

    def conv2d(x, w, pad):
        return jax.lax.conv_general_dilated(
            x, w, window_strides=(1, 1), padding=[(pad, pad), (pad, pad)],
            dimension_numbers=('NCHW', 'OIHW', 'NCHW'), precision=hp)

    hidden = conv2d(x_nchw, p['w_hidden'], 1) + p['b_hidden'].reshape(1, -1, 1, 1)
    reward = conv2d(hidden, p['w_reward'], 0)
    q = conv2d(reward, p['w_q'], 1)
    v = jnp.max(q, axis=1, keepdims=True)

    def eval_q(r, v):
        return conv2d(jnp.concatenate([r, v], axis=1),
                      jnp.concatenate([p['w_q'], p['w_v']], axis=1), 1)

    for _ in range(num_vi - 1):
        q = eval_q(reward, v)
        v = jnp.max(q, axis=1, keepdims=True)
    q = eval_q(reward, v)

    B = q.shape[0]
    q_xy = q[jnp.arange(B), :, state_x, state_y]                                   # (B, Q)
    logits = jnp.dot(q_xy, p['w_fc'].T, precision=hp)
    probs = jax.nn.softmax(logits, axis=1)
    return logits, probs


if __name__ == "__main__":
    B, C_IN, H_HID, Q, D = 2, 4, 32, 8, 16
    NUM_VI = 5

    key = jax.random.PRNGKey(0)
    ks = jax.random.split(key, 8)
    params = {
        'w_hidden': 0.1 * jax.random.normal(ks[0], (H_HID, C_IN, 3, 3), jnp.float32),
        'b_hidden': 0.1 * jax.random.normal(ks[1], (H_HID,), jnp.float32),
        'w_reward': 0.1 * jax.random.normal(ks[2], (1, H_HID, 1, 1), jnp.float32),
        'w_q':      0.1 * jax.random.normal(ks[3], (Q, 1, 3, 3), jnp.float32),
        # NOTE: PyTorch initializes weight_v_value to zeros; small random values are
        # used here so the value-iteration loop does nontrivial work.
        'w_v':      0.1 * jax.random.normal(ks[4], (Q, 1, 3, 3), jnp.float32),
        'w_fc':     0.1 * jax.random.normal(ks[5], (8, Q), jnp.float32),
    }
    x = jax.random.normal(ks[6], (B, C_IN, D, D), jnp.float32)
    sxy = jax.random.randint(ks[7], (2, B), 0, D, dtype=jnp.int32)
    state_x, state_y = sxy[0], sxy[1]

    logits, probs = vin_forward(x, state_x, state_y, NUM_VI, params)
    jax.block_until_ready((logits, probs))

    ref_logits, ref_probs = vin_reference(x, state_x, state_y, NUM_VI, params)
    assert jnp.allclose(logits, ref_logits, atol=1e-3, rtol=1e-3), (logits, ref_logits)
    assert jnp.allclose(probs, ref_probs, atol=5e-4, rtol=1e-3), (probs, ref_probs)

    # TODO(synk): the `visualize=True` branch (host-side numpy snapshots of reward /
    # v_value images) is stateful host I/O and is not implemented in-kernel.
    print("KERNEL_OK")
</pallas_src>

<mosaic_0001>
module attributes {stable_mosaic.version = 11 : i64} {
  func.func @vin_kernel(%arg0: i32, %arg1: memref<1x16x65xf32, #tpu.memory_space<vmem>>, %arg2: memref<3x65x16xf32, #tpu.memory_space<vmem>>, %arg3: memref<3x16x128xf32, #tpu.memory_space<vmem>>, %arg4: memref<3x16x128xf32, #tpu.memory_space<vmem>>, %arg5: memref<8x8xf32, #tpu.memory_space<vmem>>, %arg6: memref<2xi32, #tpu.memory_space<smem>>, %arg7: memref<2xi32, #tpu.memory_space<smem>>, %arg8: memref<1x1x8xf32, #tpu.memory_space<vmem>>, %arg9: memref<1x1x8xf32, #tpu.memory_space<vmem>>) attributes {dimension_semantics = [#tpu.dimension_semantics<parallel>], iteration_bounds = array<i64: 2>, scalar_prefetch = 0 : i64, scratch_operands = 0 : i64, tpu.core_type = #tpu.core_type<tc>, window_params = [{transform_indices = @transform_0, window_bounds = array<i64: 1, 16, 65>}, {pipeline_mode = #tpu.pipeline_mode<synchronous>, transform_indices = @transform_1, window_bounds = array<i64: 3, 65, 16>}, {pipeline_mode = #tpu.pipeline_mode<synchronous>, transform_indices = @transform_2, window_bounds = array<i64: 3, 16, 128>}, {pipeline_mode = #tpu.pipeline_mode<synchronous>, transform_indices = @transform_3, window_bounds = array<i64: 3, 16, 128>}, {pipeline_mode = #tpu.pipeline_mode<synchronous>, transform_indices = @transform_4, window_bounds = array<i64: 8, 8>}, {transform_indices = @transform_5, window_bounds = array<i64: 2>}, {transform_indices = @transform_6, window_bounds = array<i64: 2>}, {transform_indices = @transform_7, window_bounds = array<i64: 1, 1, 8>}, {transform_indices = @transform_8, window_bounds = array<i64: 1, 1, 8>}]} {
    %0 = tpu.iota {dimensions = array<i32: 0>} : vector<16x16xi32>
    %1 = tpu.iota {dimensions = array<i32: 1>} : vector<16x16xi32>
    %c1_i32 = arith.constant 1 : i32
    %2 = vector.broadcast %c1_i32 : i32 to vector<16x16xi32>
    %3 = arith.subi %0, %2 : vector<16x16xi32>
    %4 = arith.cmpi eq, %1, %3 : vector<16x16xi32>
    %5 = arith.extui %4 : vector<16x16xi1> to vector<16x16xi32>
    %6 = arith.sitofp %5 : vector<16x16xi32> to vector<16x16xf32>
    %c1_i32_0 = arith.constant 1 : i32
    %7 = vector.broadcast %c1_i32_0 : i32 to vector<16x16xi32>
    %8 = arith.addi %0, %7 : vector<16x16xi32>
    %9 = arith.cmpi eq, %1, %8 : vector<16x16xi32>
    %10 = arith.extui %9 : vector<16x16xi1> to vector<16x16xi32>
    %11 = arith.sitofp %10 : vector<16x16xi32> to vector<16x16xf32>
    %c0 = arith.constant 0 : index
    %c0_1 = arith.constant 0 : index
    %c0_2 = arith.constant 0 : index
    %12 = vector.load %arg1[%c0, %c0_1, %c0_2] : memref<1x16x65xf32, #tpu.memory_space<vmem>>, vector<1x16x65xf32>
    %13 = vector.shape_cast %12 : vector<1x16x65xf32> to vector<16x65xf32>
    %cst = arith.constant dense<0.000000e+00> : vector<16x65xf32>
    %14 = tpu.matmul %6, %13, %cst {dimension_numbers = #tpu.dot_dimension_numbers<[1], [0], [0], [1], [0, 0, 1, 1], [], []>} : vector<16x16xf32>, vector<16x65xf32>, vector<16x65xf32> -> vector<16x65xf32>
    %cst_3 = arith.constant dense<0.000000e+00> : vector<16x65xf32>
    %15 = tpu.matmul %11, %13, %cst_3 {dimension_numbers = #tpu.dot_dimension_numbers<[1], [0], [0], [1], [0, 0, 1, 1], [], []>} : vector<16x16xf32>, vector<16x65xf32>, vector<16x65xf32> -> vector<16x65xf32>
    %c0_4 = arith.constant 0 : index
    %c0_5 = arith.constant 0 : index
    %c0_6 = arith.constant 0 : index
    %16 = vector.load %arg2[%c0_4, %c0_5, %c0_6] : memref<3x65x16xf32, #tpu.memory_space<vmem>>, vector<1x65x16xf32>
    %17 = vector.shape_cast %16 : vector<1x65x16xf32> to vector<65x16xf32>
    %cst_7 = arith.constant dense<0.000000e+00> : vector<16x16xf32>
    %18 = tpu.matmul %14, %17, %cst_7 {dimension_numbers = #tpu.dot_dimension_numbers<[1], [0], [0], [1], [0, 0, 1, 1], [], []>} : vector<16x65xf32>, vector<65x16xf32>, vector<16x16xf32> -> vector<16x16xf32>
    %c1 = arith.constant 1 : index
    %c0_8 = arith.constant 0 : index
    %c0_9 = arith.constant 0 : index
    %19 = vector.load %arg2[%c1, %c0_8, %c0_9] : memref<3x65x16xf32, #tpu.memory_space<vmem>>, vector<1x65x16xf32>
    %20 = vector.shape_cast %19 : vector<1x65x16xf32> to vector<65x16xf32>
    %cst_10 = arith.constant dense<0.000000e+00> : vector<16x16xf32>
    %21 = tpu.matmul %13, %20, %cst_10 {dimension_numbers = #tpu.dot_dimension_numbers<[1], [0], [0], [1], [0, 0, 1, 1], [], []>} : vector<16x65xf32>, vector<65x16xf32>, vector<16x16xf32> -> vector<16x16xf32>
    %22 = arith.addf %18, %21 : vector<16x16xf32>
    %c2 = arith.constant 2 : index
    %c0_11 = arith.constant 0 : index
    %c0_12 = arith.constant 0 : index
    %23 = vector.load %arg2[%c2, %c0_11, %c0_12] : memref<3x65x16xf32, #tpu.memory_space<vmem>>, vector<1x65x16xf32>
    %24 = vector.shape_cast %23 : vector<1x65x16xf32> to vector<65x16xf32>
    %cst_13 = arith.constant dense<0.000000e+00> : vector<16x16xf32>
    %25 = tpu.matmul %15, %24, %cst_13 {dimension_numbers = #tpu.dot_dimension_numbers<[1], [0], [0], [1], [0, 0, 1, 1], [], []>} : vector<16x65xf32>, vector<65x16xf32>, vector<16x16xf32> -> vector<16x16xf32>
    %26 = arith.addf %22, %25 : vector<16x16xf32>
    %cst_14 = arith.constant dense<0.000000e+00> : vector<16x16xf32>
    %27 = tpu.matmul %6, %26, %cst_14 {dimension_numbers = #tpu.dot_dimension_numbers<[1], [0], [0], [1], [0, 0, 1, 1], [], []>} : vector<16x16xf32>, vector<16x16xf32>, vector<16x16xf32> -> vector<16x16xf32>
    %cst_15 = arith.constant dense<0.000000e+00> : vector<16x16xf32>
    %28 = tpu.matmul %11, %26, %cst_15 {dimension_numbers = #tpu.dot_dimension_numbers<[1], [0], [0], [1], [0, 0, 1, 1], [], []>} : vector<16x16xf32>, vector<16x16xf32>, vector<16x16xf32> -> vector<16x16xf32>
    %c0_16 = arith.constant 0 : index
    %c0_17 = arith.constant 0 : index
    %c0_18 = arith.constant 0 : index
    %29 = vector.load %arg3[%c0_16, %c0_17, %c0_18] : memref<3x16x128xf32, #tpu.memory_space<vmem>>, vector<1x16x128xf32>
    %30 = vector.shape_cast %29 : vector<1x16x128xf32> to vector<16x128xf32>
    %cst_19 = arith.constant dense<0.000000e+00> : vector<16x128xf32>
    %31 = tpu.matmul %27, %30, %cst_19 {dimension_numbers = #tpu.dot_dimension_numbers<[1], [0], [0], [1], [0, 0, 1, 1], [], []>} : vector<16x16xf32>, vector<16x128xf32>, vector<16x128xf32> -> vector<16x128xf32>
    %c1_20 = arith.constant 1 : index
    %c0_21 = arith.constant 0 : index
    %c0_22 = arith.constant 0 : index
    %32 = vector.load %arg3[%c1_20, %c0_21, %c0_22] : memref<3x16x128xf32, #tpu.memory_space<vmem>>, vector<1x16x128xf32>
    %33 = vector.shape_cast %32 : vector<1x16x128xf32> to vector<16x128xf32>
    %cst_23 = arith.constant dense<0.000000e+00> : vector<16x128xf32>
    %34 = tpu.matmul %26, %33, %cst_23 {dimension_numbers = #tpu.dot_dimension_numbers<[1], [0], [0], [1], [0, 0, 1, 1], [], []>} : vector<16x16xf32>, vector<16x128xf32>, vector<16x128xf32> -> vector<16x128xf32>
    %35 = arith.addf %31, %34 : vector<16x128xf32>
    %c2_24 = arith.constant 2 : index
    %c0_25 = arith.constant 0 : index
    %c0_26 = arith.constant 0 : index
    %36 = vector.load %arg3[%c2_24, %c0_25, %c0_26] : memref<3x16x128xf32, #tpu.memory_space<vmem>>, vector<1x16x128xf32>
    %37 = vector.shape_cast %36 : vector<1x16x128xf32> to vector<16x128xf32>
    %cst_27 = arith.constant dense<0.000000e+00> : vector<16x128xf32>
    %38 = tpu.matmul %28, %37, %cst_27 {dimension_numbers = #tpu.dot_dimension_numbers<[1], [0], [0], [1], [0, 0, 1, 1], [], []>} : vector<16x16xf32>, vector<16x128xf32>, vector<16x128xf32> -> vector<16x128xf32>
    %39 = arith.addf %35, %38 : vector<16x128xf32>
    %40 = vector.extract_strided_slice %39 {offsets = [0, 0], sizes = [16, 16], strides = [1, 1]} : vector<16x128xf32> to vector<16x16xf32>
    %41 = vector.extract_strided_slice %39 {offsets = [0, 16], sizes = [16, 16], strides = [1, 1]} : vector<16x128xf32> to vector<16x16xf32>
    %42 = arith.maximumf %40, %41 : vector<16x16xf32>
    %43 = vector.extract_strided_slice %39 {offsets = [0, 32], sizes = [16, 16], strides = [1, 1]} : vector<16x128xf32> to vector<16x16xf32>
    %44 = arith.maximumf %42, %43 : vector<16x16xf32>
    %45 = vector.extract_strided_slice %39 {offsets = [0, 48], sizes = [16, 16], strides = [1, 1]} : vector<16x128xf32> to vector<16x16xf32>
    %46 = arith.maximumf %44, %45 : vector<16x16xf32>
    %47 = vector.extract_strided_slice %39 {offsets = [0, 64], sizes = [16, 16], strides = [1, 1]} : vector<16x128xf32> to vector<16x16xf32>
    %48 = arith.maximumf %46, %47 : vector<16x16xf32>
    %49 = vector.extract_strided_slice %39 {offsets = [0, 80], sizes = [16, 16], strides = [1, 1]} : vector<16x128xf32> to vector<16x16xf32>
    %50 = arith.maximumf %48, %49 : vector<16x16xf32>
    %51 = vector.extract_strided_slice %39 {offsets = [0, 96], sizes = [16, 16], strides = [1, 1]} : vector<16x128xf32> to vector<16x16xf32>
    %52 = arith.maximumf %50, %51 : vector<16x16xf32>
    %53 = vector.extract_strided_slice %39 {offsets = [0, 112], sizes = [16, 16], strides = [1, 1]} : vector<16x128xf32> to vector<16x16xf32>
    %54 = arith.maximumf %52, %53 : vector<16x16xf32>
    %cst_28 = arith.constant dense<0.000000e+00> : vector<16x16xf32>
    %55 = tpu.matmul %6, %54, %cst_28 {dimension_numbers = #tpu.dot_dimension_numbers<[1], [0], [0], [1], [0, 0, 1, 1], [], []>} : vector<16x16xf32>, vector<16x16xf32>, vector<16x16xf32> -> vector<16x16xf32>
    %cst_29 = arith.constant dense<0.000000e+00> : vector<16x16xf32>
    %56 = tpu.matmul %11, %54, %cst_29 {dimension_numbers = #tpu.dot_dimension_numbers<[1], [0], [0], [1], [0, 0, 1, 1], [], []>} : vector<16x16xf32>, vector<16x16xf32>, vector<16x16xf32> -> vector<16x16xf32>
    %c0_30 = arith.constant 0 : index
    %c0_31 = arith.constant 0 : index
    %c0_32 = arith.constant 0 : index
    %57 = vector.load %arg4[%c0_30, %c0_31, %c0_32] : memref<3x16x128xf32, #tpu.memory_space<vmem>>, vector<1x16x128xf32>
    %58 = vector.shape_cast %57 : vector<1x16x128xf32> to vector<16x128xf32>
    %cst_33 = arith.constant dense<0.000000e+00> : vector<16x128xf32>
    %59 = tpu.matmul %55, %58, %cst_33 {dimension_numbers = #tpu.dot_dimension_numbers<[1], [0], [0], [1], [0, 0, 1, 1], [], []>} : vector<16x16xf32>, vector<16x128xf32>, vector<16x128xf32> -> vector<16x128xf32>
    %c1_34 = arith.constant 1 : index
    %c0_35 = arith.constant 0 : index
    %c0_36 = arith.constant 0 : index
    %60 = vector.load %arg4[%c1_34, %c0_35, %c0_36] : memref<3x16x128xf32, #tpu.memory_space<vmem>>, vector<1x16x128xf32>
    %61 = vector.shape_cast %60 : vector<1x16x128xf32> to vector<16x128xf32>
    %cst_37 = arith.constant dense<0.000000e+00> : vector<16x128xf32>
    %62 = tpu.matmul %54, %61, %cst_37 {dimension_numbers = #tpu.dot_dimension_numbers<[1], [0], [0], [1], [0, 0, 1, 1], [], []>} : vector<16x16xf32>, vector<16x128xf32>, vector<16x128xf32> -> vector<16x128xf32>
    %63 = arith.addf %59, %62 : vector<16x128xf32>
    %c2_38 = arith.constant 2 : index
    %c0_39 = arith.constant 0 : index
    %c0_40 = arith.constant 0 : index
    %64 = vector.load %arg4[%c2_38, %c0_39, %c0_40] : memref<3x16x128xf32, #tpu.memory_space<vmem>>, vector<1x16x128xf32>
    %65 = vector.shape_cast %64 : vector<1x16x128xf32> to vector<16x128xf32>
    %cst_41 = arith.constant dense<0.000000e+00> : vector<16x128xf32>
    %66 = tpu.matmul %56, %65, %cst_41 {dimension_numbers = #tpu.dot_dimension_numbers<[1], [0], [0], [1], [0, 0, 1, 1], [], []>} : vector<16x16xf32>, vector<16x128xf32>, vector<16x128xf32> -> vector<16x128xf32>
    %67 = arith.addf %63, %66 : vector<16x128xf32>
    %68 = arith.addf %39, %67 : vector<16x128xf32>
    %69 = vector.extract_strided_slice %68 {offsets = [0, 0], sizes = [16, 16], strides = [1, 1]} : vector<16x128xf32> to vector<16x16xf32>
    %70 = vector.extract_strided_slice %68 {offsets = [0, 16], sizes = [16, 16], strides = [1, 1]} : vector<16x128xf32> to vector<16x16xf32>
    %71 = arith.maximumf %69, %70 : vector<16x16xf32>
    %72 = vector.extract_strided_slice %68 {offsets = [0, 32], sizes = [16, 16], strides = [1, 1]} : vector<16x128xf32> to vector<16x16xf32>
    %73 = arith.maximumf %71, %72 : vector<16x16xf32>
    %74 = vector.extract_strided_slice %68 {offsets = [0, 48], sizes = [16, 16], strides = [1, 1]} : vector<16x128xf32> to vector<16x16xf32>
    %75 = arith.maximumf %73, %74 : vector<16x16xf32>
    %76 = vector.extract_strided_slice %68 {offsets = [0, 64], sizes = [16, 16], strides = [1, 1]} : vector<16x128xf32> to vector<16x16xf32>
    %77 = arith.maximumf %75, %76 : vector<16x16xf32>
    %78 = vector.extract_strided_slice %68 {offsets = [0, 80], sizes = [16, 16], strides = [1, 1]} : vector<16x128xf32> to vector<16x16xf32>
    %79 = arith.maximumf %77, %78 : vector<16x16xf32>
    %80 = vector.extract_strided_slice %68 {offsets = [0, 96], sizes = [16, 16], strides = [1, 1]} : vector<16x128xf32> to vector<16x16xf32>
    %81 = arith.maximumf %79, %80 : vector<16x16xf32>
    %82 = vector.extract_strided_slice %68 {offsets = [0, 112], sizes = [16, 16], strides = [1, 1]} : vector<16x128xf32> to vector<16x16xf32>
    %83 = arith.maximumf %81, %82 : vector<16x16xf32>
    %cst_42 = arith.constant dense<0.000000e+00> : vector<16x16xf32>
    %84 = tpu.matmul %6, %83, %cst_42 {dimension_numbers = #tpu.dot_dimension_numbers<[1], [0], [0], [1], [0, 0, 1, 1], [], []>} : vector<16x16xf32>, vector<16x16xf32>, vector<16x16xf32> -> vector<16x16xf32>
    %cst_43 = arith.constant dense<0.000000e+00> : vector<16x16xf32>
    %85 = tpu.matmul %11, %83, %cst_43 {dimension_numbers = #tpu.dot_dimension_numbers<[1], [0], [0], [1], [0, 0, 1, 1], [], []>} : vector<16x16xf32>, vector<16x16xf32>, vector<16x16xf32> -> vector<16x16xf32>
    %c0_44 = arith.constant 0 : index
    %c0_45 = arith.constant 0 : index
    %c0_46 = arith.constant 0 : index
    %86 = vector.load %arg4[%c0_44, %c0_45, %c0_46] : memref<3x16x128xf32, #tpu.memory_space<vmem>>, vector<1x16x128xf32>
    %87 = vector.shape_cast %86 : vector<1x16x128xf32> to vector<16x128xf32>
    %cst_47 = arith.constant dense<0.000000e+00> : vector<16x128xf32>
    %88 = tpu.matmul %84, %87, %cst_47 {dimension_numbers = #tpu.dot_dimension_numbers<[1], [0], [0], [1], [0, 0, 1, 1], [], []>} : vector<16x16xf32>, vector<16x128xf32>, vector<16x128xf32> -> vector<16x128xf32>
    %c1_48 = arith.constant 1 : index
    %c0_49 = arith.constant 0 : index
    %c0_50 = arith.constant 0 : index
    %89 = vector.load %arg4[%c1_48, %c0_49, %c0_50] : memref<3x16x128xf32, #tpu.memory_space<vmem>>, vector<1x16x128xf32>
    %90 = vector.shape_cast %89 : vector<1x16x128xf32> to vector<16x128xf32>
    %cst_51 = arith.constant dense<0.000000e+00> : vector<16x128xf32>
    %91 = tpu.matmul %83, %90, %cst_51 {dimension_numbers = #tpu.dot_dimension_numbers<[1], [0], [0], [1], [0, 0, 1, 1], [], []>} : vector<16x16xf32>, vector<16x128xf32>, vector<16x128xf32> -> vector<16x128xf32>
    %92 = arith.addf %88, %91 : vector<16x128xf32>
    %c2_52 = arith.constant 2 : index
    %c0_53 = arith.constant 0 : index
    %c0_54 = arith.constant 0 : index
    %93 = vector.load %arg4[%c2_52, %c0_53, %c0_54] : memref<3x16x128xf32, #tpu.memory_space<vmem>>, vector<1x16x128xf32>
    %94 = vector.shape_cast %93 : vector<1x16x128xf32> to vector<16x128xf32>
    %cst_55 = arith.constant dense<0.000000e+00> : vector<16x128xf32>
    %95 = tpu.matmul %85, %94, %cst_55 {dimension_numbers = #tpu.dot_dimension_numbers<[1], [0], [0], [1], [0, 0, 1, 1], [], []>} : vector<16x16xf32>, vector<16x128xf32>, vector<16x128xf32> -> vector<16x128xf32>
    %96 = arith.addf %92, %95 : vector<16x128xf32>
    %97 = arith.addf %39, %96 : vector<16x128xf32>
    %98 = vector.extract_strided_slice %97 {offsets = [0, 0], sizes = [16, 16], strides = [1, 1]} : vector<16x128xf32> to vector<16x16xf32>
    %99 = vector.extract_strided_slice %97 {offsets = [0, 16], sizes = [16, 16], strides = [1, 1]} : vector<16x128xf32> to vector<16x16xf32>
    %100 = arith.maximumf %98, %99 : vector<16x16xf32>
    %101 = vector.extract_strided_slice %97 {offsets = [0, 32], sizes = [16, 16], strides = [1, 1]} : vector<16x128xf32> to vector<16x16xf32>
    %102 = arith.maximumf %100, %101 : vector<16x16xf32>
    %103 = vector.extract_strided_slice %97 {offsets = [0, 48], sizes = [16, 16], strides = [1, 1]} : vector<16x128xf32> to vector<16x16xf32>
    %104 = arith.maximumf %102, %103 : vector<16x16xf32>
    %105 = vector.extract_strided_slice %97 {offsets = [0, 64], sizes = [16, 16], strides = [1, 1]} : vector<16x128xf32> to vector<16x16xf32>
    %106 = arith.maximumf %104, %105 : vector<16x16xf32>
    %107 = vector.extract_strided_slice %97 {offsets = [0, 80], sizes = [16, 16], strides = [1, 1]} : vector<16x128xf32> to vector<16x16xf32>
    %108 = arith.maximumf %106, %107 : vector<16x16xf32>
    %109 = vector.extract_strided_slice %97 {offsets = [0, 96], sizes = [16, 16], strides = [1, 1]} : vector<16x128xf32> to vector<16x16xf32>
    %110 = arith.maximumf %108, %109 : vector<16x16xf32>
    %111 = vector.extract_strided_slice %97 {offsets = [0, 112], sizes = [16, 16], strides = [1, 1]} : vector<16x128xf32> to vector<16x16xf32>
    %112 = arith.maximumf %110, %111 : vector<16x16xf32>
    %cst_56 = arith.constant dense<0.000000e+00> : vector<16x16xf32>
    %113 = tpu.matmul %6, %112, %cst_56 {dimension_numbers = #tpu.dot_dimension_numbers<[1], [0], [0], [1], [0, 0, 1, 1], [], []>} : vector<16x16xf32>, vector<16x16xf32>, vector<16x16xf32> -> vector<16x16xf32>
    %cst_57 = arith.constant dense<0.000000e+00> : vector<16x16xf32>
    %114 = tpu.matmul %11, %112, %cst_57 {dimension_numbers = #tpu.dot_dimension_numbers<[1], [0], [0], [1], [0, 0, 1, 1], [], []>} : vector<16x16xf32>, vector<16x16xf32>, vector<16x16xf32> -> vector<16x16xf32>
    %c0_58 = arith.constant 0 : index
    %c0_59 = arith.constant 0 : index
    %c0_60 = arith.constant 0 : index
    %115 = vector.load %arg4[%c0_58, %c0_59, %c0_60] : memref<3x16x128xf32, #tpu.memory_space<vmem>>, vector<1x16x128xf32>
    %116 = vector.shape_cast %115 : vector<1x16x128xf32> to vector<16x128xf32>
    %cst_61 = arith.constant dense<0.000000e+00> : vector<16x128xf32>
    %117 = tpu.matmul %113, %116, %cst_61 {dimension_numbers = #tpu.dot_dimension_numbers<[1], [0], [0], [1], [0, 0, 1, 1], [], []>} : vector<16x16xf32>, vector<16x128xf32>, vector<16x128xf32> -> vector<16x128xf32>
    %c1_62 = arith.constant 1 : index
    %c0_63 = arith.constant 0 : index
    %c0_64 = arith.constant 0 : index
    %118 = vector.load %arg4[%c1_62, %c0_63, %c0_64] : memref<3x16x128xf32, #tpu.memory_space<vmem>>, vector<1x16x128xf32>
    %119 = vector.shape_cast %118 : vector<1x16x128xf32> to vector<16x128xf32>
    %cst_65 = arith.constant dense<0.000000e+00> : vector<16x128xf32>
    %120 = tpu.matmul %112, %119, %cst_65 {dimension_numbers = #tpu.dot_dimension_numbers<[1], [0], [0], [1], [0, 0, 1, 1], [], []>} : vector<16x16xf32>, vector<16x128xf32>, vector<16x128xf32> -> vector<16x128xf32>
    %121 = arith.addf %117, %120 : vector<16x128xf32>
    %c2_66 = arith.constant 2 : index
    %c0_67 = arith.constant 0 : index
    %c0_68 = arith.constant 0 : index
    %122 = vector.load %arg4[%c2_66, %c0_67, %c0_68] : memref<3x16x128xf32, #tpu.memory_space<vmem>>, vector<1x16x128xf32>
    %123 = vector.shape_cast %122 : vector<1x16x128xf32> to vector<16x128xf32>
    %cst_69 = arith.constant dense<0.000000e+00> : vector<16x128xf32>
    %124 = tpu.matmul %114, %123, %cst_69 {dimension_numbers = #tpu.dot_dimension_numbers<[1], [0], [0], [1], [0, 0, 1, 1], [], []>} : vector<16x16xf32>, vector<16x128xf32>, vector<16x128xf32> -> vector<16x128xf32>
    %125 = arith.addf %121, %124 : vector<16x128xf32>
    %126 = arith.addf %39, %125 : vector<16x128xf32>
    %127 = vector.extract_strided_slice %126 {offsets = [0, 0], sizes = [16, 16], strides = [1, 1]} : vector<16x128xf32> to vector<16x16xf32>
    %128 = vector.extract_strided_slice %126 {offsets = [0, 16], sizes = [16, 16], strides = [1, 1]} : vector<16x128xf32> to vector<16x16xf32>
    %129 = arith.maximumf %127, %128 : vector<16x16xf32>
    %130 = vector.extract_strided_slice %126 {offsets = [0, 32], sizes = [16, 16], strides = [1, 1]} : vector<16x128xf32> to vector<16x16xf32>
    %131 = arith.maximumf %129, %130 : vector<16x16xf32>
    %132 = vector.extract_strided_slice %126 {offsets = [0, 48], sizes = [16, 16], strides = [1, 1]} : vector<16x128xf32> to vector<16x16xf32>
    %133 = arith.maximumf %131, %132 : vector<16x16xf32>
    %134 = vector.extract_strided_slice %126 {offsets = [0, 64], sizes = [16, 16], strides = [1, 1]} : vector<16x128xf32> to vector<16x16xf32>
    %135 = arith.maximumf %133, %134 : vector<16x16xf32>
    %136 = vector.extract_strided_slice %126 {offsets = [0, 80], sizes = [16, 16], strides = [1, 1]} : vector<16x128xf32> to vector<16x16xf32>
    %137 = arith.maximumf %135, %136 : vector<16x16xf32>
    %138 = vector.extract_strided_slice %126 {offsets = [0, 96], sizes = [16, 16], strides = [1, 1]} : vector<16x128xf32> to vector<16x16xf32>
    %139 = arith.maximumf %137, %138 : vector<16x16xf32>
    %140 = vector.extract_strided_slice %126 {offsets = [0, 112], sizes = [16, 16], strides = [1, 1]} : vector<16x128xf32> to vector<16x16xf32>
    %141 = arith.maximumf %139, %140 : vector<16x16xf32>
    %cst_70 = arith.constant dense<0.000000e+00> : vector<16x16xf32>
    %142 = tpu.matmul %6, %141, %cst_70 {dimension_numbers = #tpu.dot_dimension_numbers<[1], [0], [0], [1], [0, 0, 1, 1], [], []>} : vector<16x16xf32>, vector<16x16xf32>, vector<16x16xf32> -> vector<16x16xf32>
    %cst_71 = arith.constant dense<0.000000e+00> : vector<16x16xf32>
    %143 = tpu.matmul %11, %141, %cst_71 {dimension_numbers = #tpu.dot_dimension_numbers<[1], [0], [0], [1], [0, 0, 1, 1], [], []>} : vector<16x16xf32>, vector<16x16xf32>, vector<16x16xf32> -> vector<16x16xf32>
    %c0_72 = arith.constant 0 : index
    %c0_73 = arith.constant 0 : index
    %c0_74 = arith.constant 0 : index
    %144 = vector.load %arg4[%c0_72, %c0_73, %c0_74] : memref<3x16x128xf32, #tpu.memory_space<vmem>>, vector<1x16x128xf32>
    %145 = vector.shape_cast %144 : vector<1x16x128xf32> to vector<16x128xf32>
    %cst_75 = arith.constant dense<0.000000e+00> : vector<16x128xf32>
    %146 = tpu.matmul %142, %145, %cst_75 {dimension_numbers = #tpu.dot_dimension_numbers<[1], [0], [0], [1], [0, 0, 1, 1], [], []>} : vector<16x16xf32>, vector<16x128xf32>, vector<16x128xf32> -> vector<16x128xf32>
    %c1_76 = arith.constant 1 : index
    %c0_77 = arith.constant 0 : index
    %c0_78 = arith.constant 0 : index
    %147 = vector.load %arg4[%c1_76, %c0_77, %c0_78] : memref<3x16x128xf32, #tpu.memory_space<vmem>>, vector<1x16x128xf32>
    %148 = vector.shape_cast %147 : vector<1x16x128xf32> to vector<16x128xf32>
    %cst_79 = arith.constant dense<0.000000e+00> : vector<16x128xf32>
    %149 = tpu.matmul %141, %148, %cst_79 {dimension_numbers = #tpu.dot_dimension_numbers<[1], [0], [0], [1], [0, 0, 1, 1], [], []>} : vector<16x16xf32>, vector<16x128xf32>, vector<16x128xf32> -> vector<16x128xf32>
    %150 = arith.addf %146, %149 : vector<16x128xf32>
    %c2_80 = arith.constant 2 : index
    %c0_81 = arith.constant 0 : index
    %c0_82 = arith.constant 0 : index
    %151 = vector.load %arg4[%c2_80, %c0_81, %c0_82] : memref<3x16x128xf32, #tpu.memory_space<vmem>>, vector<1x16x128xf32>
    %152 = vector.shape_cast %151 : vector<1x16x128xf32> to vector<16x128xf32>
    %cst_83 = arith.constant dense<0.000000e+00> : vector<16x128xf32>
    %153 = tpu.matmul %143, %152, %cst_83 {dimension_numbers = #tpu.dot_dimension_numbers<[1], [0], [0], [1], [0, 0, 1, 1], [], []>} : vector<16x16xf32>, vector<16x128xf32>, vector<16x128xf32> -> vector<16x128xf32>
    %154 = arith.addf %150, %153 : vector<16x128xf32>
    %155 = arith.addf %39, %154 : vector<16x128xf32>
    %156 = vector.extract_strided_slice %155 {offsets = [0, 0], sizes = [16, 16], strides = [1, 1]} : vector<16x128xf32> to vector<16x16xf32>
    %157 = vector.extract_strided_slice %155 {offsets = [0, 16], sizes = [16, 16], strides = [1, 1]} : vector<16x128xf32> to vector<16x16xf32>
    %158 = arith.maximumf %156, %157 : vector<16x16xf32>
    %159 = vector.extract_strided_slice %155 {offsets = [0, 32], sizes = [16, 16], strides = [1, 1]} : vector<16x128xf32> to vector<16x16xf32>
    %160 = arith.maximumf %158, %159 : vector<16x16xf32>
    %161 = vector.extract_strided_slice %155 {offsets = [0, 48], sizes = [16, 16], strides = [1, 1]} : vector<16x128xf32> to vector<16x16xf32>
    %162 = arith.maximumf %160, %161 : vector<16x16xf32>
    %163 = vector.extract_strided_slice %155 {offsets = [0, 64], sizes = [16, 16], strides = [1, 1]} : vector<16x128xf32> to vector<16x16xf32>
    %164 = arith.maximumf %162, %163 : vector<16x16xf32>
    %165 = vector.extract_strided_slice %155 {offsets = [0, 80], sizes = [16, 16], strides = [1, 1]} : vector<16x128xf32> to vector<16x16xf32>
    %166 = arith.maximumf %164, %165 : vector<16x16xf32>
    %167 = vector.extract_strided_slice %155 {offsets = [0, 96], sizes = [16, 16], strides = [1, 1]} : vector<16x128xf32> to vector<16x16xf32>
    %168 = arith.maximumf %166, %167 : vector<16x16xf32>
    %169 = vector.extract_strided_slice %155 {offsets = [0, 112], sizes = [16, 16], strides = [1, 1]} : vector<16x128xf32> to vector<16x16xf32>
    %170 = arith.maximumf %168, %169 : vector<16x16xf32>
    %cst_84 = arith.constant dense<0.000000e+00> : vector<16x16xf32>
    %171 = tpu.matmul %6, %170, %cst_84 {dimension_numbers = #tpu.dot_dimension_numbers<[1], [0], [0], [1], [0, 0, 1, 1], [], []>} : vector<16x16xf32>, vector<16x16xf32>, vector<16x16xf32> -> vector<16x16xf32>
    %cst_85 = arith.constant dense<0.000000e+00> : vector<16x16xf32>
    %172 = tpu.matmul %11, %170, %cst_85 {dimension_numbers = #tpu.dot_dimension_numbers<[1], [0], [0], [1], [0, 0, 1, 1], [], []>} : vector<16x16xf32>, vector<16x16xf32>, vector<16x16xf32> -> vector<16x16xf32>
    %c0_86 = arith.constant 0 : index
    %c0_87 = arith.constant 0 : index
    %c0_88 = arith.constant 0 : index
    %173 = vector.load %arg4[%c0_86, %c0_87, %c0_88] : memref<3x16x128xf32, #tpu.memory_space<vmem>>, vector<1x16x128xf32>
    %174 = vector.shape_cast %173 : vector<1x16x128xf32> to vector<16x128xf32>
    %cst_89 = arith.constant dense<0.000000e+00> : vector<16x128xf32>
    %175 = tpu.matmul %171, %174, %cst_89 {dimension_numbers = #tpu.dot_dimension_numbers<[1], [0], [0], [1], [0, 0, 1, 1], [], []>} : vector<16x16xf32>, vector<16x128xf32>, vector<16x128xf32> -> vector<16x128xf32>
    %c1_90 = arith.constant 1 : index
    %c0_91 = arith.constant 0 : index
    %c0_92 = arith.constant 0 : index
    %176 = vector.load %arg4[%c1_90, %c0_91, %c0_92] : memref<3x16x128xf32, #tpu.memory_space<vmem>>, vector<1x16x128xf32>
    %177 = vector.shape_cast %176 : vector<1x16x128xf32> to vector<16x128xf32>
    %cst_93 = arith.constant dense<0.000000e+00> : vector<16x128xf32>
    %178 = tpu.matmul %170, %177, %cst_93 {dimension_numbers = #tpu.dot_dimension_numbers<[1], [0], [0], [1], [0, 0, 1, 1], [], []>} : vector<16x16xf32>, vector<16x128xf32>, vector<16x128xf32> -> vector<16x128xf32>
    %179 = arith.addf %175, %178 : vector<16x128xf32>
    %c2_94 = arith.constant 2 : index
    %c0_95 = arith.constant 0 : index
    %c0_96 = arith.constant 0 : index
    %180 = vector.load %arg4[%c2_94, %c0_95, %c0_96] : memref<3x16x128xf32, #tpu.memory_space<vmem>>, vector<1x16x128xf32>
    %181 = vector.shape_cast %180 : vector<1x16x128xf32> to vector<16x128xf32>
    %cst_97 = arith.constant dense<0.000000e+00> : vector<16x128xf32>
    %182 = tpu.matmul %172, %181, %cst_97 {dimension_numbers = #tpu.dot_dimension_numbers<[1], [0], [0], [1], [0, 0, 1, 1], [], []>} : vector<16x16xf32>, vector<16x128xf32>, vector<16x128xf32> -> vector<16x128xf32>
    %183 = arith.addf %179, %182 : vector<16x128xf32>
    %184 = arith.addf %39, %183 : vector<16x128xf32>
    %185 = arith.index_cast %arg0 : i32 to index
    %186 = memref.load %arg6[%185] : memref<2xi32, #tpu.memory_space<smem>>
    %187 = arith.index_cast %arg0 : i32 to index
    %188 = memref.load %arg7[%187] : memref<2xi32, #tpu.memory_space<smem>>
    %189 = tpu.iota {dimensions = array<i32: 1>} : vector<1x16xi32>
    %190 = vector.broadcast %186 : i32 to vector<1x16xi32>
    %191 = arith.cmpi eq, %189, %190 : vector<1x16xi32>
    %192 = arith.extui %191 : vector<1x16xi1> to vector<1x16xi32>
    %193 = arith.sitofp %192 : vector<1x16xi32> to vector<1x16xf32>
    %cst_98 = arith.constant dense<0.000000e+00> : vector<1x128xf32>
    %194 = tpu.matmul %193, %184, %cst_98 {dimension_numbers = #tpu.dot_dimension_numbers<[1], [0], [0], [1], [0, 0, 1, 1], [], []>} : vector<1x16xf32>, vector<16x128xf32>, vector<1x128xf32> -> vector<1x128xf32>
    %195 = tpu.iota {dimensions = array<i32: 0>} : vector<128x8xi32>
    %196 = tpu.iota {dimensions = array<i32: 1>} : vector<128x8xi32>
    %c16_i32 = arith.constant 16 : i32
    %197 = vector.broadcast %c16_i32 : i32 to vector<128x8xi32>
    %198 = arith.muli %196, %197 : vector<128x8xi32>
    %199 = vector.broadcast %188 : i32 to vector<128x8xi32>
    %200 = arith.addi %198, %199 : vector<128x8xi32>
    %201 = arith.cmpi eq, %195, %200 : vector<128x8xi32>
    %202 = arith.extui %201 : vector<128x8xi1> to vector<128x8xi32>
    %203 = arith.sitofp %202 : vector<128x8xi32> to vector<128x8xf32>
    %cst_99 = arith.constant dense<0.000000e+00> : vector<1x8xf32>
    %204 = tpu.matmul %194, %203, %cst_99 {dimension_numbers = #tpu.dot_dimension_numbers<[1], [0], [0], [1], [0, 0, 1, 1], [], []>} : vector<1x128xf32>, vector<128x8xf32>, vector<1x8xf32> -> vector<1x8xf32>
    %c0_100 = arith.constant 0 : index
    %c0_101 = arith.constant 0 : index
    %205 = vector.load %arg5[%c0_100, %c0_101] : memref<8x8xf32, #tpu.memory_space<vmem>>, vector<8x8xf32>
    %cst_102 = arith.constant dense<0.000000e+00> : vector<1x8xf32>
    %206 = tpu.matmul %204, %205, %cst_102 {dimension_numbers = #tpu.dot_dimension_numbers<[1], [0], [0], [1], [0, 0, 1, 1], [], []>} : vector<1x8xf32>, vector<8x8xf32>, vector<1x8xf32> -> vector<1x8xf32>
    %cst_103 = arith.constant dense<0xFF800000> : vector<1xf32>
    %207 = vector.multi_reduction <maximumf>, %206, %cst_103 [1] : vector<1x8xf32> to vector<1xf32>
    %208 = vector.shape_cast %207 : vector<1xf32> to vector<1x1xf32>
    %209 = vector.broadcast %208 : vector<1x1xf32> to vector<1x8xf32>
    %210 = arith.subf %206, %209 : vector<1x8xf32>
    %211 = math.exp %210 : vector<1x8xf32>
    %cst_104 = arith.constant dense<0.000000e+00> : vector<1xf32>
    %212 = vector.multi_reduction <add>, %211, %cst_104 [1] : vector<1x8xf32> to vector<1xf32>
    %213 = vector.shape_cast %212 : vector<1xf32> to vector<1x1xf32>
    %214 = vector.broadcast %213 : vector<1x1xf32> to vector<1x8xf32>
    %215 = arith.divf %211, %214 : vector<1x8xf32>
    %c0_105 = arith.constant 0 : index
    %c0_106 = arith.constant 0 : index
    %c0_107 = arith.constant 0 : index
    %216 = vector.load %arg8[%c0_105, %c0_106, %c0_107] : memref<1x1x8xf32, #tpu.memory_space<vmem>>, vector<1x1x8xf32>
    %217 = vector.shape_cast %216 : vector<1x1x8xf32> to vector<1x8xf32>
    %218 = vector.shape_cast %206 : vector<1x8xf32> to vector<1x1x8xf32>
    tpu.vector_store %arg8[%c0_105, %c0_106, %c0_107], %218 {strides = array<i32>} : memref<1x1x8xf32, #tpu.memory_space<vmem>>, vector<1x1x8xf32>,
    %c0_108 = arith.constant 0 : index
    %c0_109 = arith.constant 0 : index
    %c0_110 = arith.constant 0 : index
    %219 = vector.load %arg9[%c0_108, %c0_109, %c0_110] : memref<1x1x8xf32, #tpu.memory_space<vmem>>, vector<1x1x8xf32>
    %220 = vector.shape_cast %219 : vector<1x1x8xf32> to vector<1x8xf32>
    %221 = vector.shape_cast %215 : vector<1x8xf32> to vector<1x1x8xf32>
    tpu.vector_store %arg9[%c0_108, %c0_109, %c0_110], %221 {strides = array<i32>} : memref<1x1x8xf32, #tpu.memory_space<vmem>>, vector<1x1x8xf32>,
    return
  }
  func.func @transform_0(%arg0: i32) -> (i32, i32, i32) {
    %c0_i32 = arith.constant 0 : i32
    %c0_i32_0 = arith.constant 0 : i32
    %c0_i32_1 = arith.constant 0 : i32
    return %arg0, %c0_i32, %c0_i32_0 : i32, i32, i32
  }
  func.func @transform_1(%arg0: i32) -> (i32, i32, i32) {
    %c0_i32 = arith.constant 0 : i32
    %c0_i32_0 = arith.constant 0 : i32
    %c0_i32_1 = arith.constant 0 : i32
    %c0_i32_2 = arith.constant 0 : i32
    return %c0_i32, %c0_i32_0, %c0_i32_1 : i32, i32, i32
  }
  func.func @transform_2(%arg0: i32) -> (i32, i32, i32) {
    %c0_i32 = arith.constant 0 : i32
    %c0_i32_0 = arith.constant 0 : i32
    %c0_i32_1 = arith.constant 0 : i32
    %c0_i32_2 = arith.constant 0 : i32
    return %c0_i32, %c0_i32_0, %c0_i32_1 : i32, i32, i32
  }
  func.func @transform_3(%arg0: i32) -> (i32, i32, i32) {
    %c0_i32 = arith.constant 0 : i32
    %c0_i32_0 = arith.constant 0 : i32
    %c0_i32_1 = arith.constant 0 : i32
    %c0_i32_2 = arith.constant 0 : i32
    return %c0_i32, %c0_i32_0, %c0_i32_1 : i32, i32, i32
  }
  func.func @transform_4(%arg0: i32) -> (i32, i32) {
    %c0_i32 = arith.constant 0 : i32
    %c0_i32_0 = arith.constant 0 : i32
    %c0_i32_1 = arith.constant 0 : i32
    return %c0_i32, %c0_i32_0 : i32, i32
  }
  func.func @transform_5(%arg0: i32) -> i32 {
    %c0_i32 = arith.constant 0 : i32
    %c0_i32_0 = arith.constant 0 : i32
    return %c0_i32 : i32
  }
  func.func @transform_6(%arg0: i32) -> i32 {
    %c0_i32 = arith.constant 0 : i32
    %c0_i32_0 = arith.constant 0 : i32
    return %c0_i32 : i32
  }
  func.func @transform_7(%arg0: i32) -> (i32, i32, i32) {
    %c0_i32 = arith.constant 0 : i32
    %c0_i32_0 = arith.constant 0 : i32
    %c0_i32_1 = arith.constant 0 : i32
    return %arg0, %c0_i32, %c0_i32_0 : i32, i32, i32
  }
  func.func @transform_8(%arg0: i32) -> (i32, i32, i32) {
    %c0_i32 = arith.constant 0 : i32
    %c0_i32_0 = arith.constant 0 : i32
    %c0_i32_1 = arith.constant 0 : i32
    return %arg0, %c0_i32, %c0_i32_0 : i32, i32, i32
  }
}

</mosaic_0001>

<llo_original>
// kernel: tpu_custom_call.1
$region0: #{tpu_custom_call.1}
  #allocation0 [shape = 'u32[]', space=smem, size = 0x4, offset = 0x4, fixed_abs, tag = 'smem constant byte address 0x4 - core index']
  #allocation1 [shape = 'u32[144,128]{1,0:T(1,128)}', space=vmem, size = 0x12000, scoped, tag = 'internal scratch']
  %s0 = inlined_call_operand.vmem [shape: f32[2,16,65], index: 0, kind: input, shape index: {}]
  %s1 = inlined_call_operand.vmem [shape: f32[3,65,16], index: 1, kind: input, shape index: {}]
  %s2 = inlined_call_operand.vmem [shape: f32[3,16,128], index: 2, kind: input, shape index: {}]
  %s3 = inlined_call_operand.vmem [shape: f32[3,16,128], index: 3, kind: input, shape index: {}]
  %s4 = inlined_call_operand.vmem [shape: f32[8,8], index: 4, kind: input, shape index: {}]
  %s5 = inlined_call_operand.vmem [shape: s32[2], index: 5, kind: input, shape index: {}]
  %s6 = inlined_call_operand.vmem [shape: s32[2], index: 6, kind: input, shape index: {}]
  %s7 = inlined_call_operand.hbm [shape: f32[2,1,8], index: 7, kind: output, shape index: {0}]
  %s8 = inlined_call_operand.hbm [shape: f32[2,1,8], index: 8, kind: output, shape index: {1}]
  %9 = xla_tuple %s7, %s8
  %s10 = sld [smem:[#allocation0]]
  $region77: #{tpu_custom_call.1} parent=0
    _
  %s12 = ssub.s32 1, %s10
  %s13 = scalar_select 0, %s12, %s10
  $region1: #{tpu_custom_call.1} parent=0
    #allocation2 [shape = 'u8[512]{0}', space=smem, size = 0x200, scoped, tag = 'input window, operand 5, single buffered']
    #allocation3 [shape = 's32[2]{0}', space=sflag, size = 0x8, scoped, tag = 'scoped memory for tpu_custom_call.1']
    #allocation4 [shape = 's32[2]{0}', space=sflag, size = 0x8, scoped, tag = 'scoped memory for tpu_custom_call.1']
    #allocation5 [shape = 'u8[512]{0}', space=smem, size = 0x200, scoped, tag = 'input window, operand 6, single buffered']
    #allocation6 [shape = 's32[1]{0}', space=sflag, size = 0x4, scoped, tag = 'scoped memory for tpu_custom_call.1']
    #allocation7 [shape = 'u8[1024]{0}', space=vmem, size = 0x400, scoped, tag = 'output window, operand 0']
    #allocation8 [shape = 'u8[1024]{0}', space=vmem, size = 0x400, scoped, tag = 'output window, operand 1']
    #allocation9 [shape = 's32[2]{0}', space=sflag, size = 0x8, scoped, tag = 'scoped memory for tpu_custom_call.1']
    %14 = vsyncpa [#allocation4], 0
    %15 = vsyncpa [#allocation6], 0
    %16 = vsyncpa [#allocation3], 0
    %s17 = scalar_lea.sflag [#allocation3], 1
    %18 = vsyncpa %s17, 0
    %19 = vsyncpa [#allocation9], 0
    %s20 = scalar_lea.sflag [#allocation9], 1
    %21 = vsyncpa %s20, 0
    loop: start=0, step=1, limit=4
    $region2: #{tpu_custom_call.1} parent=1 // loop_pre_header
      _
    $region3: #{tpu_custom_call.1} parent=1 // loop_header
      %s23 = sphi 0, %s27
      %p24 = scmp.ge.s32.totalorder %s23, 4
      %s33 = sphi 0, %s35
      %s36 = sphi 0, %s33
      %s37 = sphi 0, %s36
      %s53 = sphi 0, %s37
      %s57 = sphi 0, %s57
      %s59 = sphi 0, %s57
      %s60 = sphi 0, %s59
      %s74 = sphi 0, %s60
      %s78 = sphi 0, %s78
      %s80 = sphi 0, %s78
      %s81 = sphi 0, %s80
      %s95 = sphi 0, %s81
      %s99 = sphi 0, %s99
      %s101 = sphi 0, %s99
      %s102 = sphi 0, %s101
      %s116 = sphi 0, %s102
      %s120 = sphi 0, %s120
      %s122 = sphi 0, %s120
      %s123 = sphi 0, %s122
      %s137 = sphi 0, %s123
      %s141 = sphi 0, %s141
      %s143 = sphi 0, %s141
      %s144 = sphi 0, %s143
      %s158 = sphi 0, %s144
      %s162 = sphi 0, %s162
      %s164 = sphi 0, %s162
      %s165 = sphi 0, %s164
      %s179 = sphi 0, %s165
      %s185 = sphi 0, %s187
      %s188 = sphi 0, %s185
      %s189 = sphi 0, %s188
      %s205 = sphi 0, %s189
      %s211 = sphi 0, %s213
      %s214 = sphi 0, %s211
      %s215 = sphi 0, %s214
      %s231 = sphi 0, %s215
    $region4: #{tpu_custom_call.1} parent=1 // loop_header_branch
      %26 = sbr.rel (%p24) target = $region8
    $region5: #{tpu_custom_call.1} parent=1 // loop_body
      %s28 = ssub.s32 %s23, 1
      %s29 = ssub.s32 %s23, 2
      %s30 = sadd.s32 %s23, 1
      %s31 = ssub.s32 %s23, %s30
      %p32 = scmp.eq.s32.totalorder %s31, 0
      %s34 = sadd.s32 %s33, 1
      %s35 = scalar_select %p32, %s33, %s34
      %p38 = pneg %p32
      %p39 = scmp.eq.s32.totalorder %s23, 1
      %p40 = por %p38, %p39
      %p41 = scmp.ne.s32.totalorder %s33, %s36
      %p42 = scmp.eq.s32.totalorder %s23, 0
      %p43 = por %p41, %p42
      %p44 = scmp.ne.s32.totalorder %s33, %s36
      %p45 = scmp.eq.s32.totalorder %s28, 1
      %p46 = por %p44, %p45
      %p47 = scmp.ne.s32.totalorder %s36, %s37
      %p48 = scmp.eq.s32.totalorder %s28, 0
      %p49 = por %p47, %p48
      %p50 = scmp.ne.s32.totalorder %s36, %s37
      %p51 = scmp.eq.s32.totalorder %s29, 1
      %p52 = por %p50, %p51
      %p54 = scmp.ne.s32.totalorder %s37, %s53
      %p55 = scmp.eq.s32.totalorder %s29, 0
      %p56 = por %p54, %p55
      %s58 = sadd.s32 %s57, 1
      %p61 = scmp.eq.s32.totalorder %s23, 1
      %p62 = scmp.ne.s32.totalorder %s57, %s59
      %p63 = scmp.eq.s32.totalorder %s23, 0
      %p64 = por %p62, %p63
      %p65 = scmp.ne.s32.totalorder %s57, %s59
      %p66 = scmp.eq.s32.totalorder %s28, 1
      %p67 = por %p65, %p66
      %p68 = scmp.ne.s32.totalorder %s59, %s60
      %p69 = scmp.eq.s32.totalorder %s28, 0
      %p70 = por %p68, %p69
      %p71 = scmp.ne.s32.totalorder %s59, %s60
      %p72 = scmp.eq.s32.totalorder %s29, 1
      %p73 = por %p71, %p72
      %p75 = scmp.ne.s32.totalorder %s60, %s74
      %p76 = scmp.eq.s32.totalorder %s29, 0
      %p77 = por %p75, %p76
      %s79 = sadd.s32 %s78, 1
      %p82 = scmp.eq.s32.totalorder %s23, 1
      %p83 = scmp.ne.s32.totalorder %s78, %s80
      %p84 = scmp.eq.s32.totalorder %s23, 0
      %p85 = por %p83, %p84
      %p86 = scmp.ne.s32.totalorder %s78, %s80
      %p87 = scmp.eq.s32.totalorder %s28, 1
      %p88 = por %p86, %p87
      %p89 = scmp.ne.s32.totalorder %s80, %s81
      %p90 = scmp.eq.s32.totalorder %s28, 0
      %p91 = por %p89, %p90
      %p92 = scmp.ne.s32.totalorder %s80, %s81
      %p93 = scmp.eq.s32.totalorder %s29, 1
      %p94 = por %p92, %p93
      %p96 = scmp.ne.s32.totalorder %s81, %s95
      %p97 = scmp.eq.s32.totalorder %s29, 0
      %p98 = por %p96, %p97
      %s100 = sadd.s32 %s99, 1
      %p103 = scmp.eq.s32.totalorder %s23, 1
      %p104 = scmp.ne.s32.totalorder %s99, %s101
      %p105 = scmp.eq.s32.totalorder %s23, 0
      %p106 = por %p104, %p105
      %p107 = scmp.ne.s32.totalorder %s99, %s101
      %p108 = scmp.eq.s32.totalorder %s28, 1
      %p109 = por %p107, %p108
      %p110 = scmp.ne.s32.totalorder %s101, %s102
      %p111 = scmp.eq.s32.totalorder %s28, 0
      %p112 = por %p110, %p111
      %p113 = scmp.ne.s32.totalorder %s101, %s102
      %p114 = scmp.eq.s32.totalorder %s29, 1
      %p115 = por %p113, %p114
      %p117 = scmp.ne.s32.totalorder %s102, %s116
      %p118 = scmp.eq.s32.totalorder %s29, 0
      %p119 = por %p117, %p118
      %s121 = sadd.s32 %s120, 1
      %p124 = scmp.eq.s32.totalorder %s23, 1
      %p125 = scmp.ne.s32.totalorder %s120, %s122
      %p126 = scmp.eq.s32.totalorder %s23, 0
      %p127 = por %p125, %p126
      %p128 = scmp.ne.s32.totalorder %s120, %s122
      %p129 = scmp.eq.s32.totalorder %s28, 1
      %p130 = por %p128, %p129
      %p131 = scmp.ne.s32.totalorder %s122, %s123
      %p132 = scmp.eq.s32.totalorder %s28, 0
      %p133 = por %p131, %p132
      %p134 = scmp.ne.s32.totalorder %s122, %s123
      %p135 = scmp.eq.s32.totalorder %s29, 1
      %p136 = por %p134, %p135
      %p138 = scmp.ne.s32.totalorder %s123, %s137
      %p139 = scmp.eq.s32.totalorder %s29, 0
      %p140 = por %p138, %p139
      %s142 = sadd.s32 %s141, 1
      %p145 = scmp.eq.s32.totalorder %s23, 1
      %p146 = scmp.ne.s32.totalorder %s141, %s143
      %p147 = scmp.eq.s32.totalorder %s23, 0
      %p148 = por %p146, %p147
      %p149 = scmp.ne.s32.totalorder %s141, %s143
      %p150 = scmp.eq.s32.totalorder %s28, 1
      %p151 = por %p149, %p150
      %p152 = scmp.ne.s32.totalorder %s143, %s144
      %p153 = scmp.eq.s32.totalorder %s28, 0
      %p154 = por %p152, %p153
      %p155 = scmp.ne.s32.totalorder %s143, %s144
      %p156 = scmp.eq.s32.totalorder %s29, 1
      %p157 = por %p155, %p156
      %p159 = scmp.ne.s32.totalorder %s144, %s158
      %p160 = scmp.eq.s32.totalorder %s29, 0
      %p161 = por %p159, %p160
      %s163 = sadd.s32 %s162, 1
      %p166 = scmp.eq.s32.totalorder %s23, 1
      %p167 = scmp.ne.s32.totalorder %s162, %s164
      %p168 = scmp.eq.s32.totalorder %s23, 0
      %p169 = por %p167, %p168
      %p170 = scmp.ne.s32.totalorder %s162, %s164
      %p171 = scmp.eq.s32.totalorder %s28, 1
      %p172 = por %p170, %p171
      %p173 = scmp.ne.s32.totalorder %s164, %s165
      %p174 = scmp.eq.s32.totalorder %s28, 0
      %p175 = por %p173, %p174
      %p176 = scmp.ne.s32.totalorder %s164, %s165
      %p177 = scmp.eq.s32.totalorder %s29, 1
      %p178 = por %p176, %p177
      %p180 = scmp.ne.s32.totalorder %s165, %s179
      %p181 = scmp.eq.s32.totalorder %s29, 0
      %p182 = por %p180, %p181
      %s183 = ssub.s32 %s23, %s30
      %p184 = scmp.eq.s32.totalorder %s183, 0
      %s186 = sadd.s32 %s185, 1
      %s187 = scalar_select %p184, %s185, %s186
      %p190 = pneg %p184
      %p191 = scmp.eq.s32.totalorder %s23, 1
      %p192 = por %p190, %p191
      %p193 = scmp.ne.s32.totalorder %s185, %s188
      %p194 = scmp.eq.s32.totalorder %s23, 0
      %p195 = por %p193, %p194
      %p196 = scmp.ne.s32.totalorder %s185, %s188
      %p197 = scmp.eq.s32.totalorder %s28, 1
      %p198 = por %p196, %p197
      %p199 = scmp.ne.s32.totalorder %s188, %s189
      %p200 = scmp.eq.s32.totalorder %s28, 0
      %p201 = por %p199, %p200
      %p202 = scmp.ne.s32.totalorder %s188, %s189
      %p203 = scmp.eq.s32.totalorder %s29, 1
      %p204 = por %p202, %p203
      %p206 = scmp.ne.s32.totalorder %s189, %s205
      %p207 = scmp.eq.s32.totalorder %s29, 0
      %p208 = por %p206, %p207
      %s209 = ssub.s32 %s23, %s30
      %p210 = scmp.eq.s32.totalorder %s209, 0
      %s212 = sadd.s32 %s211, 1
      %s213 = scalar_select %p210, %s211, %s212
      %p216 = pneg %p210
      %p217 = scmp.eq.s32.totalorder %s23, 1
      %p218 = por %p216, %p217
      %p219 = scmp.ne.s32.totalorder %s211, %s214
      %p220 = scmp.eq.s32.totalorder %s23, 0
      %p221 = por %p219, %p220
      %p222 = scmp.ne.s32.totalorder %s211, %s214
      %p223 = scmp.eq.s32.totalorder %s28, 1
      %p224 = por %p222, %p223
      %p225 = scmp.ne.s32.totalorder %s214, %s215
      %p226 = scmp.eq.s32.totalorder %s28, 0
      %p227 = por %p225, %p226
      %p228 = scmp.ne.s32.totalorder %s214, %s215
      %p229 = scmp.eq.s32.totalorder %s29, 1
      %p230 = por %p228, %p229
      %p232 = scmp.ne.s32.totalorder %s215, %s231
      %p233 = scmp.eq.s32.totalorder %s29, 0
      %p234 = por %p232, %p233
      %p235 = scmp.le.s32.totalorder 1, %s23
      %p236 = scmp.lt.s32.totalorder %s23, 3
      %p237 = pnand %p235, %p236
      %p238 = pneg %p237
      // Predicated region
      $region9: #{tpu_custom_call.1} parent=5 // pred_check
        _
      $region10: #{tpu_custom_call.1} parent=5 // pred_check_branch
        %240 = sbr.rel (%p237) target = $region12
      $region11: #{tpu_custom_call.1} parent=5 // pred_region
        %s241 = ssub.s32 %s23, 1
        // Predicated region
        $region13: #{tpu_custom_call.1} parent=11 // pred_check
          %p242 = pneg %p70
        $region14: #{tpu_custom_call.1} parent=11 // pred_check_branch
          %244 = sbr.rel (%p242) target = $region16
        $region15: #{tpu_custom_call.1} parent=11 // pred_region
          _
        $region16: #{tpu_custom_call.1} parent=11 // pred_fallthru
          _
        // Predicated region
        $region17: #{tpu_custom_call.1} parent=11 // pred_check
          %p245 = pneg %p91
        $region18: #{tpu_custom_call.1} parent=11 // pred_check_branch
          %247 = sbr.rel (%p245) target = $region20
        $region19: #{tpu_custom_call.1} parent=11 // pred_region
          _
        $region20: #{tpu_custom_call.1} parent=11 // pred_fallthru
          _
        // Predicated region
        $region21: #{tpu_custom_call.1} parent=11 // pred_check
          %p248 = pneg %p112
        $region22: #{tpu_custom_call.1} parent=11 // pred_check_branch
          %250 = sbr.rel (%p248) target = $region24
        $region23: #{tpu_custom_call.1} parent=11 // pred_region
          _
        $region24: #{tpu_custom_call.1} parent=11 // pred_fallthru
          _
        // Predicated region
        $region25: #{tpu_custom_call.1} parent=11 // pred_check
          %p251 = pneg %p133
        $region26: #{tpu_custom_call.1} parent=11 // pred_check_branch
          %253 = sbr.rel (%p251) target = $region28
        $region27: #{tpu_custom_call.1} parent=11 // pred_region
          _
        $region28: #{tpu_custom_call.1} parent=11 // pred_fallthru
          _
        // Predicated region
        $region29: #{tpu_custom_call.1} parent=11 // pred_check
          %p254 = pneg %p154
        $region30: #{tpu_custom_call.1} parent=11 // pred_check_branch
          %256 = sbr.rel (%p254) target = $region32
        $region31: #{tpu_custom_call.1} parent=11 // pred_region
          %s258 = ssub.s32 16, 16
          %259 = vsyncadd [#allocation4], %s258
          %s261 = sshll.u32 %s5, 4
          %s262 = int_to_ptr.vmem [resolvable:$true] %s261
          %264 = dma.vmem_to_smem %s262, 16, [#allocation2], [#allocation4]
        $region32: #{tpu_custom_call.1} parent=11 // pred_fallthru
          _
        // Predicated region
        $region33: #{tpu_custom_call.1} parent=11 // pred_check
          %p265 = pneg %p175
        $region34: #{tpu_custom_call.1} parent=11 // pred_check_branch
          %267 = sbr.rel (%p265) target = $region36
        $region35: #{tpu_custom_call.1} parent=11 // pred_region
          %s269 = ssub.s32 16, 16
          %270 = vsyncadd [#allocation6], %s269
          %s272 = sshll.u32 %s6, 4
          %s273 = int_to_ptr.vmem [resolvable:$true] %s272
          %275 = dma.vmem_to_smem %s273, 16, [#allocation5], [#allocation6]
        $region36: #{tpu_custom_call.1} parent=11 // pred_fallthru
          _
      $region12: #{tpu_custom_call.1} parent=5 // pred_fallthru
        _
      %p276 = scmp.lt.s32.totalorder %s23, 2
      // Predicated region
      $region37: #{tpu_custom_call.1} parent=5 // pred_check
        %p277 = pneg %p276
      $region38: #{tpu_custom_call.1} parent=5 // pred_check_branch
        %279 = sbr.rel (%p277) target = $region40
      $region39: #{tpu_custom_call.1} parent=5 // pred_region
        // Predicated region
        $region41: #{tpu_custom_call.1} parent=39 // pred_check
          %p280 = pneg %p43
        $region42: #{tpu_custom_call.1} parent=39 // pred_check_branch
          %282 = sbr.rel (%p280) target = $region44
        $region43: #{tpu_custom_call.1} parent=39 // pred_region
          %p283 = scmp.lt.s32.totalorder %s23, 1
          %s284 = scalar_select %p283, %s23, 1
          %s285 = smul.addr %s284, 2
          %s286 = smul.addr %s285, 8
          %s287 = scalar_lea.vmem %s0, %s286
        $region44: #{tpu_custom_call.1} parent=39 // pred_fallthru
          _
      $region40: #{tpu_custom_call.1} parent=5 // pred_fallthru
        _
      %p288 = scmp.le.s32.totalorder 1, %s23
      %p289 = scmp.lt.s32.totalorder %s23, 3
      %p290 = pnand %p288, %p289
      %p291 = pneg %p290
      // Predicated region
      $region45: #{tpu_custom_call.1} parent=5 // pred_check
        _
      $region46: #{tpu_custom_call.1} parent=5 // pred_check_branch
        %293 = sbr.rel (%p290) target = $region48
      $region47: #{tpu_custom_call.1} parent=5 // pred_region
        %s294 = ssub.s32 %s23, 1
        // Predicated region
        $region49: #{tpu_custom_call.1} parent=47 // pred_check
          %p295 = pneg %p154
        $region50: #{tpu_custom_call.1} parent=47 // pred_check_branch
          %297 = sbr.rel (%p295) target = $region52
        $region51: #{tpu_custom_call.1} parent=47 // pred_region
          %298 = dma.done [#allocation4], 16
        $region52: #{tpu_custom_call.1} parent=47 // pred_fallthru
          _
        // Predicated region
        $region53: #{tpu_custom_call.1} parent=47 // pred_check
          %p299 = pneg %p175
        $region54: #{tpu_custom_call.1} parent=47 // pred_check_branch
          %301 = sbr.rel (%p299) target = $region56
        $region55: #{tpu_custom_call.1} parent=47 // pred_region
          %302 = dma.done [#allocation6], 16
        $region56: #{tpu_custom_call.1} parent=47 // pred_fallthru
          _
        %303 = sfence
        %p304 = scmp.lt.s32.totalorder %s28, 1
        %s305 = scalar_select %p304, %s28, 1
        %s306 = smul.addr %s305, 2
        %s307 = smul.addr %s306, 8
        %s308 = scalar_lea.vmem %s0, %s307
        %p309 = pneg %p49
        %p310 = pneg %p46
        %p311 = pneg %p70
        %p312 = pneg %p67
        %p313 = pneg %p91
        %p314 = pneg %p88
        %p315 = pneg %p112
        %p316 = pneg %p109
        %p317 = pneg %p133
        %p318 = pneg %p130
        %p319 = pneg %p154
        %p320 = pneg %p151
        %p321 = pneg %p175
        %p322 = pneg %p172
        %p323 = pneg %p201
        %p324 = pneg %p198
        %s325 = sand.u32 %s188, 1
        %s326 = scalar_lea.sflag [#allocation3], %s325
        %s327 = sand.u32 %s188, 1
        %s328 = scalar_lea.vmem [#allocation7], %s327
        %p329 = pneg %p227
        %p330 = pneg %p224
        %s331 = sand.u32 %s214, 1
        %s332 = scalar_lea.sflag [#allocation9], %s331
        %s333 = sand.u32 %s214, 1
        %s334 = scalar_lea.vmem [#allocation8], %s333
        %p335 = scmp.lt.s32.totalorder %s28, 1
        %s336 = scalar_select %p335, %s28, 1
        %s337 = smul.addr %s336, 2
        %s338 = smul.addr %s337, 8
        %s339 = scalar_lea.vmem %s0, %s338
        %v340 = vlaneseq
        %v341 = vshrl.u32 %v340, 7
        %v342 = vadd.s32 %v341, 8
        %v343 = vlaneseq
        %v344 = vand.u32 %v343, 127
        %v345 = vsub.s32 %v341, 1
        %v346 = vsub.s32 %v342, 1
        %vm347 = vcmp.eq.s32.totalorder %v344, %v345
        %vm348 = vcmp.eq.s32.totalorder %v344, %v346
        %v349 = vsel %vm347, 1, 0
        %v350 = vsel %vm348, 1, 0
        %v351 = vcvt.s32.f32 %v349
        %v352 = vcvt.s32.f32 %v350
        %v353 = vadd.s32 %v341, 1
        %v354 = vadd.s32 %v342, 1
        %vm355 = vcmp.eq.s32.totalorder %v344, %v353
        %vm356 = vcmp.eq.s32.totalorder %v344, %v354
        %v357 = vsel %vm355, 1, 0
        %v358 = vsel %vm356, 1, 0
        %v359 = vcvt.s32.f32 %v357
        %v360 = vcvt.s32.f32 %v358
        %v361 = vld [vmem:[%s339] sm:$0xff]
        %v362 = vld [vmem:[%s339 + $0x8] sm:$0xff]
        %vm363 = vcmask 130048
        %v365 = vsel %vm363, %v351, 0
        %v368 = vsel %vm363, %v352, 0
        %370 = vmatprep.subr.mxu0 0.0
        %371 = vmatpush1.msra.mxu0 %v361
        %372 = vmatprep.subr.mxu0 0.0
        %373 = vmatpush1.msra.mxu0 %v362
        %374 = vmatprep.subr.mxu0 0.0
        %375 = vmatpush1.msra.mxu0 0.0
        %376 = vmatprep.subr.mxu0 0.0
        %377 = vmatpush1.msra.mxu0 0.0
        %378 = vmatprep.subr.mxu0 0.0
        %379 = vmatpush1.msra.mxu0 0.0
        %380 = vmatprep.subr.mxu0 0.0
        %381 = vmatpush1.msra.mxu0 0.0
        %382 = vmatprep.subr.mxu0 0.0
        %383 = vmatpush1.msra.mxu0 0.0
        %384 = vmatprep.subr.mxu0 0.0
        %385 = vmatpush1.msra.mxu0 0.0
        %386 = vmatprep.subr.mxu0 0.0
        %387 = vmatpush1.msra.mxu0 0.0
        %388 = vmatprep.subr.mxu0 0.0
        %389 = vmatpush1.msra.mxu0 0.0
        %390 = vmatprep.subr.mxu0 0.0
        %391 = vmatpush1.msra.mxu0 0.0
        %392 = vmatprep.subr.mxu0 0.0
        %393 = vmatpush1.msra.mxu0 0.0
        %394 = vmatprep.subr.mxu0 0.0
        %395 = vmatpush1.msra.mxu0 0.0
        %396 = vmatprep.subr.mxu0 0.0
        %397 = vmatpush1.msra.mxu0 0.0
        %398 = vmatprep.subr.mxu0 0.0
        %399 = vmatpush1.msra.mxu0 0.0
        %400 = vmatprep.subr.mxu0 0.0
        %401 = vmatpush1.msra.mxu0 0.0
        %402 = vmatprep.subr.mxu0 0.0
        %403 = vmatpush1.msra.mxu0 0.0
        %404 = vmatprep.subr.mxu0 0.0
        %405 = vmatpush1.msra.mxu0 0.0
        %406 = vmatprep.subr.mxu0 0.0
        %407 = vmatpush1.msra.mxu0 0.0
        %408 = vmatprep.subr.mxu0 0.0
        %409 = vmatpush1.msra.mxu0 0.0
        %410 = vmatprep.subr.mxu0 0.0
        %411 = vmatpush1.msra.mxu0 0.0
        %412 = vmatprep.subr.mxu0 0.0
        %413 = vmatpush1.msra.mxu0 0.0
        %414 = vmatprep.subr.mxu0 0.0
        %415 = vmatpush1.msra.mxu0 0.0
        %416 = vmatprep.subr.mxu0 0.0
        %417 = vmatpush1.msra.mxu0 0.0
        %418 = vmatprep.subr.mxu0 0.0
        %419 = vmatpush1.msra.mxu0 0.0
        %420 = vmatprep.subr.mxu0 0.0
        %421 = vmatpush1.msra.mxu0 0.0
        %422 = vmatprep.subr.mxu0 0.0
        %423 = vmatpush1.msra.mxu0 0.0
        %424 = vmatprep.subr.mxu0 0.0
        %425 = vmatpush1.msra.mxu0 0.0
        %426 = vmatprep.subr.mxu0 0.0
        %427 = vmatpush1.msra.mxu0 0.0
        %428 = vmatprep.subr.mxu0 0.0
        %429 = vmatpush1.msra.mxu0 0.0
        %430 = vmatprep.subr.mxu0 0.0
        %431 = vmatpush1.msra.mxu0 0.0
        %432 = vmatprep.subr.mxu0 0.0
        %433 = vmatpush1.msra.mxu0 0.0
        %434 = vmatprep.mubr.f32.mxu0 0.0
        %435 = vmatmul.mubr.f32.gmra.mrb[0].mxu0 %v365
        %v436 = vpop.f32.mrb[0].mxu0
        %v437 = vadd.f32 0.0, %v436
        %v438 = vpop.f32.mrb[0].mxu0
        %439 = vmatprep.mubr.f32.mxu0 0.0
        %440 = vmatmul.mubr.f32.gmra.mrb[0].mxu0 %v368
        %v441 = vpop.f32.mrb[0].mxu0
        %v442 = vadd.f32 0.0, %v441
        %v443 = vpop.f32.mrb[0].mxu0
        %444 = vdwg.mxu0
        %v446 = vsel %vm363, %v359, 0
        %v449 = vsel %vm363, %v360, 0
        %451 = vmatprep.subr.mxu0 0.0
        %452 = vmatpush1.msra.mxu0 %v361
        %453 = vmatprep.subr.mxu0 0.0
        %454 = vmatpush1.msra.mxu0 %v362
        %455 = vmatprep.subr.mxu0 0.0
        %456 = vmatpush1.msra.mxu0 0.0
        %457 = vmatprep.subr.mxu0 0.0
        %458 = vmatpush1.msra.mxu0 0.0
        %459 = vmatprep.subr.mxu0 0.0
        %460 = vmatpush1.msra.mxu0 0.0
        %461 = vmatprep.subr.mxu0 0.0
        %462 = vmatpush1.msra.mxu0 0.0
        %463 = vmatprep.subr.mxu0 0.0
        %464 = vmatpush1.msra.mxu0 0.0
        %465 = vmatprep.subr.mxu0 0.0
        %466 = vmatpush1.msra.mxu0 0.0
        %467 = vmatprep.subr.mxu0 0.0
        %468 = vmatpush1.msra.mxu0 0.0
        %469 = vmatprep.subr.mxu0 0.0
        %470 = vmatpush1.msra.mxu0 0.0
        %471 = vmatprep.subr.mxu0 0.0
        %472 = vmatpush1.msra.mxu0 0.0
        %473 = vmatprep.subr.mxu0 0.0
        %474 = vmatpush1.msra.mxu0 0.0
        %475 = vmatprep.subr.mxu0 0.0
        %476 = vmatpush1.msra.mxu0 0.0
        %477 = vmatprep.subr.mxu0 0.0
        %478 = vmatpush1.msra.mxu0 0.0
        %479 = vmatprep.subr.mxu0 0.0
        %480 = vmatpush1.msra.mxu0 0.0
        %481 = vmatprep.subr.mxu0 0.0
        %482 = vmatpush1.msra.mxu0 0.0
        %483 = vmatprep.subr.mxu0 0.0
        %484 = vmatpush1.msra.mxu0 0.0
        %485 = vmatprep.subr.mxu0 0.0
        %486 = vmatpush1.msra.mxu0 0.0
        %487 = vmatprep.subr.mxu0 0.0
        %488 = vmatpush1.msra.mxu0 0.0
        %489 = vmatprep.subr.mxu0 0.0
        %490 = vmatpush1.msra.mxu0 0.0
        %491 = vmatprep.subr.mxu0 0.0
        %492 = vmatpush1.msra.mxu0 0.0
        %493 = vmatprep.subr.mxu0 0.0
        %494 = vmatpush1.msra.mxu0 0.0
        %495 = vmatprep.subr.mxu0 0.0
        %496 = vmatpush1.msra.mxu0 0.0
        %497 = vmatprep.subr.mxu0 0.0
        %498 = vmatpush1.msra.mxu0 0.0
        %499 = vmatprep.subr.mxu0 0.0
        %500 = vmatpush1.msra.mxu0 0.0
        %501 = vmatprep.subr.mxu0 0.0
        %502 = vmatpush1.msra.mxu0 0.0
        %503 = vmatprep.subr.mxu0 0.0
        %504 = vmatpush1.msra.mxu0 0.0
        %505 = vmatprep.subr.mxu0 0.0
        %506 = vmatpush1.msra.mxu0 0.0
        %507 = vmatprep.subr.mxu0 0.0
        %508 = vmatpush1.msra.mxu0 0.0
        %509 = vmatprep.subr.mxu0 0.0
        %510 = vmatpush1.msra.mxu0 0.0
        %511 = vmatprep.subr.mxu0 0.0
        %512 = vmatpush1.msra.mxu0 0.0
        %513 = vmatprep.subr.mxu0 0.0
        %514 = vmatpush1.msra.mxu0 0.0
        %515 = vmatprep.mubr.f32.mxu0 0.0
        %516 = vmatmul.mubr.f32.gmra.mrb[0].mxu0 %v446
        %v517 = vpop.f32.mrb[0].mxu0
        %v518 = vadd.f32 0.0, %v517
        %v519 = vpop.f32.mrb[0].mxu0
        %520 = vmatprep.mubr.f32.mxu0 0.0
        %521 = vmatmul.mubr.f32.gmra.mrb[0].mxu0 %v449
        %v522 = vpop.f32.mrb[0].mxu0
        %v523 = vadd.f32 0.0, %v522
        %v524 = vpop.f32.mrb[0].mxu0
        %525 = vdwg.mxu0
        %v526 = vld [vmem:[%s1] sm:$0xff]
        %v527 = vld [vmem:[%s1 + $0x8] sm:$0xff]
        %v528 = vld [vmem:[%s1 + $0x10] sm:$0xff]
        %v529 = vld [vmem:[%s1 + $0x18] sm:$0xff]
        %v530 = vld [vmem:[%s1 + $0x20] sm:$0xff]
        %v531 = vld [vmem:[%s1 + $0x28] sm:$0xff]
        %v532 = vld [vmem:[%s1 + $0x30] sm:$0xff]
        %v533 = vld [vmem:[%s1 + $0x38] sm:$0xff]
        %v534 = vld [vmem:[%s1 + $0x40] sm:$0x1]
        %s535 = scalar_lea.vmem %s1, 72
        %v536 = vld [vmem:[%s535] sm:$0xff]
        %v537 = vld [vmem:[%s535 + $0x8] sm:$0xff]
        %v538 = vld [vmem:[%s535 + $0x10] sm:$0xff]
        %v539 = vld [vmem:[%s535 + $0x18] sm:$0xff]
        %v540 = vld [vmem:[%s535 + $0x20] sm:$0xff]
        %v541 = vld [vmem:[%s535 + $0x28] sm:$0xff]
        %v542 = vld [vmem:[%s535 + $0x30] sm:$0xff]
        %v543 = vld [vmem:[%s535 + $0x38] sm:$0xff]
        %v544 = vld [vmem:[%s535 + $0x40] sm:$0x1]
        %vm545 = vcmask 531456
        %v547 = vsel %vm545, %v361, 0
        %v550 = vsel %vm545, %v362, 0
        %vm552 = vcmask 1040384
        %v554 = vsel %vm552, %v544, 0
        %556 = vmatprep.subr.mxu0 0.0
        %557 = vmatpush1.msra.mxu0 %v536
        %558 = vmatprep.subr.mxu0 0.0
        %559 = vmatpush1.msra.mxu0 %v537
        %560 = vmatprep.subr.mxu0 0.0
        %561 = vmatpush1.msra.mxu0 %v538
        %562 = vmatprep.subr.mxu0 0.0
        %563 = vmatpush1.msra.mxu0 %v539
        %564 = vmatprep.subr.mxu0 0.0
        %565 = vmatpush1.msra.mxu0 %v540
        %566 = vmatprep.subr.mxu0 0.0
        %567 = vmatpush1.msra.mxu0 %v541
        %568 = vmatprep.subr.mxu0 0.0
        %569 = vmatpush1.msra.mxu0 %v542
        %570 = vmatprep.subr.mxu0 0.0
        %571 = vmatpush1.msra.mxu0 %v543
        %572 = vmatprep.subr.mxu0 0.0
        %573 = vmatpush1.msra.mxu0 %v554
        %574 = vmatprep.subr.mxu0 0.0
        %575 = vmatpush1.msra.mxu0 0.0
        %576 = vmatprep.subr.mxu0 0.0
        %577 = vmatpush1.msra.mxu0 0.0
        %578 = vmatprep.subr.mxu0 0.0
        %579 = vmatpush1.msra.mxu0 0.0
        %580 = vmatprep.subr.mxu0 0.0
        %581 = vmatpush1.msra.mxu0 0.0
        %582 = vmatprep.subr.mxu0 0.0
        %583 = vmatpush1.msra.mxu0 0.0
        %584 = vmatprep.subr.mxu0 0.0
        %585 = vmatpush1.msra.mxu0 0.0
        %586 = vmatprep.subr.mxu0 0.0
        %587 = vmatpush1.msra.mxu0 0.0
        %588 = vmatprep.subr.mxu0 0.0
        %589 = vmatpush1.msra.mxu0 0.0
        %590 = vmatprep.subr.mxu0 0.0
        %591 = vmatpush1.msra.mxu0 0.0
        %592 = vmatprep.subr.mxu0 0.0
        %593 = vmatpush1.msra.mxu0 0.0
        %594 = vmatprep.subr.mxu0 0.0
        %595 = vmatpush1.msra.mxu0 0.0
        %596 = vmatprep.subr.mxu0 0.0
        %597 = vmatpush1.msra.mxu0 0.0
        %598 = vmatprep.subr.mxu0 0.0
        %599 = vmatpush1.msra.mxu0 0.0
        %600 = vmatprep.subr.mxu0 0.0
        %601 = vmatpush1.msra.mxu0 0.0
        %602 = vmatprep.subr.mxu0 0.0
        %603 = vmatpush1.msra.mxu0 0.0
        %604 = vmatprep.subr.mxu0 0.0
        %605 = vmatpush1.msra.mxu0 0.0
        %606 = vmatprep.subr.mxu0 0.0
        %607 = vmatpush1.msra.mxu0 0.0
        %608 = vmatprep.subr.mxu0 0.0
        %609 = vmatpush1.msra.mxu0 0.0
        %610 = vmatprep.subr.mxu0 0.0
        %611 = vmatpush1.msra.mxu0 0.0
        %612 = vmatprep.subr.mxu0 0.0
        %613 = vmatpush1.msra.mxu0 0.0
        %614 = vmatprep.subr.mxu0 0.0
        %615 = vmatpush1.msra.mxu0 0.0
        %616 = vmatprep.subr.mxu0 0.0
        %617 = vmatpush1.msra.mxu0 0.0
        %618 = vmatprep.subr.mxu0 0.0
        %619 = vmatpush1.msra.mxu0 0.0
        %620 = vmatprep.mubr.f32.mxu0 0.0
        %621 = vmatmul.mubr.f32.gmra.mrb[0].mxu0 %v547
        %v622 = vpop.f32.mrb[0].mxu0
        %v623 = vadd.f32 0.0, %v622
        %v624 = vpop.f32.mrb[0].mxu0
        %625 = vmatprep.mubr.f32.mxu0 0.0
        %626 = vmatmul.mubr.f32.gmra.mrb[0].mxu0 %v550
        %v627 = vpop.f32.mrb[0].mxu0
        %v628 = vadd.f32 0.0, %v627
        %v629 = vpop.f32.mrb[0].mxu0
        %630 = vdwg.mxu0
        %v632 = vsel %vm545, %v437, 0
        %v635 = vsel %vm545, %v442, 0
        %v638 = vsel %vm552, %v534, 0
        %640 = vmatprep.subr.mxu0 0.0
        %641 = vmatpush1.msra.mxu0 %v526
        %642 = vmatprep.subr.mxu0 0.0
        %643 = vmatpush1.msra.mxu0 %v527
        %644 = vmatprep.subr.mxu0 0.0
        %645 = vmatpush1.msra.mxu0 %v528
        %646 = vmatprep.subr.mxu0 0.0
        %647 = vmatpush1.msra.mxu0 %v529
        %648 = vmatprep.subr.mxu0 0.0
        %649 = vmatpush1.msra.mxu0 %v530
        %650 = vmatprep.subr.mxu0 0.0
        %651 = vmatpush1.msra.mxu0 %v531
        %652 = vmatprep.subr.mxu0 0.0
        %653 = vmatpush1.msra.mxu0 %v532
        %654 = vmatprep.subr.mxu0 0.0
        %655 = vmatpush1.msra.mxu0 %v533
        %656 = vmatprep.subr.mxu0 0.0
        %657 = vmatpush1.msra.mxu0 %v638
        %658 = vmatprep.subr.mxu0 0.0
        %659 = vmatpush1.msra.mxu0 0.0
        %660 = vmatprep.subr.mxu0 0.0
        %661 = vmatpush1.msra.mxu0 0.0
        %662 = vmatprep.subr.mxu0 0.0
        %663 = vmatpush1.msra.mxu0 0.0
        %664 = vmatprep.subr.mxu0 0.0
        %665 = vmatpush1.msra.mxu0 0.0
        %666 = vmatprep.subr.mxu0 0.0
        %667 = vmatpush1.msra.mxu0 0.0
        %668 = vmatprep.subr.mxu0 0.0
        %669 = vmatpush1.msra.mxu0 0.0
        %670 = vmatprep.subr.mxu0 0.0
        %671 = vmatpush1.msra.mxu0 0.0
        %672 = vmatprep.subr.mxu0 0.0
        %673 = vmatpush1.msra.mxu0 0.0
        %674 = vmatprep.subr.mxu0 0.0
        %675 = vmatpush1.msra.mxu0 0.0
        %676 = vmatprep.subr.mxu0 0.0
        %677 = vmatpush1.msra.mxu0 0.0
        %678 = vmatprep.subr.mxu0 0.0
        %679 = vmatpush1.msra.mxu0 0.0
        %680 = vmatprep.subr.mxu0 0.0
        %681 = vmatpush1.msra.mxu0 0.0
        %682 = vmatprep.subr.mxu0 0.0
        %683 = vmatpush1.msra.mxu0 0.0
        %684 = vmatprep.subr.mxu0 0.0
        %685 = vmatpush1.msra.mxu0 0.0
        %686 = vmatprep.subr.mxu0 0.0
        %687 = vmatpush1.msra.mxu0 0.0
        %688 = vmatprep.subr.mxu0 0.0
        %689 = vmatpush1.msra.mxu0 0.0
        %690 = vmatprep.subr.mxu0 0.0
        %691 = vmatpush1.msra.mxu0 0.0
        %692 = vmatprep.subr.mxu0 0.0
        %693 = vmatpush1.msra.mxu0 0.0
        %694 = vmatprep.subr.mxu0 0.0
        %695 = vmatpush1.msra.mxu0 0.0
        %696 = vmatprep.subr.mxu0 0.0
        %697 = vmatpush1.msra.mxu0 0.0
        %698 = vmatprep.subr.mxu0 0.0
        %699 = vmatpush1.msra.mxu0 0.0
        %700 = vmatprep.subr.mxu0 0.0
        %701 = vmatpush1.msra.mxu0 0.0
        %702 = vmatprep.subr.mxu0 0.0
        %703 = vmatpush1.msra.mxu0 0.0
        %704 = vmatprep.mubr.f32.mxu0 0.0
        %705 = vmatmul.mubr.f32.gmra.mrb[0].mxu0 %v632
        %v706 = vpop.f32.mrb[0].mxu0
        %v707 = vadd.f32 %v623, %v706
        %v708 = vpop.f32.mrb[0].mxu0
        %709 = vmatprep.mubr.f32.mxu0 0.0
        %710 = vmatmul.mubr.f32.gmra.mrb[0].mxu0 %v635
        %v711 = vpop.f32.mrb[0].mxu0
        %v712 = vadd.f32 %v628, %v711
        %v713 = vpop.f32.mrb[0].mxu0
        %714 = vdwg.mxu0
        %s715 = scalar_lea.vmem %s1, 144
        %v716 = vld [vmem:[%s715] sm:$0xff]
        %v717 = vld [vmem:[%s715 + $0x8] sm:$0xff]
        %v718 = vld [vmem:[%s715 + $0x10] sm:$0xff]
        %v719 = vld [vmem:[%s715 + $0x18] sm:$0xff]
        %v720 = vld [vmem:[%s715 + $0x20] sm:$0xff]
        %v721 = vld [vmem:[%s715 + $0x28] sm:$0xff]
        %v722 = vld [vmem:[%s715 + $0x30] sm:$0xff]
        %v723 = vld [vmem:[%s715 + $0x38] sm:$0xff]
        %v724 = vld [vmem:[%s715 + $0x40] sm:$0x1]
        %v726 = vsel %vm545, %v518, 0
        %v729 = vsel %vm545, %v523, 0
        %v732 = vsel %vm552, %v724, 0
        %734 = vmatprep.subr.mxu0 0.0
        %735 = vmatpush1.msra.mxu0 %v716
        %736 = vmatprep.subr.mxu0 0.0
        %737 = vmatpush1.msra.mxu0 %v717
        %738 = vmatprep.subr.mxu0 0.0
        %739 = vmatpush1.msra.mxu0 %v718
        %740 = vmatprep.subr.mxu0 0.0
        %741 = vmatpush1.msra.mxu0 %v719
        %742 = vmatprep.subr.mxu0 0.0
        %743 = vmatpush1.msra.mxu0 %v720
        %744 = vmatprep.subr.mxu0 0.0
        %745 = vmatpush1.msra.mxu0 %v721
        %746 = vmatprep.subr.mxu0 0.0
        %747 = vmatpush1.msra.mxu0 %v722
        %748 = vmatprep.subr.mxu0 0.0
        %749 = vmatpush1.msra.mxu0 %v723
        %750 = vmatprep.subr.mxu0 0.0
        %751 = vmatpush1.msra.mxu0 %v732
        %752 = vmatprep.subr.mxu0 0.0
        %753 = vmatpush1.msra.mxu0 0.0
        %754 = vmatprep.subr.mxu0 0.0
        %755 = vmatpush1.msra.mxu0 0.0
        %756 = vmatprep.subr.mxu0 0.0
        %757 = vmatpush1.msra.mxu0 0.0
        %758 = vmatprep.subr.mxu0 0.0
        %759 = vmatpush1.msra.mxu0 0.0
        %760 = vmatprep.subr.mxu0 0.0
        %761 = vmatpush1.msra.mxu0 0.0
        %762 = vmatprep.subr.mxu0 0.0
        %763 = vmatpush1.msra.mxu0 0.0
        %764 = vmatprep.subr.mxu0 0.0
        %765 = vmatpush1.msra.mxu0 0.0
        %766 = vmatprep.subr.mxu0 0.0
        %767 = vmatpush1.msra.mxu0 0.0
        %768 = vmatprep.subr.mxu0 0.0
        %769 = vmatpush1.msra.mxu0 0.0
        %770 = vmatprep.subr.mxu0 0.0
        %771 = vmatpush1.msra.mxu0 0.0
        %772 = vmatprep.subr.mxu0 0.0
        %773 = vmatpush1.msra.mxu0 0.0
        %774 = vmatprep.subr.mxu0 0.0
        %775 = vmatpush1.msra.mxu0 0.0
        %776 = vmatprep.subr.mxu0 0.0
        %777 = vmatpush1.msra.mxu0 0.0
        %778 = vmatprep.subr.mxu0 0.0
        %779 = vmatpush1.msra.mxu0 0.0
        %780 = vmatprep.subr.mxu0 0.0
        %781 = vmatpush1.msra.mxu0 0.0
        %782 = vmatprep.subr.mxu0 0.0
        %783 = vmatpush1.msra.mxu0 0.0
        %784 = vmatprep.subr.mxu0 0.0
        %785 = vmatpush1.msra.mxu0 0.0
        %786 = vmatprep.subr.mxu0 0.0
        %787 = vmatpush1.msra.mxu0 0.0
        %788 = vmatprep.subr.mxu0 0.0
        %789 = vmatpush1.msra.mxu0 0.0
        %790 = vmatprep.subr.mxu0 0.0
        %791 = vmatpush1.msra.mxu0 0.0
        %792 = vmatprep.subr.mxu0 0.0
        %793 = vmatpush1.msra.mxu0 0.0
        %794 = vmatprep.subr.mxu0 0.0
        %795 = vmatpush1.msra.mxu0 0.0
        %796 = vmatprep.subr.mxu0 0.0
        %797 = vmatpush1.msra.mxu0 0.0
        %798 = vmatprep.mubr.f32.mxu0 0.0
        %799 = vmatmul.mubr.f32.gmra.mrb[0].mxu0 %v726
        %v800 = vpop.f32.mrb[0].mxu0
        %v801 = vadd.f32 0.0, %v800
        %v802 = vpop.f32.mrb[0].mxu0
        %803 = vmatprep.mubr.f32.mxu0 0.0
        %804 = vmatmul.mubr.f32.gmra.mrb[0].mxu0 %v729
        %v805 = vpop.f32.mrb[0].mxu0
        %v806 = vadd.f32 0.0, %v805
        %v807 = vpop.f32.mrb[0].mxu0
        %808 = vdwg.mxu0
        %v809 = vadd.f32 %v707, %v801
        %v810 = vadd.f32 %v712, %v806
        %811 = vmatprep.subr.mxu0 0.0
        %812 = vmatpush1.msra.mxu0 %v809
        %813 = vmatprep.subr.mxu0 0.0
        %814 = vmatpush1.msra.mxu0 %v810
        %815 = vmatprep.subr.mxu0 0.0
        %816 = vmatpush1.msra.mxu0 0.0
        %817 = vmatprep.subr.mxu0 0.0
        %818 = vmatpush1.msra.mxu0 0.0
        %819 = vmatprep.subr.mxu0 0.0
        %820 = vmatpush1.msra.mxu0 0.0
        %821 = vmatprep.subr.mxu0 0.0
        %822 = vmatpush1.msra.mxu0 0.0
        %823 = vmatprep.subr.mxu0 0.0
        %824 = vmatpush1.msra.mxu0 0.0
        %825 = vmatprep.subr.mxu0 0.0
        %826 = vmatpush1.msra.mxu0 0.0
        %827 = vmatprep.subr.mxu0 0.0
        %828 = vmatpush1.msra.mxu0 0.0
        %829 = vmatprep.subr.mxu0 0.0
        %830 = vmatpush1.msra.mxu0 0.0
        %831 = vmatprep.subr.mxu0 0.0
        %832 = vmatpush1.msra.mxu0 0.0
        %833 = vmatprep.subr.mxu0 0.0
        %834 = vmatpush1.msra.mxu0 0.0
        %835 = vmatprep.subr.mxu0 0.0
        %836 = vmatpush1.msra.mxu0 0.0
        %837 = vmatprep.subr.mxu0 0.0
        %838 = vmatpush1.msra.mxu0 0.0
        %839 = vmatprep.subr.mxu0 0.0
        %840 = vmatpush1.msra.mxu0 0.0
        %841 = vmatprep.subr.mxu0 0.0
        %842 = vmatpush1.msra.mxu0 0.0
        %843 = vmatprep.subr.mxu0 0.0
        %844 = vmatpush1.msra.mxu0 0.0
        %845 = vmatprep.subr.mxu0 0.0
        %846 = vmatpush1.msra.mxu0 0.0
        %847 = vmatprep.subr.mxu0 0.0
        %848 = vmatpush1.msra.mxu0 0.0
        %849 = vmatprep.subr.mxu0 0.0
        %850 = vmatpush1.msra.mxu0 0.0
        %851 = vmatprep.subr.mxu0 0.0
        %852 = vmatpush1.msra.mxu0 0.0
        %853 = vmatprep.subr.mxu0 0.0
        %854 = vmatpush1.msra.mxu0 0.0
        %855 = vmatprep.subr.mxu0 0.0
        %856 = vmatpush1.msra.mxu0 0.0
        %857 = vmatprep.subr.mxu0 0.0
        %858 = vmatpush1.msra.mxu0 0.0
        %859 = vmatprep.subr.mxu0 0.0
        %860 = vmatpush1.msra.mxu0 0.0
        %861 = vmatprep.subr.mxu0 0.0
        %862 = vmatpush1.msra.mxu0 0.0
        %863 = vmatprep.subr.mxu0 0.0
        %864 = vmatpush1.msra.mxu0 0.0
        %865 = vmatprep.subr.mxu0 0.0
        %866 = vmatpush1.msra.mxu0 0.0
        %867 = vmatprep.subr.mxu0 0.0
        %868 = vmatpush1.msra.mxu0 0.0
        %869 = vmatprep.subr.mxu0 0.0
        %870 = vmatpush1.msra.mxu0 0.0
        %871 = vmatprep.subr.mxu0 0.0
        %872 = vmatpush1.msra.mxu0 0.0
        %873 = vmatprep.subr.mxu0 0.0
        %874 = vmatpush1.msra.mxu0 0.0
        %875 = vmatprep.mubr.f32.mxu0 0.0
        %876 = vmatmul.mubr.f32.gmra.mrb[0].mxu0 %v365
        %v877 = vpop.f32.mrb[0].mxu0
        %v878 = vadd.f32 0.0, %v877
        %v879 = vpop.f32.mrb[0].mxu0
        %880 = vmatprep.mubr.f32.mxu0 0.0
        %881 = vmatmul.mubr.f32.gmra.mrb[0].mxu0 %v368
        %v882 = vpop.f32.mrb[0].mxu0
        %v883 = vadd.f32 0.0, %v882
        %v884 = vpop.f32.mrb[0].mxu0
        %885 = vdwg.mxu0
        %886 = vmatprep.subr.mxu0 0.0
        %887 = vmatpush1.msra.mxu0 %v809
        %888 = vmatprep.subr.mxu0 0.0
        %889 = vmatpush1.msra.mxu0 %v810
        %890 = vmatprep.subr.mxu0 0.0
        %891 = vmatpush1.msra.mxu0 0.0
        %892 = vmatprep.subr.mxu0 0.0
        %893 = vmatpush1.msra.mxu0 0.0
        %894 = vmatprep.subr.mxu0 0.0
        %895 = vmatpush1.msra.mxu0 0.0
        %896 = vmatprep.subr.mxu0 0.0
        %897 = vmatpush1.msra.mxu0 0.0
        %898 = vmatprep.subr.mxu0 0.0
        %899 = vmatpush1.msra.mxu0 0.0
        %900 = vmatprep.subr.mxu0 0.0
        %901 = vmatpush1.msra.mxu0 0.0
        %902 = vmatprep.subr.mxu0 0.0
        %903 = vmatpush1.msra.mxu0 0.0
        %904 = vmatprep.subr.mxu0 0.0
        %905 = vmatpush1.msra.mxu0 0.0
        %906 = vmatprep.subr.mxu0 0.0
        %907 = vmatpush1.msra.mxu0 0.0
        %908 = vmatprep.subr.mxu0 0.0
        %909 = vmatpush1.msra.mxu0 0.0
        %910 = vmatprep.subr.mxu0 0.0
        %911 = vmatpush1.msra.mxu0 0.0
        %912 = vmatprep.subr.mxu0 0.0
        %913 = vmatpush1.msra.mxu0 0.0
        %914 = vmatprep.subr.mxu0 0.0
        %915 = vmatpush1.msra.mxu0 0.0
        %916 = vmatprep.subr.mxu0 0.0
        %917 = vmatpush1.msra.mxu0 0.0
        %918 = vmatprep.subr.mxu0 0.0
        %919 = vmatpush1.msra.mxu0 0.0
        %920 = vmatprep.subr.mxu0 0.0
        %921 = vmatpush1.msra.mxu0 0.0
        %922 = vmatprep.subr.mxu0 0.0
        %923 = vmatpush1.msra.mxu0 0.0
        %924 = vmatprep.subr.mxu0 0.0
        %925 = vmatpush1.msra.mxu0 0.0
        %926 = vmatprep.subr.mxu0 0.0
        %927 = vmatpush1.msra.mxu0 0.0
        %928 = vmatprep.subr.mxu0 0.0
        %929 = vmatpush1.msra.mxu0 0.0
        %930 = vmatprep.subr.mxu0 0.0
        %931 = vmatpush1.msra.mxu0 0.0
        %932 = vmatprep.subr.mxu0 0.0
        %933 = vmatpush1.msra.mxu0 0.0
        %934 = vmatprep.subr.mxu0 0.0
        %935 = vmatpush1.msra.mxu0 0.0
        %936 = vmatprep.subr.mxu0 0.0
        %937 = vmatpush1.msra.mxu0 0.0
        %938 = vmatprep.subr.mxu0 0.0
        %939 = vmatpush1.msra.mxu0 0.0
        %940 = vmatprep.subr.mxu0 0.0
        %941 = vmatpush1.msra.mxu0 0.0
        %942 = vmatprep.subr.mxu0 0.0
        %943 = vmatpush1.msra.mxu0 0.0
        %944 = vmatprep.subr.mxu0 0.0
        %945 = vmatpush1.msra.mxu0 0.0
        %946 = vmatprep.subr.mxu0 0.0
        %947 = vmatpush1.msra.mxu0 0.0
        %948 = vmatprep.subr.mxu0 0.0
        %949 = vmatpush1.msra.mxu0 0.0
        %950 = vmatprep.mubr.f32.mxu0 0.0
        %951 = vmatmul.mubr.f32.gmra.mrb[0].mxu0 %v446
        %v952 = vpop.f32.mrb[0].mxu0
        %v953 = vadd.f32 0.0, %v952
        %v954 = vpop.f32.mrb[0].mxu0
        %955 = vmatprep.mubr.f32.mxu0 0.0
        %956 = vmatmul.mubr.f32.gmra.mrb[0].mxu0 %v449
        %v957 = vpop.f32.mrb[0].mxu0
        %v958 = vadd.f32 0.0, %v957
        %v959 = vpop.f32.mrb[0].mxu0
        %960 = vdwg.mxu0
        %v961 = vld [vmem:[%s2] sm:$0xff]
        %v962 = vld [vmem:[%s2 + $0x8] sm:$0xff]
        %s963 = scalar_lea.vmem %s2, 16
        %v964 = vld [vmem:[%s963] sm:$0xff]
        %v965 = vld [vmem:[%s963 + $0x8] sm:$0xff]
        %v967 = vsel %vm363, %v809, 0
        %v970 = vsel %vm363, %v810, 0
        %972 = vmatprep.subr.mxu0 0.0
        %973 = vmatpush1.msra.mxu0 %v964
        %974 = vmatprep.subr.mxu0 0.0
        %975 = vmatpush1.msra.mxu0 %v965
        %976 = vmatprep.subr.mxu0 0.0
        %977 = vmatpush1.msra.mxu0 0.0
        %978 = vmatprep.subr.mxu0 0.0
        %979 = vmatpush1.msra.mxu0 0.0
        %980 = vmatprep.subr.mxu0 0.0
        %981 = vmatpush1.msra.mxu0 0.0
        %982 = vmatprep.subr.mxu0 0.0
        %983 = vmatpush1.msra.mxu0 0.0
        %984 = vmatprep.subr.mxu0 0.0
        %985 = vmatpush1.msra.mxu0 0.0
        %986 = vmatprep.subr.mxu0 0.0
        %987 = vmatpush1.msra.mxu0 0.0
        %988 = vmatprep.subr.mxu0 0.0
        %989 = vmatpush1.msra.mxu0 0.0
        %990 = vmatprep.subr.mxu0 0.0
        %991 = vmatpush1.msra.mxu0 0.0
        %992 = vmatprep.subr.mxu0 0.0
        %993 = vmatpush1.msra.mxu0 0.0
        %994 = vmatprep.subr.mxu0 0.0
        %995 = vmatpush1.msra.mxu0 0.0
        %996 = vmatprep.subr.mxu0 0.0
        %997 = vmatpush1.msra.mxu0 0.0
        %998 = vmatprep.subr.mxu0 0.0
        %999 = vmatpush1.msra.mxu0 0.0
        %1000 = vmatprep.subr.mxu0 0.0
        %1001 = vmatpush1.msra.mxu0 0.0
        %1002 = vmatprep.subr.mxu0 0.0
        %1003 = vmatpush1.msra.mxu0 0.0
        %1004 = vmatprep.subr.mxu0 0.0
        %1005 = vmatpush1.msra.mxu0 0.0
        %1006 = vmatprep.subr.mxu0 0.0
        %1007 = vmatpush1.msra.mxu0 0.0
        %1008 = vmatprep.subr.mxu0 0.0
        %1009 = vmatpush1.msra.mxu0 0.0
        %1010 = vmatprep.subr.mxu0 0.0
        %1011 = vmatpush1.msra.mxu0 0.0
        %1012 = vmatprep.subr.mxu0 0.0
        %1013 = vmatpush1.msra.mxu0 0.0
        %1014 = vmatprep.subr.mxu0 0.0
        %1015 = vmatpush1.msra.mxu0 0.0
        %1016 = vmatprep.subr.mxu0 0.0
        %1017 = vmatpush1.msra.mxu0 0.0
        %1018 = vmatprep.subr.mxu0 0.0
        %1019 = vmatpush1.msra.mxu0 0.0
        %1020 = vmatprep.subr.mxu0 0.0
        %1021 = vmatpush1.msra.mxu0 0.0
        %1022 = vmatprep.subr.mxu0 0.0
        %1023 = vmatpush1.msra.mxu0 0.0
        %1024 = vmatprep.subr.mxu0 0.0
        %1025 = vmatpush1.msra.mxu0 0.0
        %1026 = vmatprep.subr.mxu0 0.0
        %1027 = vmatpush1.msra.mxu0 0.0
        %1028 = vmatprep.subr.mxu0 0.0
        %1029 = vmatpush1.msra.mxu0 0.0
        %1030 = vmatprep.subr.mxu0 0.0
        %1031 = vmatpush1.msra.mxu0 0.0
        %1032 = vmatprep.subr.mxu0 0.0
        %1033 = vmatpush1.msra.mxu0 0.0
        %1034 = vmatprep.subr.mxu0 0.0
        %1035 = vmatpush1.msra.mxu0 0.0
        %1036 = vmatprep.mubr.f32.mxu0 0.0
        %1037 = vmatmul.mubr.f32.gmra.mrb[0].mxu0 %v967
        %v1038 = vpop.f32.mrb[0].mxu0
        %v1039 = vadd.f32 0.0, %v1038
        %v1040 = vpop.f32.mrb[0].mxu0
        %1041 = vmatprep.mubr.f32.mxu0 0.0
        %1042 = vmatmul.mubr.f32.gmra.mrb[0].mxu0 %v970
        %v1043 = vpop.f32.mrb[0].mxu0
        %v1044 = vadd.f32 0.0, %v1043
        %v1045 = vpop.f32.mrb[0].mxu0
        %1046 = vdwg.mxu0
        %v1048 = vsel %vm363, %v878, 0
        %v1051 = vsel %vm363, %v883, 0
        %1053 = vmatprep.subr.mxu0 0.0
        %1054 = vmatpush1.msra.mxu0 %v961
        %1055 = vmatprep.subr.mxu0 0.0
        %1056 = vmatpush1.msra.mxu0 %v962
        %1057 = vmatprep.subr.mxu0 0.0
        %1058 = vmatpush1.msra.mxu0 0.0
        %1059 = vmatprep.subr.mxu0 0.0
        %1060 = vmatpush1.msra.mxu0 0.0
        %1061 = vmatprep.subr.mxu0 0.0
        %1062 = vmatpush1.msra.mxu0 0.0
        %1063 = vmatprep.subr.mxu0 0.0
        %1064 = vmatpush1.msra.mxu0 0.0
        %1065 = vmatprep.subr.mxu0 0.0
        %1066 = vmatpush1.msra.mxu0 0.0
        %1067 = vmatprep.subr.mxu0 0.0
        %1068 = vmatpush1.msra.mxu0 0.0
        %1069 = vmatprep.subr.mxu0 0.0
        %1070 = vmatpush1.msra.mxu0 0.0
        %1071 = vmatprep.subr.mxu0 0.0
        %1072 = vmatpush1.msra.mxu0 0.0
        %1073 = vmatprep.subr.mxu0 0.0
        %1074 = vmatpush1.msra.mxu0 0.0
        %1075 = vmatprep.subr.mxu0 0.0
        %1076 = vmatpush1.msra.mxu0 0.0
        %1077 = vmatprep.subr.mxu0 0.0
        %1078 = vmatpush1.msra.mxu0 0.0
        %1079 = vmatprep.subr.mxu0 0.0
        %1080 = vmatpush1.msra.mxu0 0.0
        %1081 = vmatprep.subr.mxu0 0.0
        %1082 = vmatpush1.msra.mxu0 0.0
        %1083 = vmatprep.subr.mxu0 0.0
        %1084 = vmatpush1.msra.mxu0 0.0
        %1085 = vmatprep.subr.mxu0 0.0
        %1086 = vmatpush1.msra.mxu0 0.0
        %1087 = vmatprep.subr.mxu0 0.0
        %1088 = vmatpush1.msra.mxu0 0.0
        %1089 = vmatprep.subr.mxu0 0.0
        %1090 = vmatpush1.msra.mxu0 0.0
        %1091 = vmatprep.subr.mxu0 0.0
        %1092 = vmatpush1.msra.mxu0 0.0
        %1093 = vmatprep.subr.mxu0 0.0
        %1094 = vmatpush1.msra.mxu0 0.0
        %1095 = vmatprep.subr.mxu0 0.0
        %1096 = vmatpush1.msra.mxu0 0.0
        %1097 = vmatprep.subr.mxu0 0.0
        %1098 = vmatpush1.msra.mxu0 0.0
        %1099 = vmatprep.subr.mxu0 0.0
        %1100 = vmatpush1.msra.mxu0 0.0
        %1101 = vmatprep.subr.mxu0 0.0
        %1102 = vmatpush1.msra.mxu0 0.0
        %1103 = vmatprep.subr.mxu0 0.0
        %1104 = vmatpush1.msra.mxu0 0.0
        %1105 = vmatprep.subr.mxu0 0.0
        %1106 = vmatpush1.msra.mxu0 0.0
        %1107 = vmatprep.subr.mxu0 0.0
        %1108 = vmatpush1.msra.mxu0 0.0
        %1109 = vmatprep.subr.mxu0 0.0
        %1110 = vmatpush1.msra.mxu0 0.0
        %1111 = vmatprep.subr.mxu0 0.0
        %1112 = vmatpush1.msra.mxu0 0.0
        %1113 = vmatprep.subr.mxu0 0.0
        %1114 = vmatpush1.msra.mxu0 0.0
        %1115 = vmatprep.subr.mxu0 0.0
        %1116 = vmatpush1.msra.mxu0 0.0
        %1117 = vmatprep.mubr.f32.mxu0 0.0
        %1118 = vmatmul.mubr.f32.gmra.mrb[0].mxu0 %v1048
        %v1119 = vpop.f32.mrb[0].mxu0
        %v1120 = vadd.f32 %v1039, %v1119
        %v1121 = vpop.f32.mrb[0].mxu0
        %1122 = vmatprep.mubr.f32.mxu0 0.0
        %1123 = vmatmul.mubr.f32.gmra.mrb[0].mxu0 %v1051
        %v1124 = vpop.f32.mrb[0].mxu0
        %v1125 = vadd.f32 %v1044, %v1124
        %v1126 = vpop.f32.mrb[0].mxu0
        %1127 = vdwg.mxu0
        %s1128 = scalar_lea.vmem %s2, 32
        %v1129 = vld [vmem:[%s1128] sm:$0xff]
        %v1130 = vld [vmem:[%s1128 + $0x8] sm:$0xff]
        %v1132 = vsel %vm363, %v953, 0
        %v1135 = vsel %vm363, %v958, 0
        %1137 = vmatprep.subr.mxu0 0.0
        %1138 = vmatpush1.msra.mxu0 %v1129
        %1139 = vmatprep.subr.mxu0 0.0
        %1140 = vmatpush1.msra.mxu0 %v1130
        %1141 = vmatprep.subr.mxu0 0.0
        %1142 = vmatpush1.msra.mxu0 0.0
        %1143 = vmatprep.subr.mxu0 0.0
        %1144 = vmatpush1.msra.mxu0 0.0
        %1145 = vmatprep.subr.mxu0 0.0
        %1146 = vmatpush1.msra.mxu0 0.0
        %1147 = vmatprep.subr.mxu0 0.0
        %1148 = vmatpush1.msra.mxu0 0.0
        %1149 = vmatprep.subr.mxu0 0.0
        %1150 = vmatpush1.msra.mxu0 0.0
        %1151 = vmatprep.subr.mxu0 0.0
        %1152 = vmatpush1.msra.mxu0 0.0
        %1153 = vmatprep.subr.mxu0 0.0
        %1154 = vmatpush1.msra.mxu0 0.0
        %1155 = vmatprep.subr.mxu0 0.0
        %1156 = vmatpush1.msra.mxu0 0.0
        %1157 = vmatprep.subr.mxu0 0.0
        %1158 = vmatpush1.msra.mxu0 0.0
        %1159 = vmatprep.subr.mxu0 0.0
        %1160 = vmatpush1.msra.mxu0 0.0
        %1161 = vmatprep.subr.mxu0 0.0
        %1162 = vmatpush1.msra.mxu0 0.0
        %1163 = vmatprep.subr.mxu0 0.0
        %1164 = vmatpush1.msra.mxu0 0.0
        %1165 = vmatprep.subr.mxu0 0.0
        %1166 = vmatpush1.msra.mxu0 0.0
        %1167 = vmatprep.subr.mxu0 0.0
        %1168 = vmatpush1.msra.mxu0 0.0
        %1169 = vmatprep.subr.mxu0 0.0
        %1170 = vmatpush1.msra.mxu0 0.0
        %1171 = vmatprep.subr.mxu0 0.0
        %1172 = vmatpush1.msra.mxu0 0.0
        %1173 = vmatprep.subr.mxu0 0.0
        %1174 = vmatpush1.msra.mxu0 0.0
        %1175 = vmatprep.subr.mxu0 0.0
        %1176 = vmatpush1.msra.mxu0 0.0
        %1177 = vmatprep.subr.mxu0 0.0
        %1178 = vmatpush1.msra.mxu0 0.0
        %1179 = vmatprep.subr.mxu0 0.0
        %1180 = vmatpush1.msra.mxu0 0.0
        %1181 = vmatprep.subr.mxu0 0.0
        %1182 = vmatpush1.msra.mxu0 0.0
        %1183 = vmatprep.subr.mxu0 0.0
        %1184 = vmatpush1.msra.mxu0 0.0
        %1185 = vmatprep.subr.mxu0 0.0
        %1186 = vmatpush1.msra.mxu0 0.0
        %1187 = vmatprep.subr.mxu0 0.0
        %1188 = vmatpush1.msra.mxu0 0.0
        %1189 = vmatprep.subr.mxu0 0.0
        %1190 = vmatpush1.msra.mxu0 0.0
        %1191 = vmatprep.subr.mxu0 0.0
        %1192 = vmatpush1.msra.mxu0 0.0
        %1193 = vmatprep.subr.mxu0 0.0
        %1194 = vmatpush1.msra.mxu0 0.0
        %1195 = vmatprep.subr.mxu0 0.0
        %1196 = vmatpush1.msra.mxu0 0.0
        %1197 = vmatprep.subr.mxu0 0.0
        %1198 = vmatpush1.msra.mxu0 0.0
        %1199 = vmatprep.subr.mxu0 0.0
        %1200 = vmatpush1.msra.mxu0 0.0
        %1201 = vmatprep.mubr.f32.mxu0 0.0
        %1202 = vmatmul.mubr.f32.gmra.mrb[0].mxu0 %v1132
        %v1203 = vpop.f32.mrb[0].mxu0
        %v1204 = vadd.f32 0.0, %v1203
        %v1205 = vpop.f32.mrb[0].mxu0
        %1206 = vmatprep.mubr.f32.mxu0 0.0
        %1207 = vmatmul.mubr.f32.gmra.mrb[0].mxu0 %v1135
        %v1208 = vpop.f32.mrb[0].mxu0
        %v1209 = vadd.f32 0.0, %v1208
        %v1210 = vpop.f32.mrb[0].mxu0
        %1211 = vdwg.mxu0
        %v1212 = vadd.f32 %v1120, %v1204
        %v1213 = vadd.f32 %v1125, %v1209
        %1216 = vrot.lane.b32.xlu0 %v1212, 112
        %v1217 = vpop.permute.xlu0 %1216
        %1218 = vrot.lane.b32.xlu0 %v1213, 112
        %v1219 = vpop.permute.xlu0 %1218
        %v1222 = vmax.f32 %v1212, %v1217
        %v1223 = vmax.f32 %v1213, %v1219
        %1224 = vrot.lane.b32.xlu0 %v1212, 96
        %v1225 = vpop.permute.xlu0 %1224
        %1226 = vrot.lane.b32.xlu0 %v1213, 96
        %v1227 = vpop.permute.xlu0 %1226
        %v1230 = vmax.f32 %v1222, %v1225
        %v1231 = vmax.f32 %v1223, %v1227
        %1232 = vrot.lane.b32.xlu0 %v1212, 80
        %v1233 = vpop.permute.xlu0 %1232
        %1234 = vrot.lane.b32.xlu0 %v1213, 80
        %v1235 = vpop.permute.xlu0 %1234
        %v1238 = vmax.f32 %v1230, %v1233
        %v1239 = vmax.f32 %v1231, %v1235
        %1240 = vrot.lane.b32.xlu0 %v1212, 64
        %v1241 = vpop.permute.xlu0 %1240
        %1242 = vrot.lane.b32.xlu0 %v1213, 64
        %v1243 = vpop.permute.xlu0 %1242
        %v1246 = vmax.f32 %v1238, %v1241
        %v1247 = vmax.f32 %v1239, %v1243
        %1248 = vrot.lane.b32.xlu0 %v1212, 48
        %v1249 = vpop.permute.xlu0 %1248
        %1250 = vrot.lane.b32.xlu0 %v1213, 48
        %v1251 = vpop.permute.xlu0 %1250
        %v1254 = vmax.f32 %v1246, %v1249
        %v1255 = vmax.f32 %v1247, %v1251
        %1256 = vrot.lane.b32.xlu0 %v1212, 32
        %v1257 = vpop.permute.xlu0 %1256
        %1258 = vrot.lane.b32.xlu0 %v1213, 32
        %v1259 = vpop.permute.xlu0 %1258
        %v1262 = vmax.f32 %v1254, %v1257
        %v1263 = vmax.f32 %v1255, %v1259
        %1264 = vrot.lane.b32.xlu0 %v1212, 16
        %v1265 = vpop.permute.xlu0 %1264
        %1266 = vrot.lane.b32.xlu0 %v1213, 16
        %v1267 = vpop.permute.xlu0 %1266
        %v1270 = vmax.f32 %v1262, %v1265
        %v1271 = vmax.f32 %v1263, %v1267
        %1272 = vmatprep.subr.mxu0 0.0
        %1273 = vmatpush1.msra.mxu0 %v1270
        %1274 = vmatprep.subr.mxu0 0.0
        %1275 = vmatpush1.msra.mxu0 %v1271
        %1276 = vmatprep.subr.mxu0 0.0
        %1277 = vmatpush1.msra.mxu0 0.0
        %1278 = vmatprep.subr.mxu0 0.0
        %1279 = vmatpush1.msra.mxu0 0.0
        %1280 = vmatprep.subr.mxu0 0.0
        %1281 = vmatpush1.msra.mxu0 0.0
        %1282 = vmatprep.subr.mxu0 0.0
        %1283 = vmatpush1.msra.mxu0 0.0
        %1284 = vmatprep.subr.mxu0 0.0
        %1285 = vmatpush1.msra.mxu0 0.0
        %1286 = vmatprep.subr.mxu0 0.0
        %1287 = vmatpush1.msra.mxu0 0.0
        %1288 = vmatprep.subr.mxu0 0.0
        %1289 = vmatpush1.msra.mxu0 0.0
        %1290 = vmatprep.subr.mxu0 0.0
        %1291 = vmatpush1.msra.mxu0 0.0
        %1292 = vmatprep.subr.mxu0 0.0
        %1293 = vmatpush1.msra.mxu0 0.0
        %1294 = vmatprep.subr.mxu0 0.0
        %1295 = vmatpush1.msra.mxu0 0.0
        %1296 = vmatprep.subr.mxu0 0.0
        %1297 = vmatpush1.msra.mxu0 0.0
        %1298 = vmatprep.subr.mxu0 0.0
        %1299 = vmatpush1.msra.mxu0 0.0
        %1300 = vmatprep.subr.mxu0 0.0
        %1301 = vmatpush1.msra.mxu0 0.0
        %1302 = vmatprep.subr.mxu0 0.0
        %1303 = vmatpush1.msra.mxu0 0.0
        %1304 = vmatprep.subr.mxu0 0.0
        %1305 = vmatpush1.msra.mxu0 0.0
        %1306 = vmatprep.subr.mxu0 0.0
        %1307 = vmatpush1.msra.mxu0 0.0
        %1308 = vmatprep.subr.mxu0 0.0
        %1309 = vmatpush1.msra.mxu0 0.0
        %1310 = vmatprep.subr.mxu0 0.0
        %1311 = vmatpush1.msra.mxu0 0.0
        %1312 = vmatprep.subr.mxu0 0.0
        %1313 = vmatpush1.msra.mxu0 0.0
        %1314 = vmatprep.subr.mxu0 0.0
        %1315 = vmatpush1.msra.mxu0 0.0
        %1316 = vmatprep.subr.mxu0 0.0
        %1317 = vmatpush1.msra.mxu0 0.0
        %1318 = vmatprep.subr.mxu0 0.0
        %1319 = vmatpush1.msra.mxu0 0.0
        %1320 = vmatprep.subr.mxu0 0.0
        %1321 = vmatpush1.msra.mxu0 0.0
        %1322 = vmatprep.subr.mxu0 0.0
        %1323 = vmatpush1.msra.mxu0 0.0
        %1324 = vmatprep.subr.mxu0 0.0
        %1325 = vmatpush1.msra.mxu0 0.0
        %1326 = vmatprep.subr.mxu0 0.0
        %1327 = vmatpush1.msra.mxu0 0.0
        %1328 = vmatprep.subr.mxu0 0.0
        %1329 = vmatpush1.msra.mxu0 0.0
        %1330 = vmatprep.subr.mxu0 0.0
        %1331 = vmatpush1.msra.mxu0 0.0
        %1332 = vmatprep.subr.mxu0 0.0
        %1333 = vmatpush1.msra.mxu0 0.0
        %1334 = vmatprep.subr.mxu0 0.0
        %1335 = vmatpush1.msra.mxu0 0.0
        %1336 = vmatprep.mubr.f32.mxu0 0.0
        %1337 = vmatmul.mubr.f32.gmra.mrb[0].mxu0 %v365
        %v1338 = vpop.f32.mrb[0].mxu0
        %v1339 = vadd.f32 0.0, %v1338
        %v1340 = vpop.f32.mrb[0].mxu0
        %1341 = vmatprep.mubr.f32.mxu0 0.0
        %1342 = vmatmul.mubr.f32.gmra.mrb[0].mxu0 %v368
        %v1343 = vpop.f32.mrb[0].mxu0
        %v1344 = vadd.f32 0.0, %v1343
        %v1345 = vpop.f32.mrb[0].mxu0
        %1346 = vdwg.mxu0
        %1347 = vmatprep.subr.mxu0 0.0
        %1348 = vmatpush1.msra.mxu0 %v1270
        %1349 = vmatprep.subr.mxu0 0.0
        %1350 = vmatpush1.msra.mxu0 %v1271
        %1351 = vmatprep.subr.mxu0 0.0
        %1352 = vmatpush1.msra.mxu0 0.0
        %1353 = vmatprep.subr.mxu0 0.0
        %1354 = vmatpush1.msra.mxu0 0.0
        %1355 = vmatprep.subr.mxu0 0.0
        %1356 = vmatpush1.msra.mxu0 0.0
        %1357 = vmatprep.subr.mxu0 0.0
        %1358 = vmatpush1.msra.mxu0 0.0
        %1359 = vmatprep.subr.mxu0 0.0
        %1360 = vmatpush1.msra.mxu0 0.0
        %1361 = vmatprep.subr.mxu0 0.0
        %1362 = vmatpush1.msra.mxu0 0.0
        %1363 = vmatprep.subr.mxu0 0.0
        %1364 = vmatpush1.msra.mxu0 0.0
        %1365 = vmatprep.subr.mxu0 0.0
        %1366 = vmatpush1.msra.mxu0 0.0
        %1367 = vmatprep.subr.mxu0 0.0
        %1368 = vmatpush1.msra.mxu0 0.0
        %1369 = vmatprep.subr.mxu0 0.0
        %1370 = vmatpush1.msra.mxu0 0.0
        %1371 = vmatprep.subr.mxu0 0.0
        %1372 = vmatpush1.msra.mxu0 0.0
        %1373 = vmatprep.subr.mxu0 0.0
        %1374 = vmatpush1.msra.mxu0 0.0
        %1375 = vmatprep.subr.mxu0 0.0
        %1376 = vmatpush1.msra.mxu0 0.0
        %1377 = vmatprep.subr.mxu0 0.0
        %1378 = vmatpush1.msra.mxu0 0.0
        %1379 = vmatprep.subr.mxu0 0.0
        %1380 = vmatpush1.msra.mxu0 0.0
        %1381 = vmatprep.subr.mxu0 0.0
        %1382 = vmatpush1.msra.mxu0 0.0
        %1383 = vmatprep.subr.mxu0 0.0
        %1384 = vmatpush1.msra.mxu0 0.0
        %1385 = vmatprep.subr.mxu0 0.0
        %1386 = vmatpush1.msra.mxu0 0.0
        %1387 = vmatprep.subr.mxu0 0.0
        %1388 = vmatpush1.msra.mxu0 0.0
        %1389 = vmatprep.subr.mxu0 0.0
        %1390 = vmatpush1.msra.mxu0 0.0
        %1391 = vmatprep.subr.mxu0 0.0
        %1392 = vmatpush1.msra.mxu0 0.0
        %1393 = vmatprep.subr.mxu0 0.0
        %1394 = vmatpush1.msra.mxu0 0.0
        %1395 = vmatprep.subr.mxu0 0.0
        %1396 = vmatpush1.msra.mxu0 0.0
        %1397 = vmatprep.subr.mxu0 0.0
        %1398 = vmatpush1.msra.mxu0 0.0
        %1399 = vmatprep.subr.mxu0 0.0
        %1400 = vmatpush1.msra.mxu0 0.0
        %1401 = vmatprep.subr.mxu0 0.0
        %1402 = vmatpush1.msra.mxu0 0.0
        %1403 = vmatprep.subr.mxu0 0.0
        %1404 = vmatpush1.msra.mxu0 0.0
        %1405 = vmatprep.subr.mxu0 0.0
        %1406 = vmatpush1.msra.mxu0 0.0
        %1407 = vmatprep.subr.mxu0 0.0
        %1408 = vmatpush1.msra.mxu0 0.0
        %1409 = vmatprep.subr.mxu0 0.0
        %1410 = vmatpush1.msra.mxu0 0.0
        %1411 = vmatprep.mubr.f32.mxu0 0.0
        %1412 = vmatmul.mubr.f32.gmra.mrb[0].mxu0 %v446
        %v1413 = vpop.f32.mrb[0].mxu0
        %v1414 = vadd.f32 0.0, %v1413
        %v1415 = vpop.f32.mrb[0].mxu0
        %1416 = vmatprep.mubr.f32.mxu0 0.0
        %1417 = vmatmul.mubr.f32.gmra.mrb[0].mxu0 %v449
        %v1418 = vpop.f32.mrb[0].mxu0
        %v1419 = vadd.f32 0.0, %v1418
        %v1420 = vpop.f32.mrb[0].mxu0
        %1421 = vdwg.mxu0
        %v1422 = vld [vmem:[%s3] sm:$0xff]
        %v1423 = vld [vmem:[%s3 + $0x8] sm:$0xff]
        %s1424 = scalar_lea.vmem %s3, 16
        %v1425 = vld [vmem:[%s1424] sm:$0xff]
        %v1426 = vld [vmem:[%s1424 + $0x8] sm:$0xff]
        %v1428 = vsel %vm363, %v1270, 0
        %v1431 = vsel %vm363, %v1271, 0
        %1433 = vmatprep.subr.mxu0 0.0
        %1434 = vmatpush1.msra.mxu0 %v1425
        %1435 = vmatprep.subr.mxu0 0.0
        %1436 = vmatpush1.msra.mxu0 %v1426
        %1437 = vmatprep.subr.mxu0 0.0
        %1438 = vmatpush1.msra.mxu0 0.0
        %1439 = vmatprep.subr.mxu0 0.0
        %1440 = vmatpush1.msra.mxu0 0.0
        %1441 = vmatprep.subr.mxu0 0.0
        %1442 = vmatpush1.msra.mxu0 0.0
        %1443 = vmatprep.subr.mxu0 0.0
        %1444 = vmatpush1.msra.mxu0 0.0
        %1445 = vmatprep.subr.mxu0 0.0
        %1446 = vmatpush1.msra.mxu0 0.0
        %1447 = vmatprep.subr.mxu0 0.0
        %1448 = vmatpush1.msra.mxu0 0.0
        %1449 = vmatprep.subr.mxu0 0.0
        %1450 = vmatpush1.msra.mxu0 0.0
        %1451 = vmatprep.subr.mxu0 0.0
        %1452 = vmatpush1.msra.mxu0 0.0
        %1453 = vmatprep.subr.mxu0 0.0
        %1454 = vmatpush1.msra.mxu0 0.0
        %1455 = vmatprep.subr.mxu0 0.0
        %1456 = vmatpush1.msra.mxu0 0.0
        %1457 = vmatprep.subr.mxu0 0.0
        %1458 = vmatpush1.msra.mxu0 0.0
        %1459 = vmatprep.subr.mxu0 0.0
        %1460 = vmatpush1.msra.mxu0 0.0
        %1461 = vmatprep.subr.mxu0 0.0
        %1462 = vmatpush1.msra.mxu0 0.0
        %1463 = vmatprep.subr.mxu0 0.0
        %1464 = vmatpush1.msra.mxu0 0.0
        %1465 = vmatprep.subr.mxu0 0.0
        %1466 = vmatpush1.msra.mxu0 0.0
        %1467 = vmatprep.subr.mxu0 0.0
        %1468 = vmatpush1.msra.mxu0 0.0
        %1469 = vmatprep.subr.mxu0 0.0
        %1470 = vmatpush1.msra.mxu0 0.0
        %1471 = vmatprep.subr.mxu0 0.0
        %1472 = vmatpush1.msra.mxu0 0.0
        %1473 = vmatprep.subr.mxu0 0.0
        %1474 = vmatpush1.msra.mxu0 0.0
        %1475 = vmatprep.subr.mxu0 0.0
        %1476 = vmatpush1.msra.mxu0 0.0
        %1477 = vmatprep.subr.mxu0 0.0
        %1478 = vmatpush1.msra.mxu0 0.0
        %1479 = vmatprep.subr.mxu0 0.0
        %1480 = vmatpush1.msra.mxu0 0.0
        %1481 = vmatprep.subr.mxu0 0.0
        %1482 = vmatpush1.msra.mxu0 0.0
        %1483 = vmatprep.subr.mxu0 0.0
        %1484 = vmatpush1.msra.mxu0 0.0
        %1485 = vmatprep.subr.mxu0 0.0
        %1486 = vmatpush1.msra.mxu0 0.0
        %1487 = vmatprep.subr.mxu0 0.0
        %1488 = vmatpush1.msra.mxu0 0.0
        %1489 = vmatprep.subr.mxu0 0.0
        %1490 = vmatpush1.msra.mxu0 0.0
        %1491 = vmatprep.subr.mxu0 0.0
        %1492 = vmatpush1.msra.mxu0 0.0
        %1493 = vmatprep.subr.mxu0 0.0
        %1494 = vmatpush1.msra.mxu0 0.0
        %1495 = vmatprep.subr.mxu0 0.0
        %1496 = vmatpush1.msra.mxu0 0.0
        %1497 = vmatprep.mubr.f32.mxu0 0.0
        %1498 = vmatmul.mubr.f32.gmra.mrb[0].mxu0 %v1428
        %v1499 = vpop.f32.mrb[0].mxu0
        %v1500 = vadd.f32 0.0, %v1499
        %v1501 = vpop.f32.mrb[0].mxu0
        %1502 = vmatprep.mubr.f32.mxu0 0.0
        %1503 = vmatmul.mubr.f32.gmra.mrb[0].mxu0 %v1431
        %v1504 = vpop.f32.mrb[0].mxu0
        %v1505 = vadd.f32 0.0, %v1504
        %v1506 = vpop.f32.mrb[0].mxu0
        %1507 = vdwg.mxu0
        %v1509 = vsel %vm363, %v1339, 0
        %v1512 = vsel %vm363, %v1344, 0
        %1514 = vmatprep.subr.mxu0 0.0
        %1515 = vmatpush1.msra.mxu0 %v1422
        %1516 = vmatprep.subr.mxu0 0.0
        %1517 = vmatpush1.msra.mxu0 %v1423
        %1518 = vmatprep.subr.mxu0 0.0
        %1519 = vmatpush1.msra.mxu0 0.0
        %1520 = vmatprep.subr.mxu0 0.0
        %1521 = vmatpush1.msra.mxu0 0.0
        %1522 = vmatprep.subr.mxu0 0.0
        %1523 = vmatpush1.msra.mxu0 0.0
        %1524 = vmatprep.subr.mxu0 0.0
        %1525 = vmatpush1.msra.mxu0 0.0
        %1526 = vmatprep.subr.mxu0 0.0
        %1527 = vmatpush1.msra.mxu0 0.0
        %1528 = vmatprep.subr.mxu0 0.0
        %1529 = vmatpush1.msra.mxu0 0.0
        %1530 = vmatprep.subr.mxu0 0.0
        %1531 = vmatpush1.msra.mxu0 0.0
        %1532 = vmatprep.subr.mxu0 0.0
        %1533 = vmatpush1.msra.mxu0 0.0
        %1534 = vmatprep.subr.mxu0 0.0
        %1535 = vmatpush1.msra.mxu0 0.0
        %1536 = vmatprep.subr.mxu0 0.0
        %1537 = vmatpush1.msra.mxu0 0.0
        %1538 = vmatprep.subr.mxu0 0.0
        %1539 = vmatpush1.msra.mxu0 0.0
        %1540 = vmatprep.subr.mxu0 0.0
        %1541 = vmatpush1.msra.mxu0 0.0
        %1542 = vmatprep.subr.mxu0 0.0
        %1543 = vmatpush1.msra.mxu0 0.0
        %1544 = vmatprep.subr.mxu0 0.0
        %1545 = vmatpush1.msra.mxu0 0.0
        %1546 = vmatprep.subr.mxu0 0.0
        %1547 = vmatpush1.msra.mxu0 0.0
        %1548 = vmatprep.subr.mxu0 0.0
        %1549 = vmatpush1.msra.mxu0 0.0
        %1550 = vmatprep.subr.mxu0 0.0
        %1551 = vmatpush1.msra.mxu0 0.0
        %1552 = vmatprep.subr.mxu0 0.0
        %1553 = vmatpush1.msra.mxu0 0.0
        %1554 = vmatprep.subr.mxu0 0.0
        %1555 = vmatpush1.msra.mxu0 0.0
        %1556 = vmatprep.subr.mxu0 0.0
        %1557 = vmatpush1.msra.mxu0 0.0
        %1558 = vmatprep.subr.mxu0 0.0
        %1559 = vmatpush1.msra.mxu0 0.0
        %1560 = vmatprep.subr.mxu0 0.0
        %1561 = vmatpush1.msra.mxu0 0.0
        %1562 = vmatprep.subr.mxu0 0.0
        %1563 = vmatpush1.msra.mxu0 0.0
        %1564 = vmatprep.subr.mxu0 0.0
        %1565 = vmatpush1.msra.mxu0 0.0
        %1566 = vmatprep.subr.mxu0 0.0
        %1567 = vmatpush1.msra.mxu0 0.0
        %1568 = vmatprep.subr.mxu0 0.0
        %1569 = vmatpush1.msra.mxu0 0.0
        %1570 = vmatprep.subr.mxu0 0.0
        %1571 = vmatpush1.msra.mxu0 0.0
        %1572 = vmatprep.subr.mxu0 0.0
        %1573 = vmatpush1.msra.mxu0 0.0
        %1574 = vmatprep.subr.mxu0 0.0
        %1575 = vmatpush1.msra.mxu0 0.0
        %1576 = vmatprep.subr.mxu0 0.0
        %1577 = vmatpush1.msra.mxu0 0.0
        %1578 = vmatprep.mubr.f32.mxu0 0.0
        %1579 = vmatmul.mubr.f32.gmra.mrb[0].mxu0 %v1509
        %v1580 = vpop.f32.mrb[0].mxu0
        %v1581 = vadd.f32 %v1500, %v1580
        %v1582 = vpop.f32.mrb[0].mxu0
        %1583 = vmatprep.mubr.f32.mxu0 0.0
        %1584 = vmatmul.mubr.f32.gmra.mrb[0].mxu0 %v1512
        %v1585 = vpop.f32.mrb[0].mxu0
        %v1586 = vadd.f32 %v1505, %v1585
        %v1587 = vpop.f32.mrb[0].mxu0
        %1588 = vdwg.mxu0
        %s1589 = scalar_lea.vmem %s3, 32
        %v1590 = vld [vmem:[%s1589] sm:$0xff]
        %v1591 = vld [vmem:[%s1589 + $0x8] sm:$0xff]
        %v1593 = vsel %vm363, %v1414, 0
        %v1596 = vsel %vm363, %v1419, 0
        %1598 = vmatprep.subr.mxu0 0.0
        %1599 = vmatpush1.msra.mxu0 %v1590
        %1600 = vmatprep.subr.mxu0 0.0
        %1601 = vmatpush1.msra.mxu0 %v1591
        %1602 = vmatprep.subr.mxu0 0.0
        %1603 = vmatpush1.msra.mxu0 0.0
        %1604 = vmatprep.subr.mxu0 0.0
        %1605 = vmatpush1.msra.mxu0 0.0
        %1606 = vmatprep.subr.mxu0 0.0
        %1607 = vmatpush1.msra.mxu0 0.0
        %1608 = vmatprep.subr.mxu0 0.0
        %1609 = vmatpush1.msra.mxu0 0.0
        %1610 = vmatprep.subr.mxu0 0.0
        %1611 = vmatpush1.msra.mxu0 0.0
        %1612 = vmatprep.subr.mxu0 0.0
        %1613 = vmatpush1.msra.mxu0 0.0
        %1614 = vmatprep.subr.mxu0 0.0
        %1615 = vmatpush1.msra.mxu0 0.0
        %1616 = vmatprep.subr.mxu0 0.0
        %1617 = vmatpush1.msra.mxu0 0.0
        %1618 = vmatprep.subr.mxu0 0.0
        %1619 = vmatpush1.msra.mxu0 0.0
        %1620 = vmatprep.subr.mxu0 0.0
        %1621 = vmatpush1.msra.mxu0 0.0
        %1622 = vmatprep.subr.mxu0 0.0
        %1623 = vmatpush1.msra.mxu0 0.0
        %1624 = vmatprep.subr.mxu0 0.0
        %1625 = vmatpush1.msra.mxu0 0.0
        %1626 = vmatprep.subr.mxu0 0.0
        %1627 = vmatpush1.msra.mxu0 0.0
        %1628 = vmatprep.subr.mxu0 0.0
        %1629 = vmatpush1.msra.mxu0 0.0
        %1630 = vmatprep.subr.mxu0 0.0
        %1631 = vmatpush1.msra.mxu0 0.0
        %1632 = vmatprep.subr.mxu0 0.0
        %1633 = vmatpush1.msra.mxu0 0.0
        %1634 = vmatprep.subr.mxu0 0.0
        %1635 = vmatpush1.msra.mxu0 0.0
        %1636 = vmatprep.subr.mxu0 0.0
        %1637 = vmatpush1.msra.mxu0 0.0
        %1638 = vmatprep.subr.mxu0 0.0
        %1639 = vmatpush1.msra.mxu0 0.0
        %1640 = vmatprep.subr.mxu0 0.0
        %1641 = vmatpush1.msra.mxu0 0.0
        %1642 = vmatprep.subr.mxu0 0.0
        %1643 = vmatpush1.msra.mxu0 0.0
        %1644 = vmatprep.subr.mxu0 0.0
        %1645 = vmatpush1.msra.mxu0 0.0
        %1646 = vmatprep.subr.mxu0 0.0
        %1647 = vmatpush1.msra.mxu0 0.0
        %1648 = vmatprep.subr.mxu0 0.0
        %1649 = vmatpush1.msra.mxu0 0.0
        %1650 = vmatprep.subr.mxu0 0.0
        %1651 = vmatpush1.msra.mxu0 0.0
        %1652 = vmatprep.subr.mxu0 0.0
        %1653 = vmatpush1.msra.mxu0 0.0
        %1654 = vmatprep.subr.mxu0 0.0
        %1655 = vmatpush1.msra.mxu0 0.0
        %1656 = vmatprep.subr.mxu0 0.0
        %1657 = vmatpush1.msra.mxu0 0.0
        %1658 = vmatprep.subr.mxu0 0.0
        %1659 = vmatpush1.msra.mxu0 0.0
        %1660 = vmatprep.subr.mxu0 0.0
        %1661 = vmatpush1.msra.mxu0 0.0
        %1662 = vmatprep.mubr.f32.mxu0 0.0
        %1663 = vmatmul.mubr.f32.gmra.mrb[0].mxu0 %v1593
        %v1664 = vpop.f32.mrb[0].mxu0
        %v1665 = vadd.f32 0.0, %v1664
        %v1666 = vpop.f32.mrb[0].mxu0
        %1667 = vmatprep.mubr.f32.mxu0 0.0
        %1668 = vmatmul.mubr.f32.gmra.mrb[0].mxu0 %v1596
        %v1669 = vpop.f32.mrb[0].mxu0
        %v1670 = vadd.f32 0.0, %v1669
        %v1671 = vpop.f32.mrb[0].mxu0
        %1672 = vdwg.mxu0
        %v1673 = vadd.f32 %v1581, %v1665
        %v1674 = vadd.f32 %v1586, %v1670
        %v1675 = vadd.f32 %v1212, %v1673
        %v1676 = vadd.f32 %v1213, %v1674
        %1679 = vrot.lane.b32.xlu0 %v1675, 112
        %v1680 = vpop.permute.xlu0 %1679
        %1681 = vrot.lane.b32.xlu0 %v1676, 112
        %v1682 = vpop.permute.xlu0 %1681
        %v1685 = vmax.f32 %v1675, %v1680
        %v1686 = vmax.f32 %v1676, %v1682
        %1687 = vrot.lane.b32.xlu0 %v1675, 96
        %v1688 = vpop.permute.xlu0 %1687
        %1689 = vrot.lane.b32.xlu0 %v1676, 96
        %v1690 = vpop.permute.xlu0 %1689
        %v1693 = vmax.f32 %v1685, %v1688
        %v1694 = vmax.f32 %v1686, %v1690
        %1695 = vrot.lane.b32.xlu0 %v1675, 80
        %v1696 = vpop.permute.xlu0 %1695
        %1697 = vrot.lane.b32.xlu0 %v1676, 80
        %v1698 = vpop.permute.xlu0 %1697
        %v1701 = vmax.f32 %v1693, %v1696
        %v1702 = vmax.f32 %v1694, %v1698
        %1703 = vrot.lane.b32.xlu0 %v1675, 64
        %v1704 = vpop.permute.xlu0 %1703
        %1705 = vrot.lane.b32.xlu0 %v1676, 64
        %v1706 = vpop.permute.xlu0 %1705
        %v1709 = vmax.f32 %v1701, %v1704
        %v1710 = vmax.f32 %v1702, %v1706
        %1711 = vrot.lane.b32.xlu0 %v1675, 48
        %v1712 = vpop.permute.xlu0 %1711
        %1713 = vrot.lane.b32.xlu0 %v1676, 48
        %v1714 = vpop.permute.xlu0 %1713
        %v1717 = vmax.f32 %v1709, %v1712
        %v1718 = vmax.f32 %v1710, %v1714
        %1719 = vrot.lane.b32.xlu0 %v1675, 32
        %v1720 = vpop.permute.xlu0 %1719
        %1721 = vrot.lane.b32.xlu0 %v1676, 32
        %v1722 = vpop.permute.xlu0 %1721
        %v1725 = vmax.f32 %v1717, %v1720
        %v1726 = vmax.f32 %v1718, %v1722
        %1727 = vrot.lane.b32.xlu0 %v1675, 16
        %v1728 = vpop.permute.xlu0 %1727
        %1729 = vrot.lane.b32.xlu0 %v1676, 16
        %v1730 = vpop.permute.xlu0 %1729
        %v1733 = vmax.f32 %v1725, %v1728
        %v1734 = vmax.f32 %v1726, %v1730
        %1735 = vmatprep.subr.mxu0 0.0
        %1736 = vmatpush1.msra.mxu0 %v1733
        %1737 = vmatprep.subr.mxu0 0.0
        %1738 = vmatpush1.msra.mxu0 %v1734
        %1739 = vmatprep.subr.mxu0 0.0
        %1740 = vmatpush1.msra.mxu0 0.0
        %1741 = vmatprep.subr.mxu0 0.0
        %1742 = vmatpush1.msra.mxu0 0.0
        %1743 = vmatprep.subr.mxu0 0.0
        %1744 = vmatpush1.msra.mxu0 0.0
        %1745 = vmatprep.subr.mxu0 0.0
        %1746 = vmatpush1.msra.mxu0 0.0
        %1747 = vmatprep.subr.mxu0 0.0
        %1748 = vmatpush1.msra.mxu0 0.0
        %1749 = vmatprep.subr.mxu0 0.0
        %1750 = vmatpush1.msra.mxu0 0.0
        %1751 = vmatprep.subr.mxu0 0.0
        %1752 = vmatpush1.msra.mxu0 0.0
        %1753 = vmatprep.subr.mxu0 0.0
        %1754 = vmatpush1.msra.mxu0 0.0
        %1755 = vmatprep.subr.mxu0 0.0
        %1756 = vmatpush1.msra.mxu0 0.0
        %1757 = vmatprep.subr.mxu0 0.0
        %1758 = vmatpush1.msra.mxu0 0.0
        %1759 = vmatprep.subr.mxu0 0.0
        %1760 = vmatpush1.msra.mxu0 0.0
        %1761 = vmatprep.subr.mxu0 0.0
        %1762 = vmatpush1.msra.mxu0 0.0
        %1763 = vmatprep.subr.mxu0 0.0
        %1764 = vmatpush1.msra.mxu0 0.0
        %1765 = vmatprep.subr.mxu0 0.0
        %1766 = vmatpush1.msra.mxu0 0.0
        %1767 = vmatprep.subr.mxu0 0.0
        %1768 = vmatpush1.msra.mxu0 0.0
        %1769 = vmatprep.subr.mxu0 0.0
        %1770 = vmatpush1.msra.mxu0 0.0
        %1771 = vmatprep.subr.mxu0 0.0
        %1772 = vmatpush1.msra.mxu0 0.0
        %1773 = vmatprep.subr.mxu0 0.0
        %1774 = vmatpush1.msra.mxu0 0.0
        %1775 = vmatprep.subr.mxu0 0.0
        %1776 = vmatpush1.msra.mxu0 0.0
        %1777 = vmatprep.subr.mxu0 0.0
        %1778 = vmatpush1.msra.mxu0 0.0
        %1779 = vmatprep.subr.mxu0 0.0
        %1780 = vmatpush1.msra.mxu0 0.0
        %1781 = vmatprep.subr.mxu0 0.0
        %1782 = vmatpush1.msra.mxu0 0.0
        %1783 = vmatprep.subr.mxu0 0.0
        %1784 = vmatpush1.msra.mxu0 0.0
        %1785 = vmatprep.subr.mxu0 0.0
        %1786 = vmatpush1.msra.mxu0 0.0
        %1787 = vmatprep.subr.mxu0 0.0
        %1788 = vmatpush1.msra.mxu0 0.0
        %1789 = vmatprep.subr.mxu0 0.0
        %1790 = vmatpush1.msra.mxu0 0.0
        %1791 = vmatprep.subr.mxu0 0.0
        %1792 = vmatpush1.msra.mxu0 0.0
        %1793 = vmatprep.subr.mxu0 0.0
        %1794 = vmatpush1.msra.mxu0 0.0
        %1795 = vmatprep.subr.mxu0 0.0
        %1796 = vmatpush1.msra.mxu0 0.0
        %1797 = vmatprep.subr.mxu0 0.0
        %1798 = vmatpush1.msra.mxu0 0.0
        %1799 = vmatprep.mubr.f32.mxu0 0.0
        %1800 = vmatmul.mubr.f32.gmra.mrb[0].mxu0 %v365
        %v1801 = vpop.f32.mrb[0].mxu0
        %v1802 = vadd.f32 0.0, %v1801
        %v1803 = vpop.f32.mrb[0].mxu0
        %1804 = vmatprep.mubr.f32.mxu0 0.0
        %1805 = vmatmul.mubr.f32.gmra.mrb[0].mxu0 %v368
        %v1806 = vpop.f32.mrb[0].mxu0
        %v1807 = vadd.f32 0.0, %v1806
        %v1808 = vpop.f32.mrb[0].mxu0
        %1809 = vdwg.mxu0
        %1810 = vmatprep.subr.mxu0 0.0
        %1811 = vmatpush1.msra.mxu0 %v1733
        %1812 = vmatprep.subr.mxu0 0.0
        %1813 = vmatpush1.msra.mxu0 %v1734
        %1814 = vmatprep.subr.mxu0 0.0
        %1815 = vmatpush1.msra.mxu0 0.0
        %1816 = vmatprep.subr.mxu0 0.0
        %1817 = vmatpush1.msra.mxu0 0.0
        %1818 = vmatprep.subr.mxu0 0.0
        %1819 = vmatpush1.msra.mxu0 0.0
        %1820 = vmatprep.subr.mxu0 0.0
        %1821 = vmatpush1.msra.mxu0 0.0
        %1822 = vmatprep.subr.mxu0 0.0
        %1823 = vmatpush1.msra.mxu0 0.0
        %1824 = vmatprep.subr.mxu0 0.0
        %1825 = vmatpush1.msra.mxu0 0.0
        %1826 = vmatprep.subr.mxu0 0.0
        %1827 = vmatpush1.msra.mxu0 0.0
        %1828 = vmatprep.subr.mxu0 0.0
        %1829 = vmatpush1.msra.mxu0 0.0
        %1830 = vmatprep.subr.mxu0 0.0
        %1831 = vmatpush1.msra.mxu0 0.0
        %1832 = vmatprep.subr.mxu0 0.0
        %1833 = vmatpush1.msra.mxu0 0.0
        %1834 = vmatprep.subr.mxu0 0.0
        %1835 = vmatpush1.msra.mxu0 0.0
        %1836 = vmatprep.subr.mxu0 0.0
        %1837 = vmatpush1.msra.mxu0 0.0
        %1838 = vmatprep.subr.mxu0 0.0
        %1839 = vmatpush1.msra.mxu0 0.0
        %1840 = vmatprep.subr.mxu0 0.0
        %1841 = vmatpush1.msra.mxu0 0.0
        %1842 = vmatprep.subr.mxu0 0.0
        %1843 = vmatpush1.msra.mxu0 0.0
        %1844 = vmatprep.subr.mxu0 0.0
        %1845 = vmatpush1.msra.mxu0 0.0
        %1846 = vmatprep.subr.mxu0 0.0
        %1847 = vmatpush1.msra.mxu0 0.0
        %1848 = vmatprep.subr.mxu0 0.0
        %1849 = vmatpush1.msra.mxu0 0.0
        %1850 = vmatprep.subr.mxu0 0.0
        %1851 = vmatpush1.msra.mxu0 0.0
        %1852 = vmatprep.subr.mxu0 0.0
        %1853 = vmatpush1.msra.mxu0 0.0
        %1854 = vmatprep.subr.mxu0 0.0
        %1855 = vmatpush1.msra.mxu0 0.0
        %1856 = vmatprep.subr.mxu0 0.0
        %1857 = vmatpush1.msra.mxu0 0.0
        %1858 = vmatprep.subr.mxu0 0.0
        %1859 = vmatpush1.msra.mxu0 0.0
        %1860 = vmatprep.subr.mxu0 0.0
        %1861 = vmatpush1.msra.mxu0 0.0
        %1862 = vmatprep.subr.mxu0 0.0
        %1863 = vmatpush1.msra.mxu0 0.0
        %1864 = vmatprep.subr.mxu0 0.0
        %1865 = vmatpush1.msra.mxu0 0.0
        %1866 = vmatprep.subr.mxu0 0.0
        %1867 = vmatpush1.msra.mxu0 0.0
        %1868 = vmatprep.subr.mxu0 0.0
        %1869 = vmatpush1.msra.mxu0 0.0
        %1870 = vmatprep.subr.mxu0 0.0
        %1871 = vmatpush1.msra.mxu0 0.0
        %1872 = vmatprep.subr.mxu0 0.0
        %1873 = vmatpush1.msra.mxu0 0.0
        %1874 = vmatprep.mubr.f32.mxu0 0.0
        %1875 = vmatmul.mubr.f32.gmra.mrb[0].mxu0 %v446
        %v1876 = vpop.f32.mrb[0].mxu0
        %v1877 = vadd.f32 0.0, %v1876
        %v1878 = vpop.f32.mrb[0].mxu0
        %1879 = vmatprep.mubr.f32.mxu0 0.0
        %1880 = vmatmul.mubr.f32.gmra.mrb[0].mxu0 %v449
        %v1881 = vpop.f32.mrb[0].mxu0
        %v1882 = vadd.f32 0.0, %v1881
        %v1883 = vpop.f32.mrb[0].mxu0
        %1884 = vdwg.mxu0
        %v1886 = vsel %vm363, %v1733, 0
        %v1889 = vsel %vm363, %v1734, 0
        %1891 = vmatprep.subr.mxu0 0.0
        %1892 = vmatpush1.msra.mxu0 %v1425
        %1893 = vmatprep.subr.mxu0 0.0
        %1894 = vmatpush1.msra.mxu0 %v1426
        %1895 = vmatprep.subr.mxu0 0.0
        %1896 = vmatpush1.msra.mxu0 0.0
        %1897 = vmatprep.subr.mxu0 0.0
        %1898 = vmatpush1.msra.mxu0 0.0
        %1899 = vmatprep.subr.mxu0 0.0
        %1900 = vmatpush1.msra.mxu0 0.0
        %1901 = vmatprep.subr.mxu0 0.0
        %1902 = vmatpush1.msra.mxu0 0.0
        %1903 = vmatprep.subr.mxu0 0.0
        %1904 = vmatpush1.msra.mxu0 0.0
        %1905 = vmatprep.subr.mxu0 0.0
        %1906 = vmatpush1.msra.mxu0 0.0
        %1907 = vmatprep.subr.mxu0 0.0
        %1908 = vmatpush1.msra.mxu0 0.0
        %1909 = vmatprep.subr.mxu0 0.0
        %1910 = vmatpush1.msra.mxu0 0.0
        %1911 = vmatprep.subr.mxu0 0.0
        %1912 = vmatpush1.msra.mxu0 0.0
        %1913 = vmatprep.subr.mxu0 0.0
        %1914 = vmatpush1.msra.mxu0 0.0
        %1915 = vmatprep.subr.mxu0 0.0
        %1916 = vmatpush1.msra.mxu0 0.0
        %1917 = vmatprep.subr.mxu0 0.0
        %1918 = vmatpush1.msra.mxu0 0.0
        %1919 = vmatprep.subr.mxu0 0.0
        %1920 = vmatpush1.msra.mxu0 0.0
        %1921 = vmatprep.subr.mxu0 0.0
        %1922 = vmatpush1.msra.mxu0 0.0
        %1923 = vmatprep.subr.mxu0 0.0
        %1924 = vmatpush1.msra.mxu0 0.0
        %1925 = vmatprep.subr.mxu0 0.0
        %1926 = vmatpush1.msra.mxu0 0.0
        %1927 = vmatprep.subr.mxu0 0.0
        %1928 = vmatpush1.msra.mxu0 0.0
        %1929 = vmatprep.subr.mxu0 0.0
        %1930 = vmatpush1.msra.mxu0 0.0
        %1931 = vmatprep.subr.mxu0 0.0
        %1932 = vmatpush1.msra.mxu0 0.0
        %1933 = vmatprep.subr.mxu0 0.0
        %1934 = vmatpush1.msra.mxu0 0.0
        %1935 = vmatprep.subr.mxu0 0.0
        %1936 = vmatpush1.msra.mxu0 0.0
        %1937 = vmatprep.subr.mxu0 0.0
        %1938 = vmatpush1.msra.mxu0 0.0
        %1939 = vmatprep.subr.mxu0 0.0
        %1940 = vmatpush1.msra.mxu0 0.0
        %1941 = vmatprep.subr.mxu0 0.0
        %1942 = vmatpush1.msra.mxu0 0.0
        %1943 = vmatprep.subr.mxu0 0.0
        %1944 = vmatpush1.msra.mxu0 0.0
        %1945 = vmatprep.subr.mxu0 0.0
        %1946 = vmatpush1.msra.mxu0 0.0
        %1947 = vmatprep.subr.mxu0 0.0
        %1948 = vmatpush1.msra.mxu0 0.0
        %1949 = vmatprep.subr.mxu0 0.0
        %1950 = vmatpush1.msra.mxu0 0.0
        %1951 = vmatprep.subr.mxu0 0.0
        %1952 = vmatpush1.msra.mxu0 0.0
        %1953 = vmatprep.subr.mxu0 0.0
        %1954 = vmatpush1.msra.mxu0 0.0
        %1955 = vmatprep.mubr.f32.mxu0 0.0
        %1956 = vmatmul.mubr.f32.gmra.mrb[0].mxu0 %v1886
        %v1957 = vpop.f32.mrb[0].mxu0
        %v1958 = vadd.f32 0.0, %v1957
        %v1959 = vpop.f32.mrb[0].mxu0
        %1960 = vmatprep.mubr.f32.mxu0 0.0
        %1961 = vmatmul.mubr.f32.gmra.mrb[0].mxu0 %v1889
        %v1962 = vpop.f32.mrb[0].mxu0
        %v1963 = vadd.f32 0.0, %v1962
        %v1964 = vpop.f32.mrb[0].mxu0
        %1965 = vdwg.mxu0
        %v1967 = vsel %vm363, %v1802, 0
        %v1970 = vsel %vm363, %v1807, 0
        %1972 = vmatprep.subr.mxu0 0.0
        %1973 = vmatpush1.msra.mxu0 %v1422
        %1974 = vmatprep.subr.mxu0 0.0
        %1975 = vmatpush1.msra.mxu0 %v1423
        %1976 = vmatprep.subr.mxu0 0.0
        %1977 = vmatpush1.msra.mxu0 0.0
        %1978 = vmatprep.subr.mxu0 0.0
        %1979 = vmatpush1.msra.mxu0 0.0
        %1980 = vmatprep.subr.mxu0 0.0
        %1981 = vmatpush1.msra.mxu0 0.0
        %1982 = vmatprep.subr.mxu0 0.0
        %1983 = vmatpush1.msra.mxu0 0.0
        %1984 = vmatprep.subr.mxu0 0.0
        %1985 = vmatpush1.msra.mxu0 0.0
        %1986 = vmatprep.subr.mxu0 0.0
        %1987 = vmatpush1.msra.mxu0 0.0
        %1988 = vmatprep.subr.mxu0 0.0
        %1989 = vmatpush1.msra.mxu0 0.0
        %1990 = vmatprep.subr.mxu0 0.0
        %1991 = vmatpush1.msra.mxu0 0.0
        %1992 = vmatprep.subr.mxu0 0.0
        %1993 = vmatpush1.msra.mxu0 0.0
        %1994 = vmatprep.subr.mxu0 0.0
        %1995 = vmatpush1.msra.mxu0 0.0
        %1996 = vmatprep.subr.mxu0 0.0
        %1997 = vmatpush1.msra.mxu0 0.0
        %1998 = vmatprep.subr.mxu0 0.0
        %1999 = vmatpush1.msra.mxu0 0.0
        %2000 = vmatprep.subr.mxu0 0.0
        %2001 = vmatpush1.msra.mxu0 0.0
        %2002 = vmatprep.subr.mxu0 0.0
        %2003 = vmatpush1.msra.mxu0 0.0
        %2004 = vmatprep.subr.mxu0 0.0
        %2005 = vmatpush1.msra.mxu0 0.0
        %2006 = vmatprep.subr.mxu0 0.0
        %2007 = vmatpush1.msra.mxu0 0.0
        %2008 = vmatprep.subr.mxu0 0.0
        %2009 = vmatpush1.msra.mxu0 0.0
        %2010 = vmatprep.subr.mxu0 0.0
        %2011 = vmatpush1.msra.mxu0 0.0
        %2012 = vmatprep.subr.mxu0 0.0
        %2013 = vmatpush1.msra.mxu0 0.0
        %2014 = vmatprep.subr.mxu0 0.0
        %2015 = vmatpush1.msra.mxu0 0.0
        %2016 = vmatprep.subr.mxu0 0.0
        %2017 = vmatpush1.msra.mxu0 0.0
        %2018 = vmatprep.subr.mxu0 0.0
        %2019 = vmatpush1.msra.mxu0 0.0
        %2020 = vmatprep.subr.mxu0 0.0
        %2021 = vmatpush1.msra.mxu0 0.0
        %2022 = vmatprep.subr.mxu0 0.0
        %2023 = vmatpush1.msra.mxu0 0.0
        %2024 = vmatprep.subr.mxu0 0.0
        %2025 = vmatpush1.msra.mxu0 0.0
        %2026 = vmatprep.subr.mxu0 0.0
        %2027 = vmatpush1.msra.mxu0 0.0
        %2028 = vmatprep.subr.mxu0 0.0
        %2029 = vmatpush1.msra.mxu0 0.0
        %2030 = vmatprep.subr.mxu0 0.0
        %2031 = vmatpush1.msra.mxu0 0.0
        %2032 = vmatprep.subr.mxu0 0.0
        %2033 = vmatpush1.msra.mxu0 0.0
        %2034 = vmatprep.subr.mxu0 0.0
        %2035 = vmatpush1.msra.mxu0 0.0
        %2036 = vmatprep.mubr.f32.mxu0 0.0
        %2037 = vmatmul.mubr.f32.gmra.mrb[0].mxu0 %v1967
        %v2038 = vpop.f32.mrb[0].mxu0
        %v2039 = vadd.f32 %v1958, %v2038
        %v2040 = vpop.f32.mrb[0].mxu0
        %2041 = vmatprep.mubr.f32.mxu0 0.0
        %2042 = vmatmul.mubr.f32.gmra.mrb[0].mxu0 %v1970
        %v2043 = vpop.f32.mrb[0].mxu0
        %v2044 = vadd.f32 %v1963, %v2043
        %v2045 = vpop.f32.mrb[0].mxu0
        %2046 = vdwg.mxu0
        %v2048 = vsel %vm363, %v1877, 0
        %v2051 = vsel %vm363, %v1882, 0
        %2053 = vmatprep.subr.mxu0 0.0
        %2054 = vmatpush1.msra.mxu0 %v1590
        %2055 = vmatprep.subr.mxu0 0.0
        %2056 = vmatpush1.msra.mxu0 %v1591
        %2057 = vmatprep.subr.mxu0 0.0
        %2058 = vmatpush1.msra.mxu0 0.0
        %2059 = vmatprep.subr.mxu0 0.0
        %2060 = vmatpush1.msra.mxu0 0.0
        %2061 = vmatprep.subr.mxu0 0.0
        %2062 = vmatpush1.msra.mxu0 0.0
        %2063 = vmatprep.subr.mxu0 0.0
        %2064 = vmatpush1.msra.mxu0 0.0
        %2065 = vmatprep.subr.mxu0 0.0
        %2066 = vmatpush1.msra.mxu0 0.0
        %2067 = vmatprep.subr.mxu0 0.0
        %2068 = vmatpush1.msra.mxu0 0.0
        %2069 = vmatprep.subr.mxu0 0.0
        %2070 = vmatpush1.msra.mxu0 0.0
        %2071 = vmatprep.subr.mxu0 0.0
        %2072 = vmatpush1.msra.mxu0 0.0
        %2073 = vmatprep.subr.mxu0 0.0
        %2074 = vmatpush1.msra.mxu0 0.0
        %2075 = vmatprep.subr.mxu0 0.0
        %2076 = vmatpush1.msra.mxu0 0.0
        %2077 = vmatprep.subr.mxu0 0.0
        %2078 = vmatpush1.msra.mxu0 0.0
        %2079 = vmatprep.subr.mxu0 0.0
        %2080 = vmatpush1.msra.mxu0 0.0
        %2081 = vmatprep.subr.mxu0 0.0
        %2082 = vmatpush1.msra.mxu0 0.0
        %2083 = vmatprep.subr.mxu0 0.0
        %2084 = vmatpush1.msra.mxu0 0.0
        %2085 = vmatprep.subr.mxu0 0.0
        %2086 = vmatpush1.msra.mxu0 0.0
        %2087 = vmatprep.subr.mxu0 0.0
        %2088 = vmatpush1.msra.mxu0 0.0
        %2089 = vmatprep.subr.mxu0 0.0
        %2090 = vmatpush1.msra.mxu0 0.0
        %2091 = vmatprep.subr.mxu0 0.0
        %2092 = vmatpush1.msra.mxu0 0.0
        %2093 = vmatprep.subr.mxu0 0.0
        %2094 = vmatpush1.msra.mxu0 0.0
        %2095 = vmatprep.subr.mxu0 0.0
        %2096 = vmatpush1.msra.mxu0 0.0
        %2097 = vmatprep.subr.mxu0 0.0
        %2098 = vmatpush1.msra.mxu0 0.0
        %2099 = vmatprep.subr.mxu0 0.0
        %2100 = vmatpush1.msra.mxu0 0.0
        %2101 = vmatprep.subr.mxu0 0.0
        %2102 = vmatpush1.msra.mxu0 0.0
        %2103 = vmatprep.subr.mxu0 0.0
        %2104 = vmatpush1.msra.mxu0 0.0
        %2105 = vmatprep.subr.mxu0 0.0
        %2106 = vmatpush1.msra.mxu0 0.0
        %2107 = vmatprep.subr.mxu0 0.0
        %2108 = vmatpush1.msra.mxu0 0.0
        %2109 = vmatprep.subr.mxu0 0.0
        %2110 = vmatpush1.msra.mxu0 0.0
        %2111 = vmatprep.subr.mxu0 0.0
        %2112 = vmatpush1.msra.mxu0 0.0
        %2113 = vmatprep.subr.mxu0 0.0
        %2114 = vmatpush1.msra.mxu0 0.0
        %2115 = vmatprep.subr.mxu0 0.0
        %2116 = vmatpush1.msra.mxu0 0.0
        %2117 = vmatprep.mubr.f32.mxu0 0.0
        %2118 = vmatmul.mubr.f32.gmra.mrb[0].mxu0 %v2048
        %v2119 = vpop.f32.mrb[0].mxu0
        %v2120 = vadd.f32 0.0, %v2119
        %v2121 = vpop.f32.mrb[0].mxu0
        %2122 = vmatprep.mubr.f32.mxu0 0.0
        %2123 = vmatmul.mubr.f32.gmra.mrb[0].mxu0 %v2051
        %v2124 = vpop.f32.mrb[0].mxu0
        %v2125 = vadd.f32 0.0, %v2124
        %v2126 = vpop.f32.mrb[0].mxu0
        %2127 = vdwg.mxu0
        %v2128 = vadd.f32 %v2039, %v2120
        %v2129 = vadd.f32 %v2044, %v2125
        %v2130 = vadd.f32 %v1212, %v2128
        %v2131 = vadd.f32 %v1213, %v2129
        %2134 = vrot.lane.b32.xlu0 %v2130, 112
        %v2135 = vpop.permute.xlu0 %2134
        %2136 = vrot.lane.b32.xlu0 %v2131, 112
        %v2137 = vpop.permute.xlu0 %2136
        %v2140 = vmax.f32 %v2130, %v2135
        %v2141 = vmax.f32 %v2131, %v2137
        %2142 = vrot.lane.b32.xlu0 %v2130, 96
        %v2143 = vpop.permute.xlu0 %2142
        %2144 = vrot.lane.b32.xlu0 %v2131, 96
        %v2145 = vpop.permute.xlu0 %2144
        %v2148 = vmax.f32 %v2140, %v2143
        %v2149 = vmax.f32 %v2141, %v2145
        %2150 = vrot.lane.b32.xlu0 %v2130, 80
        %v2151 = vpop.permute.xlu0 %2150
        %2152 = vrot.lane.b32.xlu0 %v2131, 80
        %v2153 = vpop.permute.xlu0 %2152
        %v2156 = vmax.f32 %v2148, %v2151
        %v2157 = vmax.f32 %v2149, %v2153
        %2158 = vrot.lane.b32.xlu0 %v2130, 64
        %v2159 = vpop.permute.xlu0 %2158
        %2160 = vrot.lane.b32.xlu0 %v2131, 64
        %v2161 = vpop.permute.xlu0 %2160
        %v2164 = vmax.f32 %v2156, %v2159
        %v2165 = vmax.f32 %v2157, %v2161
        %2166 = vrot.lane.b32.xlu0 %v2130, 48
        %v2167 = vpop.permute.xlu0 %2166
        %2168 = vrot.lane.b32.xlu0 %v2131, 48
        %v2169 = vpop.permute.xlu0 %2168
        %v2172 = vmax.f32 %v2164, %v2167
        %v2173 = vmax.f32 %v2165, %v2169
        %2174 = vrot.lane.b32.xlu0 %v2130, 32
        %v2175 = vpop.permute.xlu0 %2174
        %2176 = vrot.lane.b32.xlu0 %v2131, 32
        %v2177 = vpop.permute.xlu0 %2176
        %v2180 = vmax.f32 %v2172, %v2175
        %v2181 = vmax.f32 %v2173, %v2177
        %2182 = vrot.lane.b32.xlu0 %v2130, 16
        %v2183 = vpop.permute.xlu0 %2182
        %2184 = vrot.lane.b32.xlu0 %v2131, 16
        %v2185 = vpop.permute.xlu0 %2184
        %v2188 = vmax.f32 %v2180, %v2183
        %v2189 = vmax.f32 %v2181, %v2185
        %2190 = vmatprep.subr.mxu0 0.0
        %2191 = vmatpush1.msra.mxu0 %v2188
        %2192 = vmatprep.subr.mxu0 0.0
        %2193 = vmatpush1.msra.mxu0 %v2189
        %2194 = vmatprep.subr.mxu0 0.0
        %2195 = vmatpush1.msra.mxu0 0.0
        %2196 = vmatprep.subr.mxu0 0.0
        %2197 = vmatpush1.msra.mxu0 0.0
        %2198 = vmatprep.subr.mxu0 0.0
        %2199 = vmatpush1.msra.mxu0 0.0
        %2200 = vmatprep.subr.mxu0 0.0
        %2201 = vmatpush1.msra.mxu0 0.0
        %2202 = vmatprep.subr.mxu0 0.0
        %2203 = vmatpush1.msra.mxu0 0.0
        %2204 = vmatprep.subr.mxu0 0.0
        %2205 = vmatpush1.msra.mxu0 0.0
        %2206 = vmatprep.subr.mxu0 0.0
        %2207 = vmatpush1.msra.mxu0 0.0
        %2208 = vmatprep.subr.mxu0 0.0
        %2209 = vmatpush1.msra.mxu0 0.0
        %2210 = vmatprep.subr.mxu0 0.0
        %2211 = vmatpush1.msra.mxu0 0.0
        %2212 = vmatprep.subr.mxu0 0.0
        %2213 = vmatpush1.msra.mxu0 0.0
        %2214 = vmatprep.subr.mxu0 0.0
        %2215 = vmatpush1.msra.mxu0 0.0
        %2216 = vmatprep.subr.mxu0 0.0
        %2217 = vmatpush1.msra.mxu0 0.0
        %2218 = vmatprep.subr.mxu0 0.0
        %2219 = vmatpush1.msra.mxu0 0.0
        %2220 = vmatprep.subr.mxu0 0.0
        %2221 = vmatpush1.msra.mxu0 0.0
        %2222 = vmatprep.subr.mxu0 0.0
        %2223 = vmatpush1.msra.mxu0 0.0
        %2224 = vmatprep.subr.mxu0 0.0
        %2225 = vmatpush1.msra.mxu0 0.0
        %2226 = vmatprep.subr.mxu0 0.0
        %2227 = vmatpush1.msra.mxu0 0.0
        %2228 = vmatprep.subr.mxu0 0.0
        %2229 = vmatpush1.msra.mxu0 0.0
        %2230 = vmatprep.subr.mxu0 0.0
        %2231 = vmatpush1.msra.mxu0 0.0
        %2232 = vmatprep.subr.mxu0 0.0
        %2233 = vmatpush1.msra.mxu0 0.0
        %2234 = vmatprep.subr.mxu0 0.0
        %2235 = vmatpush1.msra.mxu0 0.0
        %2236 = vmatprep.subr.mxu0 0.0
        %2237 = vmatpush1.msra.mxu0 0.0
        %2238 = vmatprep.subr.mxu0 0.0
        %2239 = vmatpush1.msra.mxu0 0.0
        %2240 = vmatprep.subr.mxu0 0.0
        %2241 = vmatpush1.msra.mxu0 0.0
        %2242 = vmatprep.subr.mxu0 0.0
        %2243 = vmatpush1.msra.mxu0 0.0
        %2244 = vmatprep.subr.mxu0 0.0
        %2245 = vmatpush1.msra.mxu0 0.0
        %2246 = vmatprep.subr.mxu0 0.0
        %2247 = vmatpush1.msra.mxu0 0.0
        %2248 = vmatprep.subr.mxu0 0.0
        %2249 = vmatpush1.msra.mxu0 0.0
        %2250 = vmatprep.subr.mxu0 0.0
        %2251 = vmatpush1.msra.mxu0 0.0
        %2252 = vmatprep.subr.mxu0 0.0
        %2253 = vmatpush1.msra.mxu0 0.0
        %2254 = vmatprep.mubr.f32.mxu0 0.0
        %2255 = vmatmul.mubr.f32.gmra.mrb[0].mxu0 %v365
        %v2256 = vpop.f32.mrb[0].mxu0
        %v2257 = vadd.f32 0.0, %v2256
        %v2258 = vpop.f32.mrb[0].mxu0
        %2259 = vmatprep.mubr.f32.mxu0 0.0
        %2260 = vmatmul.mubr.f32.gmra.mrb[0].mxu0 %v368
        %v2261 = vpop.f32.mrb[0].mxu0
        %v2262 = vadd.f32 0.0, %v2261
        %v2263 = vpop.f32.mrb[0].mxu0
        %2264 = vdwg.mxu0
        %2265 = vmatprep.subr.mxu0 0.0
        %2266 = vmatpush1.msra.mxu0 %v2188
        %2267 = vmatprep.subr.mxu0 0.0
        %2268 = vmatpush1.msra.mxu0 %v2189
        %2269 = vmatprep.subr.mxu0 0.0
        %2270 = vmatpush1.msra.mxu0 0.0
        %2271 = vmatprep.subr.mxu0 0.0
        %2272 = vmatpush1.msra.mxu0 0.0
        %2273 = vmatprep.subr.mxu0 0.0
        %2274 = vmatpush1.msra.mxu0 0.0
        %2275 = vmatprep.subr.mxu0 0.0
        %2276 = vmatpush1.msra.mxu0 0.0
        %2277 = vmatprep.subr.mxu0 0.0
        %2278 = vmatpush1.msra.mxu0 0.0
        %2279 = vmatprep.subr.mxu0 0.0
        %2280 = vmatpush1.msra.mxu0 0.0
        %2281 = vmatprep.subr.mxu0 0.0
        %2282 = vmatpush1.msra.mxu0 0.0
        %2283 = vmatprep.subr.mxu0 0.0
        %2284 = vmatpush1.msra.mxu0 0.0
        %2285 = vmatprep.subr.mxu0 0.0
        %2286 = vmatpush1.msra.mxu0 0.0
        %2287 = vmatprep.subr.mxu0 0.0
        %2288 = vmatpush1.msra.mxu0 0.0
        %2289 = vmatprep.subr.mxu0 0.0
        %2290 = vmatpush1.msra.mxu0 0.0
        %2291 = vmatprep.subr.mxu0 0.0
        %2292 = vmatpush1.msra.mxu0 0.0
        %2293 = vmatprep.subr.mxu0 0.0
        %2294 = vmatpush1.msra.mxu0 0.0
        %2295 = vmatprep.subr.mxu0 0.0
        %2296 = vmatpush1.msra.mxu0 0.0
        %2297 = vmatprep.subr.mxu0 0.0
        %2298 = vmatpush1.msra.mxu0 0.0
        %2299 = vmatprep.subr.mxu0 0.0
        %2300 = vmatpush1.msra.mxu0 0.0
        %2301 = vmatprep.subr.mxu0 0.0
        %2302 = vmatpush1.msra.mxu0 0.0
        %2303 = vmatprep.subr.mxu0 0.0
        %2304 = vmatpush1.msra.mxu0 0.0
        %2305 = vmatprep.subr.mxu0 0.0
        %2306 = vmatpush1.msra.mxu0 0.0
        %2307 = vmatprep.subr.mxu0 0.0
        %2308 = vmatpush1.msra.mxu0 0.0
        %2309 = vmatprep.subr.mxu0 0.0
        %2310 = vmatpush1.msra.mxu0 0.0
        %2311 = vmatprep.subr.mxu0 0.0
        %2312 = vmatpush1.msra.mxu0 0.0
        %2313 = vmatprep.subr.mxu0 0.0
        %2314 = vmatpush1.msra.mxu0 0.0
        %2315 = vmatprep.subr.mxu0 0.0
        %2316 = vmatpush1.msra.mxu0 0.0
        %2317 = vmatprep.subr.mxu0 0.0
        %2318 = vmatpush1.msra.mxu0 0.0
        %2319 = vmatprep.subr.mxu0 0.0
        %2320 = vmatpush1.msra.mxu0 0.0
        %2321 = vmatprep.subr.mxu0 0.0
        %2322 = vmatpush1.msra.mxu0 0.0
        %2323 = vmatprep.subr.mxu0 0.0
        %2324 = vmatpush1.msra.mxu0 0.0
        %2325 = vmatprep.subr.mxu0 0.0
        %2326 = vmatpush1.msra.mxu0 0.0
        %2327 = vmatprep.subr.mxu0 0.0
        %2328 = vmatpush1.msra.mxu0 0.0
        %2329 = vmatprep.mubr.f32.mxu0 0.0
        %2330 = vmatmul.mubr.f32.gmra.mrb[0].mxu0 %v446
        %v2331 = vpop.f32.mrb[0].mxu0
        %v2332 = vadd.f32 0.0, %v2331
        %v2333 = vpop.f32.mrb[0].mxu0
        %2334 = vmatprep.mubr.f32.mxu0 0.0
        %2335 = vmatmul.mubr.f32.gmra.mrb[0].mxu0 %v449
        %v2336 = vpop.f32.mrb[0].mxu0
        %v2337 = vadd.f32 0.0, %v2336
        %v2338 = vpop.f32.mrb[0].mxu0
        %2339 = vdwg.mxu0
        %v2341 = vsel %vm363, %v2188, 0
        %v2344 = vsel %vm363, %v2189, 0
        %2346 = vmatprep.subr.mxu0 0.0
        %2347 = vmatpush1.msra.mxu0 %v1425
        %2348 = vmatprep.subr.mxu0 0.0
        %2349 = vmatpush1.msra.mxu0 %v1426
        %2350 = vmatprep.subr.mxu0 0.0
        %2351 = vmatpush1.msra.mxu0 0.0
        %2352 = vmatprep.subr.mxu0 0.0
        %2353 = vmatpush1.msra.mxu0 0.0
        %2354 = vmatprep.subr.mxu0 0.0
        %2355 = vmatpush1.msra.mxu0 0.0
        %2356 = vmatprep.subr.mxu0 0.0
        %2357 = vmatpush1.msra.mxu0 0.0
        %2358 = vmatprep.subr.mxu0 0.0
        %2359 = vmatpush1.msra.mxu0 0.0
        %2360 = vmatprep.subr.mxu0 0.0
        %2361 = vmatpush1.msra.mxu0 0.0
        %2362 = vmatprep.subr.mxu0 0.0
        %2363 = vmatpush1.msra.mxu0 0.0
        %2364 = vmatprep.subr.mxu0 0.0
        %2365 = vmatpush1.msra.mxu0 0.0
        %2366 = vmatprep.subr.mxu0 0.0
        %2367 = vmatpush1.msra.mxu0 0.0
        %2368 = vmatprep.subr.mxu0 0.0
        %2369 = vmatpush1.msra.mxu0 0.0
        %2370 = vmatprep.subr.mxu0 0.0
        %2371 = vmatpush1.msra.mxu0 0.0
        %2372 = vmatprep.subr.mxu0 0.0
        %2373 = vmatpush1.msra.mxu0 0.0
        %2374 = vmatprep.subr.mxu0 0.0
        %2375 = vmatpush1.msra.mxu0 0.0
        %2376 = vmatprep.subr.mxu0 0.0
        %2377 = vmatpush1.msra.mxu0 0.0
        %2378 = vmatprep.subr.mxu0 0.0
        %2379 = vmatpush1.msra.mxu0 0.0
        %2380 = vmatprep.subr.mxu0 0.0
        %2381 = vmatpush1.msra.mxu0 0.0
        %2382 = vmatprep.subr.mxu0 0.0
        %2383 = vmatpush1.msra.mxu0 0.0
        %2384 = vmatprep.subr.mxu0 0.0
        %2385 = vmatpush1.msra.mxu0 0.0
        %2386 = vmatprep.subr.mxu0 0.0
        %2387 = vmatpush1.msra.mxu0 0.0
        %2388 = vmatprep.subr.mxu0 0.0
        %2389 = vmatpush1.msra.mxu0 0.0
        %2390 = vmatprep.subr.mxu0 0.0
        %2391 = vmatpush1.msra.mxu0 0.0
        %2392 = vmatprep.subr.mxu0 0.0
        %2393 = vmatpush1.msra.mxu0 0.0
        %2394 = vmatprep.subr.mxu0 0.0
        %2395 = vmatpush1.msra.mxu0 0.0
        %2396 = vmatprep.subr.mxu0 0.0
        %2397 = vmatpush1.msra.mxu0 0.0
        %2398 = vmatprep.subr.mxu0 0.0
        %2399 = vmatpush1.msra.mxu0 0.0
        %2400 = vmatprep.subr.mxu0 0.0
        %2401 = vmatpush1.msra.mxu0 0.0
        %2402 = vmatprep.subr.mxu0 0.0
        %2403 = vmatpush1.msra.mxu0 0.0
        %2404 = vmatprep.subr.mxu0 0.0
        %2405 = vmatpush1.msra.mxu0 0.0
        %2406 = vmatprep.subr.mxu0 0.0
        %2407 = vmatpush1.msra.mxu0 0.0
        %2408 = vmatprep.subr.mxu0 0.0
        %2409 = vmatpush1.msra.mxu0 0.0
        %2410 = vmatprep.mubr.f32.mxu0 0.0
        %2411 = vmatmul.mubr.f32.gmra.mrb[0].mxu0 %v2341
        %v2412 = vpop.f32.mrb[0].mxu0
        %v2413 = vadd.f32 0.0, %v2412
        %v2414 = vpop.f32.mrb[0].mxu0
        %2415 = vmatprep.mubr.f32.mxu0 0.0
        %2416 = vmatmul.mubr.f32.gmra.mrb[0].mxu0 %v2344
        %v2417 = vpop.f32.mrb[0].mxu0
        %v2418 = vadd.f32 0.0, %v2417
        %v2419 = vpop.f32.mrb[0].mxu0
        %2420 = vdwg.mxu0
        %v2422 = vsel %vm363, %v2257, 0
        %v2425 = vsel %vm363, %v2262, 0
        %2427 = vmatprep.subr.mxu0 0.0
        %2428 = vmatpush1.msra.mxu0 %v1422
        %2429 = vmatprep.subr.mxu0 0.0
        %2430 = vmatpush1.msra.mxu0 %v1423
        %2431 = vmatprep.subr.mxu0 0.0
        %2432 = vmatpush1.msra.mxu0 0.0
        %2433 = vmatprep.subr.mxu0 0.0
        %2434 = vmatpush1.msra.mxu0 0.0
        %2435 = vmatprep.subr.mxu0 0.0
        %2436 = vmatpush1.msra.mxu0 0.0
        %2437 = vmatprep.subr.mxu0 0.0
        %2438 = vmatpush1.msra.mxu0 0.0
        %2439 = vmatprep.subr.mxu0 0.0
        %2440 = vmatpush1.msra.mxu0 0.0
        %2441 = vmatprep.subr.mxu0 0.0
        %2442 = vmatpush1.msra.mxu0 0.0
        %2443 = vmatprep.subr.mxu0 0.0
        %2444 = vmatpush1.msra.mxu0 0.0
        %2445 = vmatprep.subr.mxu0 0.0
        %2446 = vmatpush1.msra.mxu0 0.0
        %2447 = vmatprep.subr.mxu0 0.0
        %2448 = vmatpush1.msra.mxu0 0.0
        %2449 = vmatprep.subr.mxu0 0.0
        %2450 = vmatpush1.msra.mxu0 0.0
        %2451 = vmatprep.subr.mxu0 0.0
        %2452 = vmatpush1.msra.mxu0 0.0
        %2453 = vmatprep.subr.mxu0 0.0
        %2454 = vmatpush1.msra.mxu0 0.0
        %2455 = vmatprep.subr.mxu0 0.0
        %2456 = vmatpush1.msra.mxu0 0.0
        %2457 = vmatprep.subr.mxu0 0.0
        %2458 = vmatpush1.msra.mxu0 0.0
        %2459 = vmatprep.subr.mxu0 0.0
        %2460 = vmatpush1.msra.mxu0 0.0
        %2461 = vmatprep.subr.mxu0 0.0
        %2462 = vmatpush1.msra.mxu0 0.0
        %2463 = vmatprep.subr.mxu0 0.0
        %2464 = vmatpush1.msra.mxu0 0.0
        %2465 = vmatprep.subr.mxu0 0.0
        %2466 = vmatpush1.msra.mxu0 0.0
        %2467 = vmatprep.subr.mxu0 0.0
        %2468 = vmatpush1.msra.mxu0 0.0
        %2469 = vmatprep.subr.mxu0 0.0
        %2470 = vmatpush1.msra.mxu0 0.0
        %2471 = vmatprep.subr.mxu0 0.0
        %2472 = vmatpush1.msra.mxu0 0.0
        %2473 = vmatprep.subr.mxu0 0.0
        %2474 = vmatpush1.msra.mxu0 0.0
        %2475 = vmatprep.subr.mxu0 0.0
        %2476 = vmatpush1.msra.mxu0 0.0
        %2477 = vmatprep.subr.mxu0 0.0
        %2478 = vmatpush1.msra.mxu0 0.0
        %2479 = vmatprep.subr.mxu0 0.0
        %2480 = vmatpush1.msra.mxu0 0.0
        %2481 = vmatprep.subr.mxu0 0.0
        %2482 = vmatpush1.msra.mxu0 0.0
        %2483 = vmatprep.subr.mxu0 0.0
        %2484 = vmatpush1.msra.mxu0 0.0
        %2485 = vmatprep.subr.mxu0 0.0
        %2486 = vmatpush1.msra.mxu0 0.0
        %2487 = vmatprep.subr.mxu0 0.0
        %2488 = vmatpush1.msra.mxu0 0.0
        %2489 = vmatprep.subr.mxu0 0.0
        %2490 = vmatpush1.msra.mxu0 0.0
        %2491 = vmatprep.mubr.f32.mxu0 0.0
        %2492 = vmatmul.mubr.f32.gmra.mrb[0].mxu0 %v2422
        %v2493 = vpop.f32.mrb[0].mxu0
        %v2494 = vadd.f32 %v2413, %v2493
        %v2495 = vpop.f32.mrb[0].mxu0
        %2496 = vmatprep.mubr.f32.mxu0 0.0
        %2497 = vmatmul.mubr.f32.gmra.mrb[0].mxu0 %v2425
        %v2498 = vpop.f32.mrb[0].mxu0
        %v2499 = vadd.f32 %v2418, %v2498
        %v2500 = vpop.f32.mrb[0].mxu0
        %2501 = vdwg.mxu0
        %v2503 = vsel %vm363, %v2332, 0
        %v2506 = vsel %vm363, %v2337, 0
        %2508 = vmatprep.subr.mxu0 0.0
        %2509 = vmatpush1.msra.mxu0 %v1590
        %2510 = vmatprep.subr.mxu0 0.0
        %2511 = vmatpush1.msra.mxu0 %v1591
        %2512 = vmatprep.subr.mxu0 0.0
        %2513 = vmatpush1.msra.mxu0 0.0
        %2514 = vmatprep.subr.mxu0 0.0
        %2515 = vmatpush1.msra.mxu0 0.0
        %2516 = vmatprep.subr.mxu0 0.0
        %2517 = vmatpush1.msra.mxu0 0.0
        %2518 = vmatprep.subr.mxu0 0.0
        %2519 = vmatpush1.msra.mxu0 0.0
        %2520 = vmatprep.subr.mxu0 0.0
        %2521 = vmatpush1.msra.mxu0 0.0
        %2522 = vmatprep.subr.mxu0 0.0
        %2523 = vmatpush1.msra.mxu0 0.0
        %2524 = vmatprep.subr.mxu0 0.0
        %2525 = vmatpush1.msra.mxu0 0.0
        %2526 = vmatprep.subr.mxu0 0.0
        %2527 = vmatpush1.msra.mxu0 0.0
        %2528 = vmatprep.subr.mxu0 0.0
        %2529 = vmatpush1.msra.mxu0 0.0
        %2530 = vmatprep.subr.mxu0 0.0
        %2531 = vmatpush1.msra.mxu0 0.0
        %2532 = vmatprep.subr.mxu0 0.0
        %2533 = vmatpush1.msra.mxu0 0.0
        %2534 = vmatprep.subr.mxu0 0.0
        %2535 = vmatpush1.msra.mxu0 0.0
        %2536 = vmatprep.subr.mxu0 0.0
        %2537 = vmatpush1.msra.mxu0 0.0
        %2538 = vmatprep.subr.mxu0 0.0
        %2539 = vmatpush1.msra.mxu0 0.0
        %2540 = vmatprep.subr.mxu0 0.0
        %2541 = vmatpush1.msra.mxu0 0.0
        %2542 = vmatprep.subr.mxu0 0.0
        %2543 = vmatpush1.msra.mxu0 0.0
        %2544 = vmatprep.subr.mxu0 0.0
        %2545 = vmatpush1.msra.mxu0 0.0
        %2546 = vmatprep.subr.mxu0 0.0
        %2547 = vmatpush1.msra.mxu0 0.0
        %2548 = vmatprep.subr.mxu0 0.0
        %2549 = vmatpush1.msra.mxu0 0.0
        %2550 = vmatprep.subr.mxu0 0.0
        %2551 = vmatpush1.msra.mxu0 0.0
        %2552 = vmatprep.subr.mxu0 0.0
        %2553 = vmatpush1.msra.mxu0 0.0
        %2554 = vmatprep.subr.mxu0 0.0
        %2555 = vmatpush1.msra.mxu0 0.0
        %2556 = vmatprep.subr.mxu0 0.0
        %2557 = vmatpush1.msra.mxu0 0.0
        %2558 = vmatprep.subr.mxu0 0.0
        %2559 = vmatpush1.msra.mxu0 0.0
        %2560 = vmatprep.subr.mxu0 0.0
        %2561 = vmatpush1.msra.mxu0 0.0
        %2562 = vmatprep.subr.mxu0 0.0
        %2563 = vmatpush1.msra.mxu0 0.0
        %2564 = vmatprep.subr.mxu0 0.0
        %2565 = vmatpush1.msra.mxu0 0.0
        %2566 = vmatprep.subr.mxu0 0.0
        %2567 = vmatpush1.msra.mxu0 0.0
        %2568 = vmatprep.subr.mxu0 0.0
        %2569 = vmatpush1.msra.mxu0 0.0
        %2570 = vmatprep.subr.mxu0 0.0
        %2571 = vmatpush1.msra.mxu0 0.0
        %2572 = vmatprep.mubr.f32.mxu0 0.0
        %2573 = vmatmul.mubr.f32.gmra.mrb[0].mxu0 %v2503
        %v2574 = vpop.f32.mrb[0].mxu0
        %v2575 = vadd.f32 0.0, %v2574
        %v2576 = vpop.f32.mrb[0].mxu0
        %2577 = vmatprep.mubr.f32.mxu0 0.0
        %2578 = vmatmul.mubr.f32.gmra.mrb[0].mxu0 %v2506
        %v2579 = vpop.f32.mrb[0].mxu0
        %v2580 = vadd.f32 0.0, %v2579
        %v2581 = vpop.f32.mrb[0].mxu0
        %2582 = vdwg.mxu0
        %v2583 = vadd.f32 %v2494, %v2575
        %v2584 = vadd.f32 %v2499, %v2580
        %v2585 = vadd.f32 %v1212, %v2583
        %v2586 = vadd.f32 %v1213, %v2584
        %2589 = vrot.lane.b32.xlu0 %v2585, 112
        %v2590 = vpop.permute.xlu0 %2589
        %2591 = vrot.lane.b32.xlu0 %v2586, 112
        %v2592 = vpop.permute.xlu0 %2591
        %v2595 = vmax.f32 %v2585, %v2590
        %v2596 = vmax.f32 %v2586, %v2592
        %2597 = vrot.lane.b32.xlu0 %v2585, 96
        %v2598 = vpop.permute.xlu0 %2597
        %2599 = vrot.lane.b32.xlu0 %v2586, 96
        %v2600 = vpop.permute.xlu0 %2599
        %v2603 = vmax.f32 %v2595, %v2598
        %v2604 = vmax.f32 %v2596, %v2600
        %2605 = vrot.lane.b32.xlu0 %v2585, 80
        %v2606 = vpop.permute.xlu0 %2605
        %2607 = vrot.lane.b32.xlu0 %v2586, 80
        %v2608 = vpop.permute.xlu0 %2607
        %v2611 = vmax.f32 %v2603, %v2606
        %v2612 = vmax.f32 %v2604, %v2608
        %2613 = vrot.lane.b32.xlu0 %v2585, 64
        %v2614 = vpop.permute.xlu0 %2613
        %2615 = vrot.lane.b32.xlu0 %v2586, 64
        %v2616 = vpop.permute.xlu0 %2615
        %v2619 = vmax.f32 %v2611, %v2614
        %v2620 = vmax.f32 %v2612, %v2616
        %2621 = vrot.lane.b32.xlu0 %v2585, 48
        %v2622 = vpop.permute.xlu0 %2621
        %2623 = vrot.lane.b32.xlu0 %v2586, 48
        %v2624 = vpop.permute.xlu0 %2623
        %v2627 = vmax.f32 %v2619, %v2622
        %v2628 = vmax.f32 %v2620, %v2624
        %2629 = vrot.lane.b32.xlu0 %v2585, 32
        %v2630 = vpop.permute.xlu0 %2629
        %2631 = vrot.lane.b32.xlu0 %v2586, 32
        %v2632 = vpop.permute.xlu0 %2631
        %v2635 = vmax.f32 %v2627, %v2630
        %v2636 = vmax.f32 %v2628, %v2632
        %2637 = vrot.lane.b32.xlu0 %v2585, 16
        %v2638 = vpop.permute.xlu0 %2637
        %2639 = vrot.lane.b32.xlu0 %v2586, 16
        %v2640 = vpop.permute.xlu0 %2639
        %v2643 = vmax.f32 %v2635, %v2638
        %v2644 = vmax.f32 %v2636, %v2640
        %2645 = vmatprep.subr.mxu0 0.0
        %2646 = vmatpush1.msra.mxu0 %v2643
        %2647 = vmatprep.subr.mxu0 0.0
        %2648 = vmatpush1.msra.mxu0 %v2644
        %2649 = vmatprep.subr.mxu0 0.0
        %2650 = vmatpush1.msra.mxu0 0.0
        %2651 = vmatprep.subr.mxu0 0.0
        %2652 = vmatpush1.msra.mxu0 0.0
        %2653 = vmatprep.subr.mxu0 0.0
        %2654 = vmatpush1.msra.mxu0 0.0
        %2655 = vmatprep.subr.mxu0 0.0
        %2656 = vmatpush1.msra.mxu0 0.0
        %2657 = vmatprep.subr.mxu0 0.0
        %2658 = vmatpush1.msra.mxu0 0.0
        %2659 = vmatprep.subr.mxu0 0.0
        %2660 = vmatpush1.msra.mxu0 0.0
        %2661 = vmatprep.subr.mxu0 0.0
        %2662 = vmatpush1.msra.mxu0 0.0
        %2663 = vmatprep.subr.mxu0 0.0
        %2664 = vmatpush1.msra.mxu0 0.0
        %2665 = vmatprep.subr.mxu0 0.0
        %2666 = vmatpush1.msra.mxu0 0.0
        %2667 = vmatprep.subr.mxu0 0.0
        %2668 = vmatpush1.msra.mxu0 0.0
        %2669 = vmatprep.subr.mxu0 0.0
        %2670 = vmatpush1.msra.mxu0 0.0
        %2671 = vmatprep.subr.mxu0 0.0
        %2672 = vmatpush1.msra.mxu0 0.0
        %2673 = vmatprep.subr.mxu0 0.0
        %2674 = vmatpush1.msra.mxu0 0.0
        %2675 = vmatprep.subr.mxu0 0.0
        %2676 = vmatpush1.msra.mxu0 0.0
        %2677 = vmatprep.subr.mxu0 0.0
        %2678 = vmatpush1.msra.mxu0 0.0
        %2679 = vmatprep.subr.mxu0 0.0
        %2680 = vmatpush1.msra.mxu0 0.0
        %2681 = vmatprep.subr.mxu0 0.0
        %2682 = vmatpush1.msra.mxu0 0.0
        %2683 = vmatprep.subr.mxu0 0.0
        %2684 = vmatpush1.msra.mxu0 0.0
        %2685 = vmatprep.subr.mxu0 0.0
        %2686 = vmatpush1.msra.mxu0 0.0
        %2687 = vmatprep.subr.mxu0 0.0
        %2688 = vmatpush1.msra.mxu0 0.0
        %2689 = vmatprep.subr.mxu0 0.0
        %2690 = vmatpush1.msra.mxu0 0.0
        %2691 = vmatprep.subr.mxu0 0.0
        %2692 = vmatpush1.msra.mxu0 0.0
        %2693 = vmatprep.subr.mxu0 0.0
        %2694 = vmatpush1.msra.mxu0 0.0
        %2695 = vmatprep.subr.mxu0 0.0
        %2696 = vmatpush1.msra.mxu0 0.0
        %2697 = vmatprep.subr.mxu0 0.0
        %2698 = vmatpush1.msra.mxu0 0.0
        %2699 = vmatprep.subr.mxu0 0.0
        %2700 = vmatpush1.msra.mxu0 0.0
        %2701 = vmatprep.subr.mxu0 0.0
        %2702 = vmatpush1.msra.mxu0 0.0
        %2703 = vmatprep.subr.mxu0 0.0
        %2704 = vmatpush1.msra.mxu0 0.0
        %2705 = vmatprep.subr.mxu0 0.0
        %2706 = vmatpush1.msra.mxu0 0.0
        %2707 = vmatprep.subr.mxu0 0.0
        %2708 = vmatpush1.msra.mxu0 0.0
        %2709 = vmatprep.mubr.f32.mxu0 0.0
        %2710 = vmatmul.mubr.f32.gmra.mrb[0].mxu0 %v365
        %v2711 = vpop.f32.mrb[0].mxu0
        %v2712 = vadd.f32 0.0, %v2711
        %v2713 = vpop.f32.mrb[0].mxu0
        %2714 = vmatprep.mubr.f32.mxu0 0.0
        %2715 = vmatmul.mubr.f32.gmra.mrb[0].mxu0 %v368
        %v2716 = vpop.f32.mrb[0].mxu0
        %v2717 = vadd.f32 0.0, %v2716
        %v2718 = vpop.f32.mrb[0].mxu0
        %2719 = vdwg.mxu0
        %2720 = vmatprep.subr.mxu0 0.0
        %2721 = vmatpush1.msra.mxu0 %v2643
        %2722 = vmatprep.subr.mxu0 0.0
        %2723 = vmatpush1.msra.mxu0 %v2644
        %2724 = vmatprep.subr.mxu0 0.0
        %2725 = vmatpush1.msra.mxu0 0.0
        %2726 = vmatprep.subr.mxu0 0.0
        %2727 = vmatpush1.msra.mxu0 0.0
        %2728 = vmatprep.subr.mxu0 0.0
        %2729 = vmatpush1.msra.mxu0 0.0
        %2730 = vmatprep.subr.mxu0 0.0
        %2731 = vmatpush1.msra.mxu0 0.0
        %2732 = vmatprep.subr.mxu0 0.0
        %2733 = vmatpush1.msra.mxu0 0.0
        %2734 = vmatprep.subr.mxu0 0.0
        %2735 = vmatpush1.msra.mxu0 0.0
        %2736 = vmatprep.subr.mxu0 0.0
        %2737 = vmatpush1.msra.mxu0 0.0
        %2738 = vmatprep.subr.mxu0 0.0
        %2739 = vmatpush1.msra.mxu0 0.0
        %2740 = vmatprep.subr.mxu0 0.0
        %2741 = vmatpush1.msra.mxu0 0.0
        %2742 = vmatprep.subr.mxu0 0.0
        %2743 = vmatpush1.msra.mxu0 0.0
        %2744 = vmatprep.subr.mxu0 0.0
        %2745 = vmatpush1.msra.mxu0 0.0
        %2746 = vmatprep.subr.mxu0 0.0
        %2747 = vmatpush1.msra.mxu0 0.0
        %2748 = vmatprep.subr.mxu0 0.0
        %2749 = vmatpush1.msra.mxu0 0.0
        %2750 = vmatprep.subr.mxu0 0.0
        %2751 = vmatpush1.msra.mxu0 0.0
        %2752 = vmatprep.subr.mxu0 0.0
        %2753 = vmatpush1.msra.mxu0 0.0
        %2754 = vmatprep.subr.mxu0 0.0
        %2755 = vmatpush1.msra.mxu0 0.0
        %2756 = vmatprep.subr.mxu0 0.0
        %2757 = vmatpush1.msra.mxu0 0.0
        %2758 = vmatprep.subr.mxu0 0.0
        %2759 = vmatpush1.msra.mxu0 0.0
        %2760 = vmatprep.subr.mxu0 0.0
        %2761 = vmatpush1.msra.mxu0 0.0
        %2762 = vmatprep.subr.mxu0 0.0
        %2763 = vmatpush1.msra.mxu0 0.0
        %2764 = vmatprep.subr.mxu0 0.0
        %2765 = vmatpush1.msra.mxu0 0.0
        %2766 = vmatprep.subr.mxu0 0.0
        %2767 = vmatpush1.msra.mxu0 0.0
        %2768 = vmatprep.subr.mxu0 0.0
        %2769 = vmatpush1.msra.mxu0 0.0
        %2770 = vmatprep.subr.mxu0 0.0
        %2771 = vmatpush1.msra.mxu0 0.0
        %2772 = vmatprep.subr.mxu0 0.0
        %2773 = vmatpush1.msra.mxu0 0.0
        %2774 = vmatprep.subr.mxu0 0.0
        %2775 = vmatpush1.msra.mxu0 0.0
        %2776 = vmatprep.subr.mxu0 0.0
        %2777 = vmatpush1.msra.mxu0 0.0
        %2778 = vmatprep.subr.mxu0 0.0
        %2779 = vmatpush1.msra.mxu0 0.0
        %2780 = vmatprep.subr.mxu0 0.0
        %2781 = vmatpush1.msra.mxu0 0.0
        %2782 = vmatprep.subr.mxu0 0.0
        %2783 = vmatpush1.msra.mxu0 0.0
        %2784 = vmatprep.mubr.f32.mxu0 0.0
        %2785 = vmatmul.mubr.f32.gmra.mrb[0].mxu0 %v446
        %v2786 = vpop.f32.mrb[0].mxu0
        %v2787 = vadd.f32 0.0, %v2786
        %v2788 = vpop.f32.mrb[0].mxu0
        %2789 = vmatprep.mubr.f32.mxu0 0.0
        %2790 = vmatmul.mubr.f32.gmra.mrb[0].mxu0 %v449
        %v2791 = vpop.f32.mrb[0].mxu0
        %v2792 = vadd.f32 0.0, %v2791
        %v2793 = vpop.f32.mrb[0].mxu0
        %2794 = vdwg.mxu0
        %v2796 = vsel %vm363, %v2643, 0
        %v2799 = vsel %vm363, %v2644, 0
        %2801 = vmatprep.subr.mxu0 0.0
        %2802 = vmatpush1.msra.mxu0 %v1425
        %2803 = vmatprep.subr.mxu0 0.0
        %2804 = vmatpush1.msra.mxu0 %v1426
        %2805 = vmatprep.subr.mxu0 0.0
        %2806 = vmatpush1.msra.mxu0 0.0
        %2807 = vmatprep.subr.mxu0 0.0
        %2808 = vmatpush1.msra.mxu0 0.0
        %2809 = vmatprep.subr.mxu0 0.0
        %2810 = vmatpush1.msra.mxu0 0.0
        %2811 = vmatprep.subr.mxu0 0.0
        %2812 = vmatpush1.msra.mxu0 0.0
        %2813 = vmatprep.subr.mxu0 0.0
        %2814 = vmatpush1.msra.mxu0 0.0
        %2815 = vmatprep.subr.mxu0 0.0
        %2816 = vmatpush1.msra.mxu0 0.0
        %2817 = vmatprep.subr.mxu0 0.0
        %2818 = vmatpush1.msra.mxu0 0.0
        %2819 = vmatprep.subr.mxu0 0.0
        %2820 = vmatpush1.msra.mxu0 0.0
        %2821 = vmatprep.subr.mxu0 0.0
        %2822 = vmatpush1.msra.mxu0 0.0
        %2823 = vmatprep.subr.mxu0 0.0
        %2824 = vmatpush1.msra.mxu0 0.0
        %2825 = vmatprep.subr.mxu0 0.0
        %2826 = vmatpush1.msra.mxu0 0.0
        %2827 = vmatprep.subr.mxu0 0.0
        %2828 = vmatpush1.msra.mxu0 0.0
        %2829 = vmatprep.subr.mxu0 0.0
        %2830 = vmatpush1.msra.mxu0 0.0
        %2831 = vmatprep.subr.mxu0 0.0
        %2832 = vmatpush1.msra.mxu0 0.0
        %2833 = vmatprep.subr.mxu0 0.0
        %2834 = vmatpush1.msra.mxu0 0.0
        %2835 = vmatprep.subr.mxu0 0.0
        %2836 = vmatpush1.msra.mxu0 0.0
        %2837 = vmatprep.subr.mxu0 0.0
        %2838 = vmatpush1.msra.mxu0 0.0
        %2839 = vmatprep.subr.mxu0 0.0
        %2840 = vmatpush1.msra.mxu0 0.0
        %2841 = vmatprep.subr.mxu0 0.0
        %2842 = vmatpush1.msra.mxu0 0.0
        %2843 = vmatprep.subr.mxu0 0.0
        %2844 = vmatpush1.msra.mxu0 0.0
        %2845 = vmatprep.subr.mxu0 0.0
        %2846 = vmatpush1.msra.mxu0 0.0
        %2847 = vmatprep.subr.mxu0 0.0
        %2848 = vmatpush1.msra.mxu0 0.0
        %2849 = vmatprep.subr.mxu0 0.0
        %2850 = vmatpush1.msra.mxu0 0.0
        %2851 = vmatprep.subr.mxu0 0.0
        %2852 = vmatpush1.msra.mxu0 0.0
        %2853 = vmatprep.subr.mxu0 0.0
        %2854 = vmatpush1.msra.mxu0 0.0
        %2855 = vmatprep.subr.mxu0 0.0
        %2856 = vmatpush1.msra.mxu0 0.0
        %2857 = vmatprep.subr.mxu0 0.0
        %2858 = vmatpush1.msra.mxu0 0.0
        %2859 = vmatprep.subr.mxu0 0.0
        %2860 = vmatpush1.msra.mxu0 0.0
        %2861 = vmatprep.subr.mxu0 0.0
        %2862 = vmatpush1.msra.mxu0 0.0
        %2863 = vmatprep.subr.mxu0 0.0
        %2864 = vmatpush1.msra.mxu0 0.0
        %2865 = vmatprep.mubr.f32.mxu0 0.0
        %2866 = vmatmul.mubr.f32.gmra.mrb[0].mxu0 %v2796
        %v2867 = vpop.f32.mrb[0].mxu0
        %v2868 = vadd.f32 0.0, %v2867
        %v2869 = vpop.f32.mrb[0].mxu0
        %2870 = vmatprep.mubr.f32.mxu0 0.0
        %2871 = vmatmul.mubr.f32.gmra.mrb[0].mxu0 %v2799
        %v2872 = vpop.f32.mrb[0].mxu0
        %v2873 = vadd.f32 0.0, %v2872
        %v2874 = vpop.f32.mrb[0].mxu0
        %2875 = vdwg.mxu0
        %v2877 = vsel %vm363, %v2712, 0
        %v2880 = vsel %vm363, %v2717, 0
        %2882 = vmatprep.subr.mxu0 0.0
        %2883 = vmatpush1.msra.mxu0 %v1422
        %2884 = vmatprep.subr.mxu0 0.0
        %2885 = vmatpush1.msra.mxu0 %v1423
        %2886 = vmatprep.subr.mxu0 0.0
        %2887 = vmatpush1.msra.mxu0 0.0
        %2888 = vmatprep.subr.mxu0 0.0
        %2889 = vmatpush1.msra.mxu0 0.0
        %2890 = vmatprep.subr.mxu0 0.0
        %2891 = vmatpush1.msra.mxu0 0.0
        %2892 = vmatprep.subr.mxu0 0.0
        %2893 = vmatpush1.msra.mxu0 0.0
        %2894 = vmatprep.subr.mxu0 0.0
        %2895 = vmatpush1.msra.mxu0 0.0
        %2896 = vmatprep.subr.mxu0 0.0
        %2897 = vmatpush1.msra.mxu0 0.0
        %2898 = vmatprep.subr.mxu0 0.0
        %2899 = vmatpush1.msra.mxu0 0.0
        %2900 = vmatprep.subr.mxu0 0.0
        %2901 = vmatpush1.msra.mxu0 0.0
        %2902 = vmatprep.subr.mxu0 0.0
        %2903 = vmatpush1.msra.mxu0 0.0
        %2904 = vmatprep.subr.mxu0 0.0
        %2905 = vmatpush1.msra.mxu0 0.0
        %2906 = vmatprep.subr.mxu0 0.0
        %2907 = vmatpush1.msra.mxu0 0.0
        %2908 = vmatprep.subr.mxu0 0.0
        %2909 = vmatpush1.msra.mxu0 0.0
        %2910 = vmatprep.subr.mxu0 0.0
        %2911 = vmatpush1.msra.mxu0 0.0
        %2912 = vmatprep.subr.mxu0 0.0
        %2913 = vmatpush1.msra.mxu0 0.0
        %2914 = vmatprep.subr.mxu0 0.0
        %2915 = vmatpush1.msra.mxu0 0.0
        %2916 = vmatprep.subr.mxu0 0.0
        %2917 = vmatpush1.msra.mxu0 0.0
        %2918 = vmatprep.subr.mxu0 0.0
        %2919 = vmatpush1.msra.mxu0 0.0
        %2920 = vmatprep.subr.mxu0 0.0
        %2921 = vmatpush1.msra.mxu0 0.0
        %2922 = vmatprep.subr.mxu0 0.0
        %2923 = vmatpush1.msra.mxu0 0.0
        %2924 = vmatprep.subr.mxu0 0.0
        %2925 = vmatpush1.msra.mxu0 0.0
        %2926 = vmatprep.subr.mxu0 0.0
        %2927 = vmatpush1.msra.mxu0 0.0
        %2928 = vmatprep.subr.mxu0 0.0
        %2929 = vmatpush1.msra.mxu0 0.0
        %2930 = vmatprep.subr.mxu0 0.0
        %2931 = vmatpush1.msra.mxu0 0.0
        %2932 = vmatprep.subr.mxu0 0.0
        %2933 = vmatpush1.msra.mxu0 0.0
        %2934 = vmatprep.subr.mxu0 0.0
        %2935 = vmatpush1.msra.mxu0 0.0
        %2936 = vmatprep.subr.mxu0 0.0
        %2937 = vmatpush1.msra.mxu0 0.0
        %2938 = vmatprep.subr.mxu0 0.0
        %2939 = vmatpush1.msra.mxu0 0.0
        %2940 = vmatprep.subr.mxu0 0.0
        %2941 = vmatpush1.msra.mxu0 0.0
        %2942 = vmatprep.subr.mxu0 0.0
        %2943 = vmatpush1.msra.mxu0 0.0
        %2944 = vmatprep.subr.mxu0 0.0
        %2945 = vmatpush1.msra.mxu0 0.0
        %2946 = vmatprep.mubr.f32.mxu0 0.0
        %2947 = vmatmul.mubr.f32.gmra.mrb[0].mxu0 %v2877
        %v2948 = vpop.f32.mrb[0].mxu0
        %v2949 = vadd.f32 %v2868, %v2948
        %v2950 = vpop.f32.mrb[0].mxu0
        %2951 = vmatprep.mubr.f32.mxu0 0.0
        %2952 = vmatmul.mubr.f32.gmra.mrb[0].mxu0 %v2880
        %v2953 = vpop.f32.mrb[0].mxu0
        %v2954 = vadd.f32 %v2873, %v2953
        %v2955 = vpop.f32.mrb[0].mxu0
        %2956 = vdwg.mxu0
        %v2958 = vsel %vm363, %v2787, 0
        %v2961 = vsel %vm363, %v2792, 0
        %2963 = vmatprep.subr.mxu0 0.0
        %2964 = vmatpush1.msra.mxu0 %v1590
        %2965 = vmatprep.subr.mxu0 0.0
        %2966 = vmatpush1.msra.mxu0 %v1591
        %2967 = vmatprep.subr.mxu0 0.0
        %2968 = vmatpush1.msra.mxu0 0.0
        %2969 = vmatprep.subr.mxu0 0.0
        %2970 = vmatpush1.msra.mxu0 0.0
        %2971 = vmatprep.subr.mxu0 0.0
        %2972 = vmatpush1.msra.mxu0 0.0
        %2973 = vmatprep.subr.mxu0 0.0
        %2974 = vmatpush1.msra.mxu0 0.0
        %2975 = vmatprep.subr.mxu0 0.0
        %2976 = vmatpush1.msra.mxu0 0.0
        %2977 = vmatprep.subr.mxu0 0.0
        %2978 = vmatpush1.msra.mxu0 0.0
        %2979 = vmatprep.subr.mxu0 0.0
        %2980 = vmatpush1.msra.mxu0 0.0
        %2981 = vmatprep.subr.mxu0 0.0
        %2982 = vmatpush1.msra.mxu0 0.0
        %2983 = vmatprep.subr.mxu0 0.0
        %2984 = vmatpush1.msra.mxu0 0.0
        %2985 = vmatprep.subr.mxu0 0.0
        %2986 = vmatpush1.msra.mxu0 0.0
        %2987 = vmatprep.subr.mxu0 0.0
        %2988 = vmatpush1.msra.mxu0 0.0
        %2989 = vmatprep.subr.mxu0 0.0
        %2990 = vmatpush1.msra.mxu0 0.0
        %2991 = vmatprep.subr.mxu0 0.0
        %2992 = vmatpush1.msra.mxu0 0.0
        %2993 = vmatprep.subr.mxu0 0.0
        %2994 = vmatpush1.msra.mxu0 0.0
        %2995 = vmatprep.subr.mxu0 0.0
        %2996 = vmatpush1.msra.mxu0 0.0
        %2997 = vmatprep.subr.mxu0 0.0
        %2998 = vmatpush1.msra.mxu0 0.0
        %2999 = vmatprep.subr.mxu0 0.0
        %3000 = vmatpush1.msra.mxu0 0.0
        %3001 = vmatprep.subr.mxu0 0.0
        %3002 = vmatpush1.msra.mxu0 0.0
        %3003 = vmatprep.subr.mxu0 0.0
        %3004 = vmatpush1.msra.mxu0 0.0
        %3005 = vmatprep.subr.mxu0 0.0
        %3006 = vmatpush1.msra.mxu0 0.0
        %3007 = vmatprep.subr.mxu0 0.0
        %3008 = vmatpush1.msra.mxu0 0.0
        %3009 = vmatprep.subr.mxu0 0.0
        %3010 = vmatpush1.msra.mxu0 0.0
        %3011 = vmatprep.subr.mxu0 0.0
        %3012 = vmatpush1.msra.mxu0 0.0
        %3013 = vmatprep.subr.mxu0 0.0
        %3014 = vmatpush1.msra.mxu0 0.0
        %3015 = vmatprep.subr.mxu0 0.0
        %3016 = vmatpush1.msra.mxu0 0.0
        %3017 = vmatprep.subr.mxu0 0.0
        %3018 = vmatpush1.msra.mxu0 0.0
        %3019 = vmatprep.subr.mxu0 0.0
        %3020 = vmatpush1.msra.mxu0 0.0
        %3021 = vmatprep.subr.mxu0 0.0
        %3022 = vmatpush1.msra.mxu0 0.0
        %3023 = vmatprep.subr.mxu0 0.0
        %3024 = vmatpush1.msra.mxu0 0.0
        %3025 = vmatprep.subr.mxu0 0.0
        %3026 = vmatpush1.msra.mxu0 0.0
        %3027 = vmatprep.mubr.f32.mxu0 0.0
        %3028 = vmatmul.mubr.f32.gmra.mrb[0].mxu0 %v2958
        %v3029 = vpop.f32.mrb[0].mxu0
        %v3030 = vadd.f32 0.0, %v3029
        %v3031 = vpop.f32.mrb[0].mxu0
        %3032 = vmatprep.mubr.f32.mxu0 0.0
        %3033 = vmatmul.mubr.f32.gmra.mrb[0].mxu0 %v2961
        %v3034 = vpop.f32.mrb[0].mxu0
        %v3035 = vadd.f32 0.0, %v3034
        %v3036 = vpop.f32.mrb[0].mxu0
        %3037 = vdwg.mxu0
        %v3038 = vadd.f32 %v2949, %v3030
        %v3039 = vadd.f32 %v2954, %v3035
        %v3040 = vadd.f32 %v1212, %v3038
        %v3041 = vadd.f32 %v1213, %v3039
        %3044 = vrot.lane.b32.xlu0 %v3040, 112
        %v3045 = vpop.permute.xlu0 %3044
        %3046 = vrot.lane.b32.xlu0 %v3041, 112
        %v3047 = vpop.permute.xlu0 %3046
        %v3050 = vmax.f32 %v3040, %v3045
        %v3051 = vmax.f32 %v3041, %v3047
        %3052 = vrot.lane.b32.xlu0 %v3040, 96
        %v3053 = vpop.permute.xlu0 %3052
        %3054 = vrot.lane.b32.xlu0 %v3041, 96
        %v3055 = vpop.permute.xlu0 %3054
        %v3058 = vmax.f32 %v3050, %v3053
        %v3059 = vmax.f32 %v3051, %v3055
        %3060 = vrot.lane.b32.xlu0 %v3040, 80
        %v3061 = vpop.permute.xlu0 %3060
        %3062 = vrot.lane.b32.xlu0 %v3041, 80
        %v3063 = vpop.permute.xlu0 %3062
        %v3066 = vmax.f32 %v3058, %v3061
        %v3067 = vmax.f32 %v3059, %v3063
        %3068 = vrot.lane.b32.xlu0 %v3040, 64
        %v3069 = vpop.permute.xlu0 %3068
        %3070 = vrot.lane.b32.xlu0 %v3041, 64
        %v3071 = vpop.permute.xlu0 %3070
        %v3074 = vmax.f32 %v3066, %v3069
        %v3075 = vmax.f32 %v3067, %v3071
        %3076 = vrot.lane.b32.xlu0 %v3040, 48
        %v3077 = vpop.permute.xlu0 %3076
        %3078 = vrot.lane.b32.xlu0 %v3041, 48
        %v3079 = vpop.permute.xlu0 %3078
        %v3082 = vmax.f32 %v3074, %v3077
        %v3083 = vmax.f32 %v3075, %v3079
        %3084 = vrot.lane.b32.xlu0 %v3040, 32
        %v3085 = vpop.permute.xlu0 %3084
        %3086 = vrot.lane.b32.xlu0 %v3041, 32
        %v3087 = vpop.permute.xlu0 %3086
        %v3090 = vmax.f32 %v3082, %v3085
        %v3091 = vmax.f32 %v3083, %v3087
        %3092 = vrot.lane.b32.xlu0 %v3040, 16
        %v3093 = vpop.permute.xlu0 %3092
        %3094 = vrot.lane.b32.xlu0 %v3041, 16
        %v3095 = vpop.permute.xlu0 %3094
        %v3098 = vmax.f32 %v3090, %v3093
        %v3099 = vmax.f32 %v3091, %v3095
        %3100 = vmatprep.subr.mxu0 0.0
        %3101 = vmatpush1.msra.mxu0 %v3098
        %3102 = vmatprep.subr.mxu0 0.0
        %3103 = vmatpush1.msra.mxu0 %v3099
        %3104 = vmatprep.subr.mxu0 0.0
        %3105 = vmatpush1.msra.mxu0 0.0
        %3106 = vmatprep.subr.mxu0 0.0
        %3107 = vmatpush1.msra.mxu0 0.0
        %3108 = vmatprep.subr.mxu0 0.0
        %3109 = vmatpush1.msra.mxu0 0.0
        %3110 = vmatprep.subr.mxu0 0.0
        %3111 = vmatpush1.msra.mxu0 0.0
        %3112 = vmatprep.subr.mxu0 0.0
        %3113 = vmatpush1.msra.mxu0 0.0
        %3114 = vmatprep.subr.mxu0 0.0
        %3115 = vmatpush1.msra.mxu0 0.0
        %3116 = vmatprep.subr.mxu0 0.0
        %3117 = vmatpush1.msra.mxu0 0.0
        %3118 = vmatprep.subr.mxu0 0.0
        %3119 = vmatpush1.msra.mxu0 0.0
        %3120 = vmatprep.subr.mxu0 0.0
        %3121 = vmatpush1.msra.mxu0 0.0
        %3122 = vmatprep.subr.mxu0 0.0
        %3123 = vmatpush1.msra.mxu0 0.0
        %3124 = vmatprep.subr.mxu0 0.0
        %3125 = vmatpush1.msra.mxu0 0.0
        %3126 = vmatprep.subr.mxu0 0.0
        %3127 = vmatpush1.msra.mxu0 0.0
        %3128 = vmatprep.subr.mxu0 0.0
        %3129 = vmatpush1.msra.mxu0 0.0
        %3130 = vmatprep.subr.mxu0 0.0
        %3131 = vmatpush1.msra.mxu0 0.0
        %3132 = vmatprep.subr.mxu0 0.0
        %3133 = vmatpush1.msra.mxu0 0.0
        %3134 = vmatprep.subr.mxu0 0.0
        %3135 = vmatpush1.msra.mxu0 0.0
        %3136 = vmatprep.subr.mxu0 0.0
        %3137 = vmatpush1.msra.mxu0 0.0
        %3138 = vmatprep.subr.mxu0 0.0
        %3139 = vmatpush1.msra.mxu0 0.0
        %3140 = vmatprep.subr.mxu0 0.0
        %3141 = vmatpush1.msra.mxu0 0.0
        %3142 = vmatprep.subr.mxu0 0.0
        %3143 = vmatpush1.msra.mxu0 0.0
        %3144 = vmatprep.subr.mxu0 0.0
        %3145 = vmatpush1.msra.mxu0 0.0
        %3146 = vmatprep.subr.mxu0 0.0
        %3147 = vmatpush1.msra.mxu0 0.0
        %3148 = vmatprep.subr.mxu0 0.0
        %3149 = vmatpush1.msra.mxu0 0.0
        %3150 = vmatprep.subr.mxu0 0.0
        %3151 = vmatpush1.msra.mxu0 0.0
        %3152 = vmatprep.subr.mxu0 0.0
        %3153 = vmatpush1.msra.mxu0 0.0
        %3154 = vmatprep.subr.mxu0 0.0
        %3155 = vmatpush1.msra.mxu0 0.0
        %3156 = vmatprep.subr.mxu0 0.0
        %3157 = vmatpush1.msra.mxu0 0.0
        %3158 = vmatprep.subr.mxu0 0.0
        %3159 = vmatpush1.msra.mxu0 0.0
        %3160 = vmatprep.subr.mxu0 0.0
        %3161 = vmatpush1.msra.mxu0 0.0
        %3162 = vmatprep.subr.mxu0 0.0
        %3163 = vmatpush1.msra.mxu0 0.0
        %3164 = vmatprep.mubr.f32.mxu0 0.0
        %3165 = vmatmul.mubr.f32.gmra.mrb[0].mxu0 %v365
        %v3166 = vpop.f32.mrb[0].mxu0
        %v3167 = vadd.f32 0.0, %v3166
        %v3168 = vpop.f32.mrb[0].mxu0
        %3169 = vmatprep.mubr.f32.mxu0 0.0
        %3170 = vmatmul.mubr.f32.gmra.mrb[0].mxu0 %v368
        %v3171 = vpop.f32.mrb[0].mxu0
        %v3172 = vadd.f32 0.0, %v3171
        %v3173 = vpop.f32.mrb[0].mxu0
        %3174 = vdwg.mxu0
        %3175 = vmatprep.subr.mxu0 0.0
        %3176 = vmatpush1.msra.mxu0 %v3098
        %3177 = vmatprep.subr.mxu0 0.0
        %3178 = vmatpush1.msra.mxu0 %v3099
        %3179 = vmatprep.subr.mxu0 0.0
        %3180 = vmatpush1.msra.mxu0 0.0
        %3181 = vmatprep.subr.mxu0 0.0
        %3182 = vmatpush1.msra.mxu0 0.0
        %3183 = vmatprep.subr.mxu0 0.0
        %3184 = vmatpush1.msra.mxu0 0.0
        %3185 = vmatprep.subr.mxu0 0.0
        %3186 = vmatpush1.msra.mxu0 0.0
        %3187 = vmatprep.subr.mxu0 0.0
        %3188 = vmatpush1.msra.mxu0 0.0
        %3189 = vmatprep.subr.mxu0 0.0
        %3190 = vmatpush1.msra.mxu0 0.0
        %3191 = vmatprep.subr.mxu0 0.0
        %3192 = vmatpush1.msra.mxu0 0.0
        %3193 = vmatprep.subr.mxu0 0.0
        %3194 = vmatpush1.msra.mxu0 0.0
        %3195 = vmatprep.subr.mxu0 0.0
        %3196 = vmatpush1.msra.mxu0 0.0
        %3197 = vmatprep.subr.mxu0 0.0
        %3198 = vmatpush1.msra.mxu0 0.0
        %3199 = vmatprep.subr.mxu0 0.0
        %3200 = vmatpush1.msra.mxu0 0.0
        %3201 = vmatprep.subr.mxu0 0.0
        %3202 = vmatpush1.msra.mxu0 0.0
        %3203 = vmatprep.subr.mxu0 0.0
        %3204 = vmatpush1.msra.mxu0 0.0
        %3205 = vmatprep.subr.mxu0 0.0
        %3206 = vmatpush1.msra.mxu0 0.0
        %3207 = vmatprep.subr.mxu0 0.0
        %3208 = vmatpush1.msra.mxu0 0.0
        %3209 = vmatprep.subr.mxu0 0.0
        %3210 = vmatpush1.msra.mxu0 0.0
        %3211 = vmatprep.subr.mxu0 0.0
        %3212 = vmatpush1.msra.mxu0 0.0
        %3213 = vmatprep.subr.mxu0 0.0
        %3214 = vmatpush1.msra.mxu0 0.0
        %3215 = vmatprep.subr.mxu0 0.0
        %3216 = vmatpush1.msra.mxu0 0.0
        %3217 = vmatprep.subr.mxu0 0.0
        %3218 = vmatpush1.msra.mxu0 0.0
        %3219 = vmatprep.subr.mxu0 0.0
        %3220 = vmatpush1.msra.mxu0 0.0
        %3221 = vmatprep.subr.mxu0 0.0
        %3222 = vmatpush1.msra.mxu0 0.0
        %3223 = vmatprep.subr.mxu0 0.0
        %3224 = vmatpush1.msra.mxu0 0.0
        %3225 = vmatprep.subr.mxu0 0.0
        %3226 = vmatpush1.msra.mxu0 0.0
        %3227 = vmatprep.subr.mxu0 0.0
        %3228 = vmatpush1.msra.mxu0 0.0
        %3229 = vmatprep.subr.mxu0 0.0
        %3230 = vmatpush1.msra.mxu0 0.0
        %3231 = vmatprep.subr.mxu0 0.0
        %3232 = vmatpush1.msra.mxu0 0.0
        %3233 = vmatprep.subr.mxu0 0.0
        %3234 = vmatpush1.msra.mxu0 0.0
        %3235 = vmatprep.subr.mxu0 0.0
        %3236 = vmatpush1.msra.mxu0 0.0
        %3237 = vmatprep.subr.mxu0 0.0
        %3238 = vmatpush1.msra.mxu0 0.0
        %3239 = vmatprep.mubr.f32.mxu0 0.0
        %3240 = vmatmul.mubr.f32.gmra.mrb[0].mxu0 %v446
        %v3241 = vpop.f32.mrb[0].mxu0
        %v3242 = vadd.f32 0.0, %v3241
        %v3243 = vpop.f32.mrb[0].mxu0
        %3244 = vmatprep.mubr.f32.mxu0 0.0
        %3245 = vmatmul.mubr.f32.gmra.mrb[0].mxu0 %v449
        %v3246 = vpop.f32.mrb[0].mxu0
        %v3247 = vadd.f32 0.0, %v3246
        %v3248 = vpop.f32.mrb[0].mxu0
        %3249 = vdwg.mxu0
        %v3251 = vsel %vm363, %v3098, 0
        %v3254 = vsel %vm363, %v3099, 0
        %3256 = vmatprep.subr.mxu0 0.0
        %3257 = vmatpush1.msra.mxu0 %v1425
        %3258 = vmatprep.subr.mxu0 0.0
        %3259 = vmatpush1.msra.mxu0 %v1426
        %3260 = vmatprep.subr.mxu0 0.0
        %3261 = vmatpush1.msra.mxu0 0.0
        %3262 = vmatprep.subr.mxu0 0.0
        %3263 = vmatpush1.msra.mxu0 0.0
        %3264 = vmatprep.subr.mxu0 0.0
        %3265 = vmatpush1.msra.mxu0 0.0
        %3266 = vmatprep.subr.mxu0 0.0
        %3267 = vmatpush1.msra.mxu0 0.0
        %3268 = vmatprep.subr.mxu0 0.0
        %3269 = vmatpush1.msra.mxu0 0.0
        %3270 = vmatprep.subr.mxu0 0.0
        %3271 = vmatpush1.msra.mxu0 0.0
        %3272 = vmatprep.subr.mxu0 0.0
        %3273 = vmatpush1.msra.mxu0 0.0
        %3274 = vmatprep.subr.mxu0 0.0
        %3275 = vmatpush1.msra.mxu0 0.0
        %3276 = vmatprep.subr.mxu0 0.0
        %3277 = vmatpush1.msra.mxu0 0.0
        %3278 = vmatprep.subr.mxu0 0.0
        %3279 = vmatpush1.msra.mxu0 0.0
        %3280 = vmatprep.subr.mxu0 0.0
        %3281 = vmatpush1.msra.mxu0 0.0
        %3282 = vmatprep.subr.mxu0 0.0
        %3283 = vmatpush1.msra.mxu0 0.0
        %3284 = vmatprep.subr.mxu0 0.0
        %3285 = vmatpush1.msra.mxu0 0.0
        %3286 = vmatprep.subr.mxu0 0.0
        %3287 = vmatpush1.msra.mxu0 0.0
        %3288 = vmatprep.subr.mxu0 0.0
        %3289 = vmatpush1.msra.mxu0 0.0
        %3290 = vmatprep.subr.mxu0 0.0
        %3291 = vmatpush1.msra.mxu0 0.0
        %3292 = vmatprep.subr.mxu0 0.0
        %3293 = vmatpush1.msra.mxu0 0.0
        %3294 = vmatprep.subr.mxu0 0.0
        %3295 = vmatpush1.msra.mxu0 0.0
        %3296 = vmatprep.subr.mxu0 0.0
        %3297 = vmatpush1.msra.mxu0 0.0
        %3298 = vmatprep.subr.mxu0 0.0
        %3299 = vmatpush1.msra.mxu0 0.0
        %3300 = vmatprep.subr.mxu0 0.0
        %3301 = vmatpush1.msra.mxu0 0.0
        %3302 = vmatprep.subr.mxu0 0.0
        %3303 = vmatpush1.msra.mxu0 0.0
        %3304 = vmatprep.subr.mxu0 0.0
        %3305 = vmatpush1.msra.mxu0 0.0
        %3306 = vmatprep.subr.mxu0 0.0
        %3307 = vmatpush1.msra.mxu0 0.0
        %3308 = vmatprep.subr.mxu0 0.0
        %3309 = vmatpush1.msra.mxu0 0.0
        %3310 = vmatprep.subr.mxu0 0.0
        %3311 = vmatpush1.msra.mxu0 0.0
        %3312 = vmatprep.subr.mxu0 0.0
        %3313 = vmatpush1.msra.mxu0 0.0
        %3314 = vmatprep.subr.mxu0 0.0
        %3315 = vmatpush1.msra.mxu0 0.0
        %3316 = vmatprep.subr.mxu0 0.0
        %3317 = vmatpush1.msra.mxu0 0.0
        %3318 = vmatprep.subr.mxu0 0.0
        %3319 = vmatpush1.msra.mxu0 0.0
        %3320 = vmatprep.mubr.f32.mxu0 0.0
        %3321 = vmatmul.mubr.f32.gmra.mrb[0].mxu0 %v3251
        %v3322 = vpop.f32.mrb[0].mxu0
        %v3323 = vadd.f32 0.0, %v3322
        %v3324 = vpop.f32.mrb[0].mxu0
        %3325 = vmatprep.mubr.f32.mxu0 0.0
        %3326 = vmatmul.mubr.f32.gmra.mrb[0].mxu0 %v3254
        %v3327 = vpop.f32.mrb[0].mxu0
        %v3328 = vadd.f32 0.0, %v3327
        %v3329 = vpop.f32.mrb[0].mxu0
        %3330 = vdwg.mxu0
        %v3332 = vsel %vm363, %v3167, 0
        %v3335 = vsel %vm363, %v3172, 0
        %3337 = vmatprep.subr.mxu0 0.0
        %3338 = vmatpush1.msra.mxu0 %v1422
        %3339 = vmatprep.subr.mxu0 0.0
        %3340 = vmatpush1.msra.mxu0 %v1423
        %3341 = vmatprep.subr.mxu0 0.0
        %3342 = vmatpush1.msra.mxu0 0.0
        %3343 = vmatprep.subr.mxu0 0.0
        %3344 = vmatpush1.msra.mxu0 0.0
        %3345 = vmatprep.subr.mxu0 0.0
        %3346 = vmatpush1.msra.mxu0 0.0
        %3347 = vmatprep.subr.mxu0 0.0
        %3348 = vmatpush1.msra.mxu0 0.0
        %3349 = vmatprep.subr.mxu0 0.0
        %3350 = vmatpush1.msra.mxu0 0.0
        %3351 = vmatprep.subr.mxu0 0.0
        %3352 = vmatpush1.msra.mxu0 0.0
        %3353 = vmatprep.subr.mxu0 0.0
        %3354 = vmatpush1.msra.mxu0 0.0
        %3355 = vmatprep.subr.mxu0 0.0
        %3356 = vmatpush1.msra.mxu0 0.0
        %3357 = vmatprep.subr.mxu0 0.0
        %3358 = vmatpush1.msra.mxu0 0.0
        %3359 = vmatprep.subr.mxu0 0.0
        %3360 = vmatpush1.msra.mxu0 0.0
        %3361 = vmatprep.subr.mxu0 0.0
        %3362 = vmatpush1.msra.mxu0 0.0
        %3363 = vmatprep.subr.mxu0 0.0
        %3364 = vmatpush1.msra.mxu0 0.0
        %3365 = vmatprep.subr.mxu0 0.0
        %3366 = vmatpush1.msra.mxu0 0.0
        %3367 = vmatprep.subr.mxu0 0.0
        %3368 = vmatpush1.msra.mxu0 0.0
        %3369 = vmatprep.subr.mxu0 0.0
        %3370 = vmatpush1.msra.mxu0 0.0
        %3371 = vmatprep.subr.mxu0 0.0
        %3372 = vmatpush1.msra.mxu0 0.0
        %3373 = vmatprep.subr.mxu0 0.0
        %3374 = vmatpush1.msra.mxu0 0.0
        %3375 = vmatprep.subr.mxu0 0.0
        %3376 = vmatpush1.msra.mxu0 0.0
        %3377 = vmatprep.subr.mxu0 0.0
        %3378 = vmatpush1.msra.mxu0 0.0
        %3379 = vmatprep.subr.mxu0 0.0
        %3380 = vmatpush1.msra.mxu0 0.0
        %3381 = vmatprep.subr.mxu0 0.0
        %3382 = vmatpush1.msra.mxu0 0.0
        %3383 = vmatprep.subr.mxu0 0.0
        %3384 = vmatpush1.msra.mxu0 0.0
        %3385 = vmatprep.subr.mxu0 0.0
        %3386 = vmatpush1.msra.mxu0 0.0
        %3387 = vmatprep.subr.mxu0 0.0
        %3388 = vmatpush1.msra.mxu0 0.0
        %3389 = vmatprep.subr.mxu0 0.0
        %3390 = vmatpush1.msra.mxu0 0.0
        %3391 = vmatprep.subr.mxu0 0.0
        %3392 = vmatpush1.msra.mxu0 0.0
        %3393 = vmatprep.subr.mxu0 0.0
        %3394 = vmatpush1.msra.mxu0 0.0
        %3395 = vmatprep.subr.mxu0 0.0
        %3396 = vmatpush1.msra.mxu0 0.0
        %3397 = vmatprep.subr.mxu0 0.0
        %3398 = vmatpush1.msra.mxu0 0.0
        %3399 = vmatprep.subr.mxu0 0.0
        %3400 = vmatpush1.msra.mxu0 0.0
        %3401 = vmatprep.mubr.f32.mxu0 0.0
        %3402 = vmatmul.mubr.f32.gmra.mrb[0].mxu0 %v3332
        %v3403 = vpop.f32.mrb[0].mxu0
        %v3404 = vadd.f32 %v3323, %v3403
        %v3405 = vpop.f32.mrb[0].mxu0
        %3406 = vmatprep.mubr.f32.mxu0 0.0
        %3407 = vmatmul.mubr.f32.gmra.mrb[0].mxu0 %v3335
        %v3408 = vpop.f32.mrb[0].mxu0
        %v3409 = vadd.f32 %v3328, %v3408
        %v3410 = vpop.f32.mrb[0].mxu0
        %3411 = vdwg.mxu0
        %v3413 = vsel %vm363, %v3242, 0
        %v3416 = vsel %vm363, %v3247, 0
        %3418 = vmatprep.subr.mxu0 0.0
        %3419 = vmatpush1.msra.mxu0 %v1590
        %3420 = vmatprep.subr.mxu0 0.0
        %3421 = vmatpush1.msra.mxu0 %v1591
        %3422 = vmatprep.subr.mxu0 0.0
        %3423 = vmatpush1.msra.mxu0 0.0
        %3424 = vmatprep.subr.mxu0 0.0
        %3425 = vmatpush1.msra.mxu0 0.0
        %3426 = vmatprep.subr.mxu0 0.0
        %3427 = vmatpush1.msra.mxu0 0.0
        %3428 = vmatprep.subr.mxu0 0.0
        %3429 = vmatpush1.msra.mxu0 0.0
        %3430 = vmatprep.subr.mxu0 0.0
        %3431 = vmatpush1.msra.mxu0 0.0
        %3432 = vmatprep.subr.mxu0 0.0
        %3433 = vmatpush1.msra.mxu0 0.0
        %3434 = vmatprep.subr.mxu0 0.0
        %3435 = vmatpush1.msra.mxu0 0.0
        %3436 = vmatprep.subr.mxu0 0.0
        %3437 = vmatpush1.msra.mxu0 0.0
        %3438 = vmatprep.subr.mxu0 0.0
        %3439 = vmatpush1.msra.mxu0 0.0
        %3440 = vmatprep.subr.mxu0 0.0
        %3441 = vmatpush1.msra.mxu0 0.0
        %3442 = vmatprep.subr.mxu0 0.0
        %3443 = vmatpush1.msra.mxu0 0.0
        %3444 = vmatprep.subr.mxu0 0.0
        %3445 = vmatpush1.msra.mxu0 0.0
        %3446 = vmatprep.subr.mxu0 0.0
        %3447 = vmatpush1.msra.mxu0 0.0
        %3448 = vmatprep.subr.mxu0 0.0
        %3449 = vmatpush1.msra.mxu0 0.0
        %3450 = vmatprep.subr.mxu0 0.0
        %3451 = vmatpush1.msra.mxu0 0.0
        %3452 = vmatprep.subr.mxu0 0.0
        %3453 = vmatpush1.msra.mxu0 0.0
        %3454 = vmatprep.subr.mxu0 0.0
        %3455 = vmatpush1.msra.mxu0 0.0
        %3456 = vmatprep.subr.mxu0 0.0
        %3457 = vmatpush1.msra.mxu0 0.0
        %3458 = vmatprep.subr.mxu0 0.0
        %3459 = vmatpush1.msra.mxu0 0.0
        %3460 = vmatprep.subr.mxu0 0.0
        %3461 = vmatpush1.msra.mxu0 0.0
        %3462 = vmatprep.subr.mxu0 0.0
        %3463 = vmatpush1.msra.mxu0 0.0
        %3464 = vmatprep.subr.mxu0 0.0
        %3465 = vmatpush1.msra.mxu0 0.0
        %3466 = vmatprep.subr.mxu0 0.0
        %3467 = vmatpush1.msra.mxu0 0.0
        %3468 = vmatprep.subr.mxu0 0.0
        %3469 = vmatpush1.msra.mxu0 0.0
        %3470 = vmatprep.subr.mxu0 0.0
        %3471 = vmatpush1.msra.mxu0 0.0
        %3472 = vmatprep.subr.mxu0 0.0
        %3473 = vmatpush1.msra.mxu0 0.0
        %3474 = vmatprep.subr.mxu0 0.0
        %3475 = vmatpush1.msra.mxu0 0.0
        %3476 = vmatprep.subr.mxu0 0.0
        %3477 = vmatpush1.msra.mxu0 0.0
        %3478 = vmatprep.subr.mxu0 0.0
        %3479 = vmatpush1.msra.mxu0 0.0
        %3480 = vmatprep.subr.mxu0 0.0
        %3481 = vmatpush1.msra.mxu0 0.0
        %3482 = vmatprep.mubr.f32.mxu0 0.0
        %3483 = vmatmul.mubr.f32.gmra.mrb[0].mxu0 %v3413
        %v3484 = vpop.f32.mrb[0].mxu0
        %v3485 = vadd.f32 0.0, %v3484
        %v3486 = vpop.f32.mrb[0].mxu0
        %3487 = vmatprep.mubr.f32.mxu0 0.0
        %3488 = vmatmul.mubr.f32.gmra.mrb[0].mxu0 %v3416
        %v3489 = vpop.f32.mrb[0].mxu0
        %v3490 = vadd.f32 0.0, %v3489
        %v3491 = vpop.f32.mrb[0].mxu0
        %3492 = vdwg.mxu0
        %v3493 = vadd.f32 %v3404, %v3485
        %v3494 = vadd.f32 %v3409, %v3490
        %v3495 = vadd.f32 %v1212, %v3493
        %v3496 = vadd.f32 %v1213, %v3494
        %s3497 = sld [smem:[#allocation2 + %s28]]
        %s3498 = sld [smem:[#allocation5 + %s28]]
        %v3499 = vstv %s3497
        %vm3500 = vcmp.eq.s32.totalorder %v344, %v3499
        %v3501 = vsel %vm3500, 1, 0
        %v3502 = vcvt.s32.f32 %v3501
        %v3504 = vsel %vm363, %v3502, 0
        %3506 = vmatprep.subr.mxu0 0.0
        %3507 = vmatpush1.msra.mxu0 %v3495
        %3508 = vmatprep.subr.mxu0 0.0
        %3509 = vmatpush1.msra.mxu0 %v3496
        %3510 = vmatprep.subr.mxu0 0.0
        %3511 = vmatpush1.msra.mxu0 0.0
        %3512 = vmatprep.subr.mxu0 0.0
        %3513 = vmatpush1.msra.mxu0 0.0
        %3514 = vmatprep.subr.mxu0 0.0
        %3515 = vmatpush1.msra.mxu0 0.0
        %3516 = vmatprep.subr.mxu0 0.0
        %3517 = vmatpush1.msra.mxu0 0.0
        %3518 = vmatprep.subr.mxu0 0.0
        %3519 = vmatpush1.msra.mxu0 0.0
        %3520 = vmatprep.subr.mxu0 0.0
        %3521 = vmatpush1.msra.mxu0 0.0
        %3522 = vmatprep.subr.mxu0 0.0
        %3523 = vmatpush1.msra.mxu0 0.0
        %3524 = vmatprep.subr.mxu0 0.0
        %3525 = vmatpush1.msra.mxu0 0.0
        %3526 = vmatprep.subr.mxu0 0.0
        %3527 = vmatpush1.msra.mxu0 0.0
        %3528 = vmatprep.subr.mxu0 0.0
        %3529 = vmatpush1.msra.mxu0 0.0
        %3530 = vmatprep.subr.mxu0 0.0
        %3531 = vmatpush1.msra.mxu0 0.0
        %3532 = vmatprep.subr.mxu0 0.0
        %3533 = vmatpush1.msra.mxu0 0.0
        %3534 = vmatprep.subr.mxu0 0.0
        %3535 = vmatpush1.msra.mxu0 0.0
        %3536 = vmatprep.subr.mxu0 0.0
        %3537 = vmatpush1.msra.mxu0 0.0
        %3538 = vmatprep.subr.mxu0 0.0
        %3539 = vmatpush1.msra.mxu0 0.0
        %3540 = vmatprep.subr.mxu0 0.0
        %3541 = vmatpush1.msra.mxu0 0.0
        %3542 = vmatprep.subr.mxu0 0.0
        %3543 = vmatpush1.msra.mxu0 0.0
        %3544 = vmatprep.subr.mxu0 0.0
        %3545 = vmatpush1.msra.mxu0 0.0
        %3546 = vmatprep.subr.mxu0 0.0
        %3547 = vmatpush1.msra.mxu0 0.0
        %3548 = vmatprep.subr.mxu0 0.0
        %3549 = vmatpush1.msra.mxu0 0.0
        %3550 = vmatprep.subr.mxu0 0.0
        %3551 = vmatpush1.msra.mxu0 0.0
        %3552 = vmatprep.subr.mxu0 0.0
        %3553 = vmatpush1.msra.mxu0 0.0
        %3554 = vmatprep.subr.mxu0 0.0
        %3555 = vmatpush1.msra.mxu0 0.0
        %3556 = vmatprep.subr.mxu0 0.0
        %3557 = vmatpush1.msra.mxu0 0.0
        %3558 = vmatprep.subr.mxu0 0.0
        %3559 = vmatpush1.msra.mxu0 0.0
        %3560 = vmatprep.subr.mxu0 0.0
        %3561 = vmatpush1.msra.mxu0 0.0
        %3562 = vmatprep.subr.mxu0 0.0
        %3563 = vmatpush1.msra.mxu0 0.0
        %3564 = vmatprep.subr.mxu0 0.0
        %3565 = vmatpush1.msra.mxu0 0.0
        %3566 = vmatprep.subr.mxu0 0.0
        %3567 = vmatpush1.msra.mxu0 0.0
        %3568 = vmatprep.subr.mxu0 0.0
        %3569 = vmatpush1.msra.mxu0 0.0
        %3570 = vmatprep.mubr.f32.mxu0 0.0
        %3571 = vmatmul.mubr.f32.gmra.mrb[0].mxu0 %v3504
        %v3572 = vpop.f32.mrb[0].mxu0
        %v3573 = vadd.f32 0.0, %v3572
        %v3574 = vpop.f32.mrb[0].mxu0
        %3575 = vdwg.mxu0
        %v3576 = vadd.s32 %v341, 16
        %v3577 = vadd.s32 %v341, 24
        %v3578 = vadd.s32 %v341, 32
        %v3579 = vadd.s32 %v341, 40
        %v3580 = vadd.s32 %v341, 48
        %v3581 = vadd.s32 %v341, 56
        %v3582 = vadd.s32 %v341, 64
        %v3583 = vadd.s32 %v341, 72
        %v3584 = vadd.s32 %v341, 80
        %v3585 = vadd.s32 %v341, 88
        %v3586 = vadd.s32 %v341, 96
        %v3587 = vadd.s32 %v341, 104
        %v3588 = vadd.s32 %v341, 112
        %v3589 = vadd.s32 %v341, 120
        %v3590 = vmul.u32 %v344, 16
        %v3591 = vstv %s3498
        %v3592 = vadd.s32 %v3590, %v3591
        %vm3593 = vcmp.eq.s32.totalorder %v341, %v3592
        %vm3594 = vcmp.eq.s32.totalorder %v342, %v3592
        %vm3595 = vcmp.eq.s32.totalorder %v3576, %v3592
        %vm3596 = vcmp.eq.s32.totalorder %v3577, %v3592
        %vm3597 = vcmp.eq.s32.totalorder %v3578, %v3592
        %vm3598 = vcmp.eq.s32.totalorder %v3579, %v3592
        %vm3599 = vcmp.eq.s32.totalorder %v3580, %v3592
        %vm3600 = vcmp.eq.s32.totalorder %v3581, %v3592
        %vm3601 = vcmp.eq.s32.totalorder %v3582, %v3592
        %vm3602 = vcmp.eq.s32.totalorder %v3583, %v3592
        %vm3603 = vcmp.eq.s32.totalorder %v3584, %v3592
        %vm3604 = vcmp.eq.s32.totalorder %v3585, %v3592
        %vm3605 = vcmp.eq.s32.totalorder %v3586, %v3592
        %vm3606 = vcmp.eq.s32.totalorder %v3587, %v3592
        %vm3607 = vcmp.eq.s32.totalorder %v3588, %v3592
        %vm3608 = vcmp.eq.s32.totalorder %v3589, %v3592
        %v3609 = vsel %vm3593, 1, 0
        %v3610 = vsel %vm3594, 1, 0
        %v3611 = vsel %vm3595, 1, 0
        %v3612 = vsel %vm3596, 1, 0
        %v3613 = vsel %vm3597, 1, 0
        %v3614 = vsel %vm3598, 1, 0
        %v3615 = vsel %vm3599, 1, 0
        %v3616 = vsel %vm3600, 1, 0
        %v3617 = vsel %vm3601, 1, 0
        %v3618 = vsel %vm3602, 1, 0
        %v3619 = vsel %vm3603, 1, 0
        %v3620 = vsel %vm3604, 1, 0
        %v3621 = vsel %vm3605, 1, 0
        %v3622 = vsel %vm3606, 1, 0
        %v3623 = vsel %vm3607, 1, 0
        %v3624 = vsel %vm3608, 1, 0
        %v3625 = vcvt.s32.f32 %v3609
        %v3626 = vcvt.s32.f32 %v3610
        %v3627 = vcvt.s32.f32 %v3611
        %v3628 = vcvt.s32.f32 %v3612
        %v3629 = vcvt.s32.f32 %v3613
        %v3630 = vcvt.s32.f32 %v3614
        %v3631 = vcvt.s32.f32 %v3615
        %v3632 = vcvt.s32.f32 %v3616
        %v3633 = vcvt.s32.f32 %v3617
        %v3634 = vcvt.s32.f32 %v3618
        %v3635 = vcvt.s32.f32 %v3619
        %v3636 = vcvt.s32.f32 %v3620
        %v3637 = vcvt.s32.f32 %v3621
        %v3638 = vcvt.s32.f32 %v3622
        %v3639 = vcvt.s32.f32 %v3623
        %v3640 = vcvt.s32.f32 %v3624
        %3641 = vmatprep.subr.mxu0 0.0
        %3642 = vmatpush1.msra.mxu0 %v3625
        %3643 = vmatprep.subr.mxu0 0.0
        %3644 = vmatpush1.msra.mxu0 %v3626
        %3645 = vmatprep.subr.mxu0 0.0
        %3646 = vmatpush1.msra.mxu0 %v3627
        %3647 = vmatprep.subr.mxu0 0.0
        %3648 = vmatpush1.msra.mxu0 %v3628
        %3649 = vmatprep.subr.mxu0 0.0
        %3650 = vmatpush1.msra.mxu0 %v3629
        %3651 = vmatprep.subr.mxu0 0.0
        %3652 = vmatpush1.msra.mxu0 %v3630
        %3653 = vmatprep.subr.mxu0 0.0
        %3654 = vmatpush1.msra.mxu0 %v3631
        %3655 = vmatprep.subr.mxu0 0.0
        %3656 = vmatpush1.msra.mxu0 %v3632
        %3657 = vmatprep.subr.mxu0 0.0
        %3658 = vmatpush1.msra.mxu0 %v3633
        %3659 = vmatprep.subr.mxu0 0.0
        %3660 = vmatpush1.msra.mxu0 %v3634
        %3661 = vmatprep.subr.mxu0 0.0
        %3662 = vmatpush1.msra.mxu0 %v3635
        %3663 = vmatprep.subr.mxu0 0.0
        %3664 = vmatpush1.msra.mxu0 %v3636
        %3665 = vmatprep.subr.mxu0 0.0
        %3666 = vmatpush1.msra.mxu0 %v3637
        %3667 = vmatprep.subr.mxu0 0.0
        %3668 = vmatpush1.msra.mxu0 %v3638
        %3669 = vmatprep.subr.mxu0 0.0
        %3670 = vmatpush1.msra.mxu0 %v3639
        %3671 = vmatprep.subr.mxu0 0.0
        %3672 = vmatpush1.msra.mxu0 %v3640
        %3673 = vmatprep.subr.mxu0 0.0
        %3674 = vmatpush1.msra.mxu0 0.0
        %3675 = vmatprep.subr.mxu0 0.0
        %3676 = vmatpush1.msra.mxu0 0.0
        %3677 = vmatprep.subr.mxu0 0.0
        %3678 = vmatpush1.msra.mxu0 0.0
        %3679 = vmatprep.subr.mxu0 0.0
        %3680 = vmatpush1.msra.mxu0 0.0
        %3681 = vmatprep.subr.mxu0 0.0
        %3682 = vmatpush1.msra.mxu0 0.0
        %3683 = vmatprep.subr.mxu0 0.0
        %3684 = vmatpush1.msra.mxu0 0.0
        %3685 = vmatprep.subr.mxu0 0.0
        %3686 = vmatpush1.msra.mxu0 0.0
        %3687 = vmatprep.subr.mxu0 0.0
        %3688 = vmatpush1.msra.mxu0 0.0
        %3689 = vmatprep.subr.mxu0 0.0
        %3690 = vmatpush1.msra.mxu0 0.0
        %3691 = vmatprep.subr.mxu0 0.0
        %3692 = vmatpush1.msra.mxu0 0.0
        %3693 = vmatprep.subr.mxu0 0.0
        %3694 = vmatpush1.msra.mxu0 0.0
        %3695 = vmatprep.subr.mxu0 0.0
        %3696 = vmatpush1.msra.mxu0 0.0
        %3697 = vmatprep.subr.mxu0 0.0
        %3698 = vmatpush1.msra.mxu0 0.0
        %3699 = vmatprep.subr.mxu0 0.0
        %3700 = vmatpush1.msra.mxu0 0.0
        %3701 = vmatprep.subr.mxu0 0.0
        %3702 = vmatpush1.msra.mxu0 0.0
        %3703 = vmatprep.subr.mxu0 0.0
        %3704 = vmatpush1.msra.mxu0 0.0
        %3705 = vmatprep.mubr.f32.mxu0 0.0
        %3706 = vmatmul.mubr.f32.gmra.mrb[0].mxu0 %v3573
        %v3707 = vpop.f32.mrb[0].mxu0
        %v3708 = vadd.f32 0.0, %v3707
        %v3709 = vpop.f32.mrb[0].mxu0
        %3710 = vdwg.mxu0
        %v3711 = vld [vmem:[%s4] sm:$0xff]
        %vm3712 = vcmask 64512
        %v3714 = vsel %vm3712, %v3708, 0
        %3716 = vmatprep.subr.mxu0 0.0
        %3717 = vmatpush1.msra.mxu0 %v3711
        %3718 = vmatprep.subr.mxu0 0.0
        %3719 = vmatpush1.msra.mxu0 0.0
        %3720 = vmatprep.subr.mxu0 0.0
        %3721 = vmatpush1.msra.mxu0 0.0
        %3722 = vmatprep.subr.mxu0 0.0
        %3723 = vmatpush1.msra.mxu0 0.0
        %3724 = vmatprep.subr.mxu0 0.0
        %3725 = vmatpush1.msra.mxu0 0.0
        %3726 = vmatprep.subr.mxu0 0.0
        %3727 = vmatpush1.msra.mxu0 0.0
        %3728 = vmatprep.subr.mxu0 0.0
        %3729 = vmatpush1.msra.mxu0 0.0
        %3730 = vmatprep.subr.mxu0 0.0
        %3731 = vmatpush1.msra.mxu0 0.0
        %3732 = vmatprep.subr.mxu0 0.0
        %3733 = vmatpush1.msra.mxu0 0.0
        %3734 = vmatprep.subr.mxu0 0.0
        %3735 = vmatpush1.msra.mxu0 0.0
        %3736 = vmatprep.subr.mxu0 0.0
        %3737 = vmatpush1.msra.mxu0 0.0
        %3738 = vmatprep.subr.mxu0 0.0
        %3739 = vmatpush1.msra.mxu0 0.0
        %3740 = vmatprep.subr.mxu0 0.0
        %3741 = vmatpush1.msra.mxu0 0.0
        %3742 = vmatprep.subr.mxu0 0.0
        %3743 = vmatpush1.msra.mxu0 0.0
        %3744 = vmatprep.subr.mxu0 0.0
        %3745 = vmatpush1.msra.mxu0 0.0
        %3746 = vmatprep.subr.mxu0 0.0
        %3747 = vmatpush1.msra.mxu0 0.0
        %3748 = vmatprep.subr.mxu0 0.0
        %3749 = vmatpush1.msra.mxu0 0.0
        %3750 = vmatprep.subr.mxu0 0.0
        %3751 = vmatpush1.msra.mxu0 0.0
        %3752 = vmatprep.subr.mxu0 0.0
        %3753 = vmatpush1.msra.mxu0 0.0
        %3754 = vmatprep.subr.mxu0 0.0
        %3755 = vmatpush1.msra.mxu0 0.0
        %3756 = vmatprep.subr.mxu0 0.0
        %3757 = vmatpush1.msra.mxu0 0.0
        %3758 = vmatprep.subr.mxu0 0.0
        %3759 = vmatpush1.msra.mxu0 0.0
        %3760 = vmatprep.subr.mxu0 0.0
        %3761 = vmatpush1.msra.mxu0 0.0
        %3762 = vmatprep.subr.mxu0 0.0
        %3763 = vmatpush1.msra.mxu0 0.0
        %3764 = vmatprep.subr.mxu0 0.0
        %3765 = vmatpush1.msra.mxu0 0.0
        %3766 = vmatprep.subr.mxu0 0.0
        %3767 = vmatpush1.msra.mxu0 0.0
        %3768 = vmatprep.subr.mxu0 0.0
        %3769 = vmatpush1.msra.mxu0 0.0
        %3770 = vmatprep.subr.mxu0 0.0
        %3771 = vmatpush1.msra.mxu0 0.0
        %3772 = vmatprep.subr.mxu0 0.0
        %3773 = vmatpush1.msra.mxu0 0.0
        %3774 = vmatprep.subr.mxu0 0.0
        %3775 = vmatpush1.msra.mxu0 0.0
        %3776 = vmatprep.subr.mxu0 0.0
        %3777 = vmatpush1.msra.mxu0 0.0
        %3778 = vmatprep.subr.mxu0 0.0
        %3779 = vmatpush1.msra.mxu0 0.0
        %3780 = vmatprep.mubr.f32.mxu0 0.0
        %3781 = vmatmul.mubr.f32.gmra.mrb[0].mxu0 %v3714
        %v3782 = vpop.f32.mrb[0].mxu0
        %v3783 = vadd.f32 0.0, %v3782
        %v3784 = vpop.f32.mrb[0].mxu0
        %3785 = vdwg.mxu0
        %vm3786 = vcmask 57344
        %v3787 = vsel %vm3786, %v3783, -inf
        %3788 = vmax.xlane.f32.xlu0 %v3787
        %v3789 = vpop.xlane.xlu0 %3788
        %v3790 = vsub.f32 %v3783, %v3789
        %v3791 = vmul.f32 %v3790, 1.442695
        %v3792 = vpow.pop %v3791
        %v3793 = vsel %vm3786, %v3792, 0.0
        %3794 = vadd.xlane.f32.xlu0 %v3793
        %v3795 = vpop.xlane.xlu0 %3794
        %v3796 = vrcp.pop %v3795
        %v3797 = vmul.f32 %v3792, %v3796
        %3798 = vst.msk [vmem:[%s328] sm:$0x1] %vm3786, %v3783
        %3799 = vst.msk [vmem:[%s334] sm:$0x1] %vm3786, %v3797
        %s3800 = sand.u32 %s188, 1
        %s3801 = scalar_lea.sflag [#allocation3], %s3800
        %s3802 = sand.u32 %s188, 1
        %s3803 = scalar_lea.vmem [#allocation7], %s3802
        %s3804 = sand.u32 %s214, 1
        %s3805 = scalar_lea.sflag [#allocation9], %s3804
        %s3806 = sand.u32 %s214, 1
        %s3807 = scalar_lea.vmem [#allocation8], %s3806
        // Predicated region
        $region57: #{tpu_custom_call.1} parent=47 // pred_check
          %p3808 = pneg %p198
        $region58: #{tpu_custom_call.1} parent=47 // pred_check_branch
          %3810 = sbr.rel (%p3808) target = $region60
        $region59: #{tpu_custom_call.1} parent=47 // pred_region
          %s3812 = ssub.s32 16, 16
          %3813 = vsyncadd %s3801, %s3812
          %s3814 = smul.addr %s28, 16
          %s3815 = scalar_lea.hbm %s7, %s3814
          %s3817 = sshll.u32 %s3803, 4
          %s3818 = int_to_ptr.vmem [resolvable:$true] %s3817
          %3820 = dma.vmem_to_hbm [thread:$0]  %s3818, 16, %s3815, %s3801
        $region60: #{tpu_custom_call.1} parent=47 // pred_fallthru
          _
        // Predicated region
        $region61: #{tpu_custom_call.1} parent=47 // pred_check
          %p3821 = pneg %p224
        $region62: #{tpu_custom_call.1} parent=47 // pred_check_branch
          %3823 = sbr.rel (%p3821) target = $region64
        $region63: #{tpu_custom_call.1} parent=47 // pred_region
          %s3825 = ssub.s32 16, 16
          %3826 = vsyncadd %s3805, %s3825
          %s3827 = smul.addr %s28, 16
          %s3828 = scalar_lea.hbm %s8, %s3827
          %s3830 = sshll.u32 %s3807, 4
          %s3831 = int_to_ptr.vmem [resolvable:$true] %s3830
          %3833 = dma.vmem_to_hbm [thread:$0]  %s3831, 16, %s3828, %s3805
        $region64: #{tpu_custom_call.1} parent=47 // pred_fallthru
          _
      $region48: #{tpu_custom_call.1} parent=5 // pred_fallthru
        _
      %p3834 = scmp.le.s32.totalorder 2, %s23
      // Predicated region
      $region65: #{tpu_custom_call.1} parent=5 // pred_check
        %p3835 = pneg %p3834
      $region66: #{tpu_custom_call.1} parent=5 // pred_check_branch
        %3837 = sbr.rel (%p3835) target = $region68
      $region67: #{tpu_custom_call.1} parent=5 // pred_region
        %s3838 = ssub.s32 %s23, 2
        // Predicated region
        $region69: #{tpu_custom_call.1} parent=67 // pred_check
          %p3839 = pneg %p204
        $region70: #{tpu_custom_call.1} parent=67 // pred_check_branch
          %3841 = sbr.rel (%p3839) target = $region72
        $region71: #{tpu_custom_call.1} parent=67 // pred_region
          %s3842 = sand.u32 %s189, 1
          %s3843 = scalar_lea.sflag [#allocation3], %s3842
          %s3844 = sand.u32 %s189, 1
          %s3845 = scalar_lea.vmem [#allocation7], %s3844
          %3846 = dma.done %s3843, 16
        $region72: #{tpu_custom_call.1} parent=67 // pred_fallthru
          _
        // Predicated region
        $region73: #{tpu_custom_call.1} parent=67 // pred_check
          %p3847 = pneg %p230
        $region74: #{tpu_custom_call.1} parent=67 // pred_check_branch
          %3849 = sbr.rel (%p3847) target = $region76
        $region75: #{tpu_custom_call.1} parent=67 // pred_region
          %s3850 = sand.u32 %s215, 1
          %s3851 = scalar_lea.sflag [#allocation9], %s3850
          %s3852 = sand.u32 %s215, 1
          %s3853 = scalar_lea.vmem [#allocation8], %s3852
          %3854 = dma.done %s3851, 16
        $region76: #{tpu_custom_call.1} parent=67 // pred_fallthru
          _
      $region68: #{tpu_custom_call.1} parent=5 // pred_fallthru
        _
    $region6: #{tpu_custom_call.1} parent=1 // loop_footer
      %s27 = sadd.s32 1, %s23
    $region7: #{tpu_custom_call.1} parent=1 // loop_footer_branch
      %22 = sbr.rel target = $region3
    $region8: #{tpu_custom_call.1} parent=1 // loop_exit
      _
    %3855 = vsyncpa [#allocation3], 1
    %s3856 = scalar_lea.sflag [#allocation3], 1
    %3857 = vsyncpa %s3856, 1
    %3858 = vsyncpa [#allocation9], 1
    %s3859 = scalar_lea.sflag [#allocation9], 1
    %3860 = vsyncpa %s3859, 1
    %3861 = vsyncpa [#allocation4], 1
    %s3862 = scalar_lea.sflag [#allocation4], 1
    %3863 = vsyncpa %s3862, 1
    %3864 = vsyncpa [#allocation6], 1

</llo_original>
